<compile_context>
chip_gen: v6e
topology: v6e:2x2x1
jax: 0.10.0
libtpu: 0.0.40
codegen_flags: <defaults>
</compile_context>

<pallas_src>
import functools

import jax
import jax.numpy as jnp
from jax.experimental import pallas as pl
from jax.experimental.pallas import tpu as pltpu

EPS = 1e-5


# --------------------------------------------------------------------------- #
# In-kernel helpers
# --------------------------------------------------------------------------- #
def _pad_hw1(x_hwc):
    """Zero-pad an (H, W, C) value by 1 on both spatial dims (value-land; no
    padded HBM buffer and no whole-scratch zero fill)."""
    H, W, C = x_hwc.shape
    dt = x_hwc.dtype
    zrow = jnp.zeros((1, W, C), dt)
    x = jnp.concatenate([zrow, x_hwc, zrow], axis=0)        # (H+2, W,   C)
    zcol = jnp.zeros((H + 2, 1, C), dt)
    return jnp.concatenate([zcol, x, zcol], axis=1)         # (H+2, W+2, C)


def _conv3x3(x_hwc_bf16, w_ref):
    """3x3 stride-1 'same' conv as three K = 3*Cin matmuls (one per kernel
    row), accumulated in f32.  Tap assembly and the (H*W, 3*Cin) patch slabs
    are built in bf16 (half the vld/vst traffic and peak VMEM of an f32
    9*Cin im2col); weights are bf16; accumulation is f32 on the MXU."""
    H, W, C = x_hwc_bf16.shape
    xp = _pad_hw1(x_hwc_bf16)                               # (H+2, W+2, C) bf16
    acc = None
    for ky in range(3):
        rows = xp[ky:ky + H]                                # (H, W+2, C)
        taps = [rows[:, kx:kx + W, :].reshape(H * W, C) for kx in range(3)]
        patch = jnp.concatenate(taps, axis=-1)              # (H*W, 3*C) bf16
        part = jnp.dot(patch, w_ref[ky],                    # (3*C, Cout) bf16
                       preferred_element_type=jnp.float32)
        acc = part if acc is None else acc + part
    return acc                                              # (H*W, Cout) f32


# --------------------------------------------------------------------------- #
# Kernels (grid over batch blocks of Bt images; channel-major refs (Bt, C, M))
# --------------------------------------------------------------------------- #
def _conv1_kernel(H, W, Bt, x_ref, w1_ref, y1_ref, s_ref, ss_ref):
    C = x_ref.shape[1]
    Cout = y1_ref.shape[1]
    s_tot = jnp.zeros((1, Cout), jnp.float32)
    ss_tot = jnp.zeros((1, Cout), jnp.float32)
    for b in range(Bt):
        x_cm = x_ref[b]                                     # (C, M) f32
        x_hwc = x_cm.T.reshape(H, W, C).astype(jnp.bfloat16)
        acc = _conv3x3(x_hwc, w1_ref)                       # (M, Cout) f32
        s_tot = s_tot + jnp.sum(acc, axis=0, keepdims=True)
        ss_tot = ss_tot + jnp.sum(acc * acc, axis=0, keepdims=True)
        y1_ref[b] = acc.T.astype(jnp.bfloat16)              # (Cout, M) lane-dense
    s_ref[0] = s_tot
    ss_ref[0] = ss_tot


def _conv2_kernel(H, W, Bt, y1_ref, sc1_ref, sh1_ref, w2_ref, y2_ref, s_ref, ss_ref):
    C = y1_ref.shape[1]
    s_tot = jnp.zeros((1, C), jnp.float32)
    ss_tot = jnp.zeros((1, C), jnp.float32)
    sc = sc1_ref[...]                                       # (C, 1)
    sh = sh1_ref[...]
    for b in range(Bt):
        y = y1_ref[b].astype(jnp.float32) * sc + sh         # bn1, per-channel
        y = jnp.maximum(y, 0.0)                             # relu
        y_hwc = y.T.reshape(H, W, C).astype(jnp.bfloat16)
        acc = _conv3x3(y_hwc, w2_ref)                       # conv2
        s_tot = s_tot + jnp.sum(acc, axis=0, keepdims=True)
        ss_tot = ss_tot + jnp.sum(acc * acc, axis=0, keepdims=True)
        y2_ref[b] = acc.T.astype(jnp.bfloat16)              # (Cout, M) lane-dense
    s_ref[0] = s_tot
    ss_ref[0] = ss_tot


def _bn2_add_relu_kernel(y2_ref, x_ref, sc2_ref, sh2_ref, o_ref):
    sc = sc2_ref[...][None]                                 # (1, C, 1)
    sh = sh2_ref[...][None]
    y = y2_ref[...].astype(jnp.float32) * sc + sh           # bn2
    o_ref[...] = jnp.maximum(y + x_ref[...], 0.0)           # + identity, relu


# --------------------------------------------------------------------------- #
# Wrapper
# --------------------------------------------------------------------------- #
def _fold_bn(sum_p, sumsq_p, count, gamma, beta):
    """Reduce per-step (sum, sumsq) partials and fold BN into scale/shift,
    shaped (C, 1) for channel-major application."""
    tot_s = jnp.sum(sum_p.astype(jnp.float32), axis=(0, 1))      # (C,)
    tot_ss = jnp.sum(sumsq_p.astype(jnp.float32), axis=(0, 1))   # (C,)
    mean = tot_s / count
    var = jnp.maximum(tot_ss / count - mean * mean, 0.0)         # biased var
    inv = jax.lax.rsqrt(var + EPS)
    scale = gamma.astype(jnp.float32) * inv
    shift = beta.astype(jnp.float32) - mean * scale
    C = scale.shape[0]
    return scale.reshape(C, 1), shift.reshape(C, 1)


def _pick_block_n(N, M, C, budget_bytes=8 * 1024 * 1024):
    """Largest divisor of N whose per-step in-kernel working set (rough
    ~32 B/elem estimate for taps + accumulators + blocks) fits the budget."""
    per_image = M * C * 32
    bt = 1
    for d in range(1, N + 1):
        if N % d == 0 and d * per_image <= budget_bytes:
            bt = d
    return bt


def _vmem_limit_bytes():
    """~75% of physical VMEM: ~48 MiB on v7x (64 MiB), 96 MiB on v5e/v6e."""
    try:
        cap = pltpu.get_tpu_info().vmem_capacity_bytes
        if cap:
            return int(min(cap * 3 // 4, 96 * 1024 * 1024))
    except Exception:
        pass
    return 48 * 1024 * 1024


def basic_block_pallas(x_nchw, w1, gamma1, beta1, w2, gamma2, beta2):
    """x_nchw: (N, C, H, W) f32; w*: (3, 3, Cin, Cout) HWIO."""
    N, C, H, W = x_nchw.shape
    Cout = w1.shape[-1]
    assert C == Cout, "downsample=None requires in_channel == out_channel"
    M = H * W

    # Channel-major activations (N, C, H*W): a free reshape of NCHW (no HBM
    # transpose pass) and lane-dense (along M) loads/stores in every phase.
    x_cm = x_nchw.reshape(N, C, M).astype(jnp.float32)
    # Per-kernel-row im2col weights: index = (ky, kx*Cin + ci, Cout), bf16.
    w1_r = w1.reshape(3, 3 * C, Cout).astype(jnp.bfloat16)
    w2_r = w2.reshape(3, 3 * Cout, Cout).astype(jnp.bfloat16)

    bt = _pick_block_n(N, M, C)
    G = N // bt

    cparams = pltpu.CompilerParams(
        dimension_semantics=("parallel",),      # v7x: split batch over both TCs
        vmem_limit_bytes=_vmem_limit_bytes(),
    )
    tile = pl.BlockSpec((bt, C, M), lambda i: (i, 0, 0))
    stat = pl.BlockSpec((1, 1, Cout), lambda i: (i, 0, 0))
    vec = pl.BlockSpec((Cout, 1), lambda i: (0, 0))

    def w_spec(K):
        return pl.BlockSpec((3, K, Cout), lambda i: (0, 0, 0))

    # ---- phase 1: conv1 + partial bn1 stats ------------------------------- #
    y1, s1, ss1 = pl.pallas_call(
        functools.partial(_conv1_kernel, H, W, bt),
        grid=(G,),
        in_specs=[tile, w_spec(3 * C)],
        out_specs=(tile, stat, stat),
        out_shape=(jax.ShapeDtypeStruct((N, Cout, M), jnp.bfloat16),
                   jax.ShapeDtypeStruct((G, 1, Cout), jnp.float32),
                   jax.ShapeDtypeStruct((G, 1, Cout), jnp.float32)),
        compiler_params=cparams,
    )(x_cm, w1_r)
    scale1, shift1 = _fold_bn(s1, ss1, N * M, gamma1, beta1)

    # ---- phase 2: bn1 + relu + conv2 + partial bn2 stats ------------------ #
    y2, s2, ss2 = pl.pallas_call(
        functools.partial(_conv2_kernel, H, W, bt),
        grid=(G,),
        in_specs=[tile, vec, vec, w_spec(3 * Cout)],
        out_specs=(tile, stat, stat),
        out_shape=(jax.ShapeDtypeStruct((N, Cout, M), jnp.bfloat16),
                   jax.ShapeDtypeStruct((G, 1, Cout), jnp.float32),
                   jax.ShapeDtypeStruct((G, 1, Cout), jnp.float32)),
        compiler_params=cparams,
    )(y1, scale1, shift1, w2_r)
    scale2, shift2 = _fold_bn(s2, ss2, N * M, gamma2, beta2)

    # ---- phase 3: bn2 + residual + relu (pure elementwise, channel-major) -- #
    out_cm = pl.pallas_call(
        _bn2_add_relu_kernel,
        grid=(G,),
        in_specs=[tile, tile, vec, vec],
        out_specs=tile,
        out_shape=jax.ShapeDtypeStruct((N, Cout, M), jnp.float32),
        compiler_params=cparams,
    )(y2, x_cm, scale2, shift2)

    return out_cm.reshape(N, Cout, H, W)                    # free reshape (NCHW)


# --------------------------------------------------------------------------- #
# Pure-JAX reference (f32), mirrors the PyTorch forward
# --------------------------------------------------------------------------- #
def basic_block_ref(x_nchw, w1, gamma1, beta1, w2, gamma2, beta2):
    x = jnp.transpose(x_nchw, (0, 2, 3, 1)).astype(jnp.float32)

    def conv(y, w):
        return jax.lax.conv_general_dilated(
            y, w, window_strides=(1, 1), padding="SAME",
            dimension_numbers=("NHWC", "HWIO", "NHWC"))

    def bn(y, g, b):
        m = jnp.mean(y, axis=(0, 1, 2), keepdims=True)
        v = jnp.mean((y - m) ** 2, axis=(0, 1, 2), keepdims=True)
        return (y - m) * jax.lax.rsqrt(v + EPS) * g.reshape(1, 1, 1, -1) + b.reshape(1, 1, 1, -1)

    out = jax.nn.relu(bn(conv(x, w1), gamma1, beta1))
    out = bn(conv(out, w2), gamma2, beta2)
    out = jax.nn.relu(out + x)
    return jnp.transpose(out, (0, 3, 1, 2))


if __name__ == "__main__":
    key = jax.random.PRNGKey(0)
    N, C, H, W = 2, 4, 16, 16  # in_channel = out_channel = 4, stride = 1

    k_x, k_w1, k_w2, k_g1, k_b1, k_g2, k_b2 = jax.random.split(key, 7)
    x = jax.random.normal(k_x, (N, C, H, W), jnp.float32)
    # Conv weights in HWIO layout (PyTorch OIHW transposed to (ky, kx, ci, co)).
    w1 = jax.random.normal(k_w1, (3, 3, C, C), jnp.float32) * 0.2
    w2 = jax.random.normal(k_w2, (3, 3, C, C), jnp.float32) * 0.2
    gamma1 = 1.0 + 0.1 * jax.random.normal(k_g1, (C,), jnp.float32)
    beta1 = 0.1 * jax.random.normal(k_b1, (C,), jnp.float32)
    gamma2 = 1.0 + 0.1 * jax.random.normal(k_g2, (C,), jnp.float32)
    beta2 = 0.1 * jax.random.normal(k_b2, (C,), jnp.float32)

    fn = jax.jit(basic_block_pallas)
    out = jax.block_until_ready(fn(x, w1, gamma1, beta1, w2, gamma2, beta2))
    ref = basic_block_ref(x, w1, gamma1, beta1, w2, gamma2, beta2)

    assert out.shape == (N, C, H, W)
    err = jnp.max(jnp.abs(out - ref))
    # bf16 MXU operands / bf16 intermediates -> relaxed tolerance vs. pure f32.
    assert jnp.allclose(out, ref, atol=5e-2, rtol=5e-2), f"max err {err}"
    print("KERNEL_OK")
</pallas_src>

<mosaic_0001>
module attributes {stable_mosaic.version = 11 : i64} {
  func.func @_conv1_kernel(%arg0: i32, %arg1: memref<2x4x256xf32, #tpu.memory_space<vmem>>, %arg2: memref<3x12x4xbf16, #tpu.memory_space<vmem>>, %arg3: memref<2x4x256xbf16, #tpu.memory_space<vmem>>, %arg4: memref<1x1x4xf32, #tpu.memory_space<vmem>>, %arg5: memref<1x1x4xf32, #tpu.memory_space<vmem>>) attributes {dimension_semantics = [#tpu.dimension_semantics<parallel>], iteration_bounds = array<i64: 1>, scalar_prefetch = 0 : i64, scratch_operands = 0 : i64, tpu.core_type = #tpu.core_type<tc>, window_params = [{transform_indices = @transform_0, window_bounds = array<i64: 2, 4, 256>}, {pipeline_mode = #tpu.pipeline_mode<synchronous>, transform_indices = @transform_1, window_bounds = array<i64: 3, 12, 4>}, {transform_indices = @transform_2, window_bounds = array<i64: 2, 4, 256>}, {transform_indices = @transform_3, window_bounds = array<i64: 1, 1, 4>}, {transform_indices = @transform_4, window_bounds = array<i64: 1, 1, 4>}]} {
    %cst = arith.constant 0.000000e+00 : f32
    %0 = vector.broadcast %cst : f32 to vector<1x4xf32>
    %cst_0 = arith.constant 0.000000e+00 : f32
    %1 = vector.broadcast %cst_0 : f32 to vector<1x4xf32>
    %c0 = arith.constant 0 : index
    %c0_1 = arith.constant 0 : index
    %c0_2 = arith.constant 0 : index
    %2 = vector.load %arg1[%c0, %c0_1, %c0_2] : memref<2x4x256xf32, #tpu.memory_space<vmem>>, vector<1x4x256xf32>
    %3 = vector.shape_cast %2 : vector<1x4x256xf32> to vector<4x256xf32>
    %4 = tpu.transpose %3, [1, 0] : vector<4x256xf32> -> vector<256x4xf32>
    %5 = vector.shape_cast %4 : vector<256x4xf32> to vector<16x16x4xf32>
    %6 = arith.truncf %5 : vector<16x16x4xf32> to vector<16x16x4xbf16>
    %cst_3 = arith.constant 0.000000e+00 : bf16
    %7 = vector.broadcast %cst_3 : bf16 to vector<1x16x4xbf16>
    %8 = tpu.concatenate %7, %6, %7 in 0 : vector<1x16x4xbf16>, vector<16x16x4xbf16>, vector<1x16x4xbf16> -> vector<18x16x4xbf16>
    %cst_4 = arith.constant 0.000000e+00 : bf16
    %9 = vector.broadcast %cst_4 : bf16 to vector<18x1x4xbf16>
    %10 = tpu.concatenate %9, %8, %9 in 1 : vector<18x1x4xbf16>, vector<18x16x4xbf16>, vector<18x1x4xbf16> -> vector<18x18x4xbf16>
    %11 = vector.extract_strided_slice %10 {offsets = [0, 0, 0], sizes = [16, 18, 4], strides = [1, 1, 1]} : vector<18x18x4xbf16> to vector<16x18x4xbf16>
    %12 = vector.extract_strided_slice %11 {offsets = [0, 0, 0], sizes = [16, 16, 4], strides = [1, 1, 1]} : vector<16x18x4xbf16> to vector<16x16x4xbf16>
    %13 = vector.shape_cast %12 : vector<16x16x4xbf16> to vector<256x4xbf16>
    %14 = vector.extract_strided_slice %11 {offsets = [0, 1, 0], sizes = [16, 16, 4], strides = [1, 1, 1]} : vector<16x18x4xbf16> to vector<16x16x4xbf16>
    %15 = vector.shape_cast %14 : vector<16x16x4xbf16> to vector<256x4xbf16>
    %16 = vector.extract_strided_slice %11 {offsets = [0, 2, 0], sizes = [16, 16, 4], strides = [1, 1, 1]} : vector<16x18x4xbf16> to vector<16x16x4xbf16>
    %17 = vector.shape_cast %16 : vector<16x16x4xbf16> to vector<256x4xbf16>
    %18 = tpu.concatenate %13, %15, %17 in 1 : vector<256x4xbf16>, vector<256x4xbf16>, vector<256x4xbf16> -> vector<256x12xbf16>
    %c0_5 = arith.constant 0 : index
    %c0_6 = arith.constant 0 : index
    %c0_7 = arith.constant 0 : index
    %19 = vector.load %arg2[%c0_5, %c0_6, %c0_7] : memref<3x12x4xbf16, #tpu.memory_space<vmem>>, vector<1x12x4xbf16>
    %20 = vector.shape_cast %19 : vector<1x12x4xbf16> to vector<12x4xbf16>
    %cst_8 = arith.constant dense<0.000000e+00> : vector<256x4xf32>
    %21 = tpu.matmul %18, %20, %cst_8 {dimension_numbers = #tpu.dot_dimension_numbers<[1], [0], [0], [1], [0, 0, 1, 1], [], []>} : vector<256x12xbf16>, vector<12x4xbf16>, vector<256x4xf32> -> vector<256x4xf32>
    %22 = vector.extract_strided_slice %10 {offsets = [1, 0, 0], sizes = [16, 18, 4], strides = [1, 1, 1]} : vector<18x18x4xbf16> to vector<16x18x4xbf16>
    %23 = vector.extract_strided_slice %22 {offsets = [0, 0, 0], sizes = [16, 16, 4], strides = [1, 1, 1]} : vector<16x18x4xbf16> to vector<16x16x4xbf16>
    %24 = vector.shape_cast %23 : vector<16x16x4xbf16> to vector<256x4xbf16>
    %25 = vector.extract_strided_slice %22 {offsets = [0, 1, 0], sizes = [16, 16, 4], strides = [1, 1, 1]} : vector<16x18x4xbf16> to vector<16x16x4xbf16>
    %26 = vector.shape_cast %25 : vector<16x16x4xbf16> to vector<256x4xbf16>
    %27 = vector.extract_strided_slice %22 {offsets = [0, 2, 0], sizes = [16, 16, 4], strides = [1, 1, 1]} : vector<16x18x4xbf16> to vector<16x16x4xbf16>
    %28 = vector.shape_cast %27 : vector<16x16x4xbf16> to vector<256x4xbf16>
    %29 = tpu.concatenate %24, %26, %28 in 1 : vector<256x4xbf16>, vector<256x4xbf16>, vector<256x4xbf16> -> vector<256x12xbf16>
    %c1 = arith.constant 1 : index
    %c0_9 = arith.constant 0 : index
    %c0_10 = arith.constant 0 : index
    %30 = vector.load %arg2[%c1, %c0_9, %c0_10] : memref<3x12x4xbf16, #tpu.memory_space<vmem>>, vector<1x12x4xbf16>
    %31 = vector.shape_cast %30 : vector<1x12x4xbf16> to vector<12x4xbf16>
    %cst_11 = arith.constant dense<0.000000e+00> : vector<256x4xf32>
    %32 = tpu.matmul %29, %31, %cst_11 {dimension_numbers = #tpu.dot_dimension_numbers<[1], [0], [0], [1], [0, 0, 1, 1], [], []>} : vector<256x12xbf16>, vector<12x4xbf16>, vector<256x4xf32> -> vector<256x4xf32>
    %33 = arith.addf %21, %32 : vector<256x4xf32>
    %34 = vector.extract_strided_slice %10 {offsets = [2, 0, 0], sizes = [16, 18, 4], strides = [1, 1, 1]} : vector<18x18x4xbf16> to vector<16x18x4xbf16>
    %35 = vector.extract_strided_slice %34 {offsets = [0, 0, 0], sizes = [16, 16, 4], strides = [1, 1, 1]} : vector<16x18x4xbf16> to vector<16x16x4xbf16>
    %36 = vector.shape_cast %35 : vector<16x16x4xbf16> to vector<256x4xbf16>
    %37 = vector.extract_strided_slice %34 {offsets = [0, 1, 0], sizes = [16, 16, 4], strides = [1, 1, 1]} : vector<16x18x4xbf16> to vector<16x16x4xbf16>
    %38 = vector.shape_cast %37 : vector<16x16x4xbf16> to vector<256x4xbf16>
    %39 = vector.extract_strided_slice %34 {offsets = [0, 2, 0], sizes = [16, 16, 4], strides = [1, 1, 1]} : vector<16x18x4xbf16> to vector<16x16x4xbf16>
    %40 = vector.shape_cast %39 : vector<16x16x4xbf16> to vector<256x4xbf16>
    %41 = tpu.concatenate %36, %38, %40 in 1 : vector<256x4xbf16>, vector<256x4xbf16>, vector<256x4xbf16> -> vector<256x12xbf16>
    %c2 = arith.constant 2 : index
    %c0_12 = arith.constant 0 : index
    %c0_13 = arith.constant 0 : index
    %42 = vector.load %arg2[%c2, %c0_12, %c0_13] : memref<3x12x4xbf16, #tpu.memory_space<vmem>>, vector<1x12x4xbf16>
    %43 = vector.shape_cast %42 : vector<1x12x4xbf16> to vector<12x4xbf16>
    %cst_14 = arith.constant dense<0.000000e+00> : vector<256x4xf32>
    %44 = tpu.matmul %41, %43, %cst_14 {dimension_numbers = #tpu.dot_dimension_numbers<[1], [0], [0], [1], [0, 0, 1, 1], [], []>} : vector<256x12xbf16>, vector<12x4xbf16>, vector<256x4xf32> -> vector<256x4xf32>
    %45 = arith.addf %33, %44 : vector<256x4xf32>
    %cst_15 = arith.constant dense<0.000000e+00> : vector<4xf32>
    %46 = vector.multi_reduction <add>, %45, %cst_15 [0] : vector<256x4xf32> to vector<4xf32>
    %47 = vector.shape_cast %46 : vector<4xf32> to vector<1x4xf32>
    %48 = arith.addf %0, %47 : vector<1x4xf32>
    %49 = arith.mulf %45, %45 : vector<256x4xf32>
    %cst_16 = arith.constant dense<0.000000e+00> : vector<4xf32>
    %50 = vector.multi_reduction <add>, %49, %cst_16 [0] : vector<256x4xf32> to vector<4xf32>
    %51 = vector.shape_cast %50 : vector<4xf32> to vector<1x4xf32>
    %52 = arith.addf %1, %51 : vector<1x4xf32>
    %53 = tpu.transpose %45, [1, 0] : vector<256x4xf32> -> vector<4x256xf32>
    %54 = arith.truncf %53 : vector<4x256xf32> to vector<4x256xbf16>
    %c0_17 = arith.constant 0 : index
    %c0_18 = arith.constant 0 : index
    %c0_19 = arith.constant 0 : index
    %55 = vector.load %arg3[%c0_17, %c0_18, %c0_19] : memref<2x4x256xbf16, #tpu.memory_space<vmem>>, vector<1x4x256xbf16>
    %56 = vector.shape_cast %55 : vector<1x4x256xbf16> to vector<4x256xbf16>
    %57 = vector.shape_cast %54 : vector<4x256xbf16> to vector<1x4x256xbf16>
    tpu.vector_store %arg3[%c0_17, %c0_18, %c0_19], %57 {strides = array<i32>} : memref<2x4x256xbf16, #tpu.memory_space<vmem>>, vector<1x4x256xbf16>,
    %c1_20 = arith.constant 1 : index
    %c0_21 = arith.constant 0 : index
    %c0_22 = arith.constant 0 : index
    %58 = vector.load %arg1[%c1_20, %c0_21, %c0_22] : memref<2x4x256xf32, #tpu.memory_space<vmem>>, vector<1x4x256xf32>
    %59 = vector.shape_cast %58 : vector<1x4x256xf32> to vector<4x256xf32>
    %60 = tpu.transpose %59, [1, 0] : vector<4x256xf32> -> vector<256x4xf32>
    %61 = vector.shape_cast %60 : vector<256x4xf32> to vector<16x16x4xf32>
    %62 = arith.truncf %61 : vector<16x16x4xf32> to vector<16x16x4xbf16>
    %cst_23 = arith.constant 0.000000e+00 : bf16
    %63 = vector.broadcast %cst_23 : bf16 to vector<1x16x4xbf16>
    %64 = tpu.concatenate %63, %62, %63 in 0 : vector<1x16x4xbf16>, vector<16x16x4xbf16>, vector<1x16x4xbf16> -> vector<18x16x4xbf16>
    %cst_24 = arith.constant 0.000000e+00 : bf16
    %65 = vector.broadcast %cst_24 : bf16 to vector<18x1x4xbf16>
    %66 = tpu.concatenate %65, %64, %65 in 1 : vector<18x1x4xbf16>, vector<18x16x4xbf16>, vector<18x1x4xbf16> -> vector<18x18x4xbf16>
    %67 = vector.extract_strided_slice %66 {offsets = [0, 0, 0], sizes = [16, 18, 4], strides = [1, 1, 1]} : vector<18x18x4xbf16> to vector<16x18x4xbf16>
    %68 = vector.extract_strided_slice %67 {offsets = [0, 0, 0], sizes = [16, 16, 4], strides = [1, 1, 1]} : vector<16x18x4xbf16> to vector<16x16x4xbf16>
    %69 = vector.shape_cast %68 : vector<16x16x4xbf16> to vector<256x4xbf16>
    %70 = vector.extract_strided_slice %67 {offsets = [0, 1, 0], sizes = [16, 16, 4], strides = [1, 1, 1]} : vector<16x18x4xbf16> to vector<16x16x4xbf16>
    %71 = vector.shape_cast %70 : vector<16x16x4xbf16> to vector<256x4xbf16>
    %72 = vector.extract_strided_slice %67 {offsets = [0, 2, 0], sizes = [16, 16, 4], strides = [1, 1, 1]} : vector<16x18x4xbf16> to vector<16x16x4xbf16>
    %73 = vector.shape_cast %72 : vector<16x16x4xbf16> to vector<256x4xbf16>
    %74 = tpu.concatenate %69, %71, %73 in 1 : vector<256x4xbf16>, vector<256x4xbf16>, vector<256x4xbf16> -> vector<256x12xbf16>
    %c0_25 = arith.constant 0 : index
    %c0_26 = arith.constant 0 : index
    %c0_27 = arith.constant 0 : index
    %75 = vector.load %arg2[%c0_25, %c0_26, %c0_27] : memref<3x12x4xbf16, #tpu.memory_space<vmem>>, vector<1x12x4xbf16>
    %76 = vector.shape_cast %75 : vector<1x12x4xbf16> to vector<12x4xbf16>
    %cst_28 = arith.constant dense<0.000000e+00> : vector<256x4xf32>
    %77 = tpu.matmul %74, %76, %cst_28 {dimension_numbers = #tpu.dot_dimension_numbers<[1], [0], [0], [1], [0, 0, 1, 1], [], []>} : vector<256x12xbf16>, vector<12x4xbf16>, vector<256x4xf32> -> vector<256x4xf32>
    %78 = vector.extract_strided_slice %66 {offsets = [1, 0, 0], sizes = [16, 18, 4], strides = [1, 1, 1]} : vector<18x18x4xbf16> to vector<16x18x4xbf16>
    %79 = vector.extract_strided_slice %78 {offsets = [0, 0, 0], sizes = [16, 16, 4], strides = [1, 1, 1]} : vector<16x18x4xbf16> to vector<16x16x4xbf16>
    %80 = vector.shape_cast %79 : vector<16x16x4xbf16> to vector<256x4xbf16>
    %81 = vector.extract_strided_slice %78 {offsets = [0, 1, 0], sizes = [16, 16, 4], strides = [1, 1, 1]} : vector<16x18x4xbf16> to vector<16x16x4xbf16>
    %82 = vector.shape_cast %81 : vector<16x16x4xbf16> to vector<256x4xbf16>
    %83 = vector.extract_strided_slice %78 {offsets = [0, 2, 0], sizes = [16, 16, 4], strides = [1, 1, 1]} : vector<16x18x4xbf16> to vector<16x16x4xbf16>
    %84 = vector.shape_cast %83 : vector<16x16x4xbf16> to vector<256x4xbf16>
    %85 = tpu.concatenate %80, %82, %84 in 1 : vector<256x4xbf16>, vector<256x4xbf16>, vector<256x4xbf16> -> vector<256x12xbf16>
    %c1_29 = arith.constant 1 : index
    %c0_30 = arith.constant 0 : index
    %c0_31 = arith.constant 0 : index
    %86 = vector.load %arg2[%c1_29, %c0_30, %c0_31] : memref<3x12x4xbf16, #tpu.memory_space<vmem>>, vector<1x12x4xbf16>
    %87 = vector.shape_cast %86 : vector<1x12x4xbf16> to vector<12x4xbf16>
    %cst_32 = arith.constant dense<0.000000e+00> : vector<256x4xf32>
    %88 = tpu.matmul %85, %87, %cst_32 {dimension_numbers = #tpu.dot_dimension_numbers<[1], [0], [0], [1], [0, 0, 1, 1], [], []>} : vector<256x12xbf16>, vector<12x4xbf16>, vector<256x4xf32> -> vector<256x4xf32>
    %89 = arith.addf %77, %88 : vector<256x4xf32>
    %90 = vector.extract_strided_slice %66 {offsets = [2, 0, 0], sizes = [16, 18, 4], strides = [1, 1, 1]} : vector<18x18x4xbf16> to vector<16x18x4xbf16>
    %91 = vector.extract_strided_slice %90 {offsets = [0, 0, 0], sizes = [16, 16, 4], strides = [1, 1, 1]} : vector<16x18x4xbf16> to vector<16x16x4xbf16>
    %92 = vector.shape_cast %91 : vector<16x16x4xbf16> to vector<256x4xbf16>
    %93 = vector.extract_strided_slice %90 {offsets = [0, 1, 0], sizes = [16, 16, 4], strides = [1, 1, 1]} : vector<16x18x4xbf16> to vector<16x16x4xbf16>
    %94 = vector.shape_cast %93 : vector<16x16x4xbf16> to vector<256x4xbf16>
    %95 = vector.extract_strided_slice %90 {offsets = [0, 2, 0], sizes = [16, 16, 4], strides = [1, 1, 1]} : vector<16x18x4xbf16> to vector<16x16x4xbf16>
    %96 = vector.shape_cast %95 : vector<16x16x4xbf16> to vector<256x4xbf16>
    %97 = tpu.concatenate %92, %94, %96 in 1 : vector<256x4xbf16>, vector<256x4xbf16>, vector<256x4xbf16> -> vector<256x12xbf16>
    %c2_33 = arith.constant 2 : index
    %c0_34 = arith.constant 0 : index
    %c0_35 = arith.constant 0 : index
    %98 = vector.load %arg2[%c2_33, %c0_34, %c0_35] : memref<3x12x4xbf16, #tpu.memory_space<vmem>>, vector<1x12x4xbf16>
    %99 = vector.shape_cast %98 : vector<1x12x4xbf16> to vector<12x4xbf16>
    %cst_36 = arith.constant dense<0.000000e+00> : vector<256x4xf32>
    %100 = tpu.matmul %97, %99, %cst_36 {dimension_numbers = #tpu.dot_dimension_numbers<[1], [0], [0], [1], [0, 0, 1, 1], [], []>} : vector<256x12xbf16>, vector<12x4xbf16>, vector<256x4xf32> -> vector<256x4xf32>
    %101 = arith.addf %89, %100 : vector<256x4xf32>
    %cst_37 = arith.constant dense<0.000000e+00> : vector<4xf32>
    %102 = vector.multi_reduction <add>, %101, %cst_37 [0] : vector<256x4xf32> to vector<4xf32>
    %103 = vector.shape_cast %102 : vector<4xf32> to vector<1x4xf32>
    %104 = arith.addf %48, %103 : vector<1x4xf32>
    %105 = arith.mulf %101, %101 : vector<256x4xf32>
    %cst_38 = arith.constant dense<0.000000e+00> : vector<4xf32>
    %106 = vector.multi_reduction <add>, %105, %cst_38 [0] : vector<256x4xf32> to vector<4xf32>
    %107 = vector.shape_cast %106 : vector<4xf32> to vector<1x4xf32>
    %108 = arith.addf %52, %107 : vector<1x4xf32>
    %109 = tpu.transpose %101, [1, 0] : vector<256x4xf32> -> vector<4x256xf32>
    %110 = arith.truncf %109 : vector<4x256xf32> to vector<4x256xbf16>
    %c1_39 = arith.constant 1 : index
    %c0_40 = arith.constant 0 : index
    %c0_41 = arith.constant 0 : index
    %111 = vector.load %arg3[%c1_39, %c0_40, %c0_41] : memref<2x4x256xbf16, #tpu.memory_space<vmem>>, vector<1x4x256xbf16>
    %112 = vector.shape_cast %111 : vector<1x4x256xbf16> to vector<4x256xbf16>
    %113 = vector.shape_cast %110 : vector<4x256xbf16> to vector<1x4x256xbf16>
    tpu.vector_store %arg3[%c1_39, %c0_40, %c0_41], %113 {strides = array<i32>} : memref<2x4x256xbf16, #tpu.memory_space<vmem>>, vector<1x4x256xbf16>,
    %c0_42 = arith.constant 0 : index
    %c0_43 = arith.constant 0 : index
    %c0_44 = arith.constant 0 : index
    %114 = vector.load %arg4[%c0_42, %c0_43, %c0_44] : memref<1x1x4xf32, #tpu.memory_space<vmem>>, vector<1x1x4xf32>
    %115 = vector.shape_cast %114 : vector<1x1x4xf32> to vector<1x4xf32>
    %116 = vector.shape_cast %104 : vector<1x4xf32> to vector<1x1x4xf32>
    tpu.vector_store %arg4[%c0_42, %c0_43, %c0_44], %116 {strides = array<i32>} : memref<1x1x4xf32, #tpu.memory_space<vmem>>, vector<1x1x4xf32>,
    %c0_45 = arith.constant 0 : index
    %c0_46 = arith.constant 0 : index
    %c0_47 = arith.constant 0 : index
    %117 = vector.load %arg5[%c0_45, %c0_46, %c0_47] : memref<1x1x4xf32, #tpu.memory_space<vmem>>, vector<1x1x4xf32>
    %118 = vector.shape_cast %117 : vector<1x1x4xf32> to vector<1x4xf32>
    %119 = vector.shape_cast %108 : vector<1x4xf32> to vector<1x1x4xf32>
    tpu.vector_store %arg5[%c0_45, %c0_46, %c0_47], %119 {strides = array<i32>} : memref<1x1x4xf32, #tpu.memory_space<vmem>>, vector<1x1x4xf32>,
    return
  }
  func.func @transform_0(%arg0: i32) -> (i32, i32, i32) {
    %c0_i32 = arith.constant 0 : i32
    %c0_i32_0 = arith.constant 0 : i32
    %c0_i32_1 = arith.constant 0 : i32
    return %arg0, %c0_i32, %c0_i32_0 : i32, i32, i32
  }
  func.func @transform_1(%arg0: i32) -> (i32, i32, i32) {
    %c0_i32 = arith.constant 0 : i32
    %c0_i32_0 = arith.constant 0 : i32
    %c0_i32_1 = arith.constant 0 : i32
    %c0_i32_2 = arith.constant 0 : i32
    return %c0_i32, %c0_i32_0, %c0_i32_1 : i32, i32, i32
  }
  func.func @transform_2(%arg0: i32) -> (i32, i32, i32) {
    %c0_i32 = arith.constant 0 : i32
    %c0_i32_0 = arith.constant 0 : i32
    %c0_i32_1 = arith.constant 0 : i32
    return %arg0, %c0_i32, %c0_i32_0 : i32, i32, i32
  }
  func.func @transform_3(%arg0: i32) -> (i32, i32, i32) {
    %c0_i32 = arith.constant 0 : i32
    %c0_i32_0 = arith.constant 0 : i32
    %c0_i32_1 = arith.constant 0 : i32
    return %arg0, %c0_i32, %c0_i32_0 : i32, i32, i32
  }
  func.func @transform_4(%arg0: i32) -> (i32, i32, i32) {
    %c0_i32 = arith.constant 0 : i32
    %c0_i32_0 = arith.constant 0 : i32
    %c0_i32_1 = arith.constant 0 : i32
    return %arg0, %c0_i32, %c0_i32_0 : i32, i32, i32
  }
}

module attributes {stable_mosaic.version = 11 : i64} {
  func.func @_bn2_add_relu_kernel(%arg0: i32, %arg1: memref<2x4x256xbf16, #tpu.memory_space<vmem>>, %arg2: memref<2x4x256xf32, #tpu.memory_space<vmem>>, %arg3: memref<4x1xf32, #tpu.memory_space<vmem>>, %arg4: memref<4x1xf32, #tpu.memory_space<vmem>>, %arg5: memref<2x4x256xf32, #tpu.memory_space<vmem>>) attributes {dimension_semantics = [#tpu.dimension_semantics<parallel>], iteration_bounds = array<i64: 1>, scalar_prefetch = 0 : i64, scratch_operands = 0 : i64, tpu.core_type = #tpu.core_type<tc>, window_params = [{transform_indices = @transform_0, window_bounds = array<i64: 2, 4, 256>}, {transform_indices = @transform_1, window_bounds = array<i64: 2, 4, 256>}, {pipeline_mode = #tpu.pipeline_mode<synchronous>, transform_indices = @transform_2, window_bounds = array<i64: 4, 1>}, {pipeline_mode = #tpu.pipeline_mode<synchronous>, transform_indices = @transform_3, window_bounds = array<i64: 4, 1>}, {transform_indices = @transform_4, window_bounds = array<i64: 2, 4, 256>}]} {
    %c0 = arith.constant 0 : index
    %c0_0 = arith.constant 0 : index
    %0 = vector.load %arg3[%c0, %c0_0] : memref<4x1xf32, #tpu.memory_space<vmem>>, vector<4x1xf32>
    %1 = vector.shape_cast %0 : vector<4x1xf32> to vector<1x4x1xf32>
    %c0_1 = arith.constant 0 : index
    %c0_2 = arith.constant 0 : index
    %2 = vector.load %arg4[%c0_1, %c0_2] : memref<4x1xf32, #tpu.memory_space<vmem>>, vector<4x1xf32>
    %3 = vector.shape_cast %2 : vector<4x1xf32> to vector<1x4x1xf32>
    %c0_3 = arith.constant 0 : index
    %c0_4 = arith.constant 0 : index
    %c0_5 = arith.constant 0 : index
    %4 = vector.load %arg1[%c0_3, %c0_4, %c0_5] : memref<2x4x256xbf16, #tpu.memory_space<vmem>>, vector<2x4x256xbf16>
    %5 = arith.extf %4 : vector<2x4x256xbf16> to vector<2x4x256xf32>
    %6 = vector.broadcast %1 : vector<1x4x1xf32> to vector<2x4x256xf32>
    %7 = arith.mulf %5, %6 : vector<2x4x256xf32>
    %8 = vector.broadcast %3 : vector<1x4x1xf32> to vector<2x4x256xf32>
    %9 = arith.addf %7, %8 : vector<2x4x256xf32>
    %c0_6 = arith.constant 0 : index
    %c0_7 = arith.constant 0 : index
    %c0_8 = arith.constant 0 : index
    %10 = vector.load %arg2[%c0_6, %c0_7, %c0_8] : memref<2x4x256xf32, #tpu.memory_space<vmem>>, vector<2x4x256xf32>
    %11 = arith.addf %9, %10 : vector<2x4x256xf32>
    %cst = arith.constant 0.000000e+00 : f32
    %12 = vector.broadcast %cst : f32 to vector<2x4x256xf32>
    %13 = arith.maximumf %11, %12 : vector<2x4x256xf32>
    %c0_9 = arith.constant 0 : index
    %c0_10 = arith.constant 0 : index
    %c0_11 = arith.constant 0 : index
    %14 = vector.load %arg5[%c0_9, %c0_10, %c0_11] : memref<2x4x256xf32, #tpu.memory_space<vmem>>, vector<2x4x256xf32>
    tpu.vector_store %arg5[%c0_9, %c0_10, %c0_11], %13 {strides = array<i32>} : memref<2x4x256xf32, #tpu.memory_space<vmem>>, vector<2x4x256xf32>,
    return
  }
  func.func @transform_0(%arg0: i32) -> (i32, i32, i32) {
    %c0_i32 = arith.constant 0 : i32
    %c0_i32_0 = arith.constant 0 : i32
    %c0_i32_1 = arith.constant 0 : i32
    return %arg0, %c0_i32, %c0_i32_0 : i32, i32, i32
  }
  func.func @transform_1(%arg0: i32) -> (i32, i32, i32) {
    %c0_i32 = arith.constant 0 : i32
    %c0_i32_0 = arith.constant 0 : i32
    %c0_i32_1 = arith.constant 0 : i32
    return %arg0, %c0_i32, %c0_i32_0 : i32, i32, i32
  }
  func.func @transform_2(%arg0: i32) -> (i32, i32) {
    %c0_i32 = arith.constant 0 : i32
    %c0_i32_0 = arith.constant 0 : i32
    %c0_i32_1 = arith.constant 0 : i32
    return %c0_i32, %c0_i32_0 : i32, i32
  }
  func.func @transform_3(%arg0: i32) -> (i32, i32) {
    %c0_i32 = arith.constant 0 : i32
    %c0_i32_0 = arith.constant 0 : i32
    %c0_i32_1 = arith.constant 0 : i32
    return %c0_i32, %c0_i32_0 : i32, i32
  }
  func.func @transform_4(%arg0: i32) -> (i32, i32, i32) {
    %c0_i32 = arith.constant 0 : i32
    %c0_i32_0 = arith.constant 0 : i32
    %c0_i32_1 = arith.constant 0 : i32
    return %arg0, %c0_i32, %c0_i32_0 : i32, i32, i32
  }
}

module attributes {stable_mosaic.version = 11 : i64} {
  func.func @_conv2_kernel(%arg0: i32, %arg1: memref<2x4x256xbf16, #tpu.memory_space<vmem>>, %arg2: memref<4x1xf32, #tpu.memory_space<vmem>>, %arg3: memref<4x1xf32, #tpu.memory_space<vmem>>, %arg4: memref<3x12x4xbf16, #tpu.memory_space<vmem>>, %arg5: memref<2x4x256xbf16, #tpu.memory_space<vmem>>, %arg6: memref<1x1x4xf32, #tpu.memory_space<vmem>>, %arg7: memref<1x1x4xf32, #tpu.memory_space<vmem>>) attributes {dimension_semantics = [#tpu.dimension_semantics<parallel>], iteration_bounds = array<i64: 1>, scalar_prefetch = 0 : i64, scratch_operands = 0 : i64, tpu.core_type = #tpu.core_type<tc>, window_params = [{transform_indices = @transform_0, window_bounds = array<i64: 2, 4, 256>}, {pipeline_mode = #tpu.pipeline_mode<synchronous>, transform_indices = @transform_1, window_bounds = array<i64: 4, 1>}, {pipeline_mode = #tpu.pipeline_mode<synchronous>, transform_indices = @transform_2, window_bounds = array<i64: 4, 1>}, {pipeline_mode = #tpu.pipeline_mode<synchronous>, transform_indices = @transform_3, window_bounds = array<i64: 3, 12, 4>}, {transform_indices = @transform_4, window_bounds = array<i64: 2, 4, 256>}, {transform_indices = @transform_5, window_bounds = array<i64: 1, 1, 4>}, {transform_indices = @transform_6, window_bounds = array<i64: 1, 1, 4>}]} {
    %cst = arith.constant 0.000000e+00 : f32
    %0 = vector.broadcast %cst : f32 to vector<1x4xf32>
    %cst_0 = arith.constant 0.000000e+00 : f32
    %1 = vector.broadcast %cst_0 : f32 to vector<1x4xf32>
    %c0 = arith.constant 0 : index
    %c0_1 = arith.constant 0 : index
    %2 = vector.load %arg2[%c0, %c0_1] : memref<4x1xf32, #tpu.memory_space<vmem>>, vector<4x1xf32>
    %c0_2 = arith.constant 0 : index
    %c0_3 = arith.constant 0 : index
    %3 = vector.load %arg3[%c0_2, %c0_3] : memref<4x1xf32, #tpu.memory_space<vmem>>, vector<4x1xf32>
    %c0_4 = arith.constant 0 : index
    %c0_5 = arith.constant 0 : index
    %c0_6 = arith.constant 0 : index
    %4 = vector.load %arg1[%c0_4, %c0_5, %c0_6] : memref<2x4x256xbf16, #tpu.memory_space<vmem>>, vector<1x4x256xbf16>
    %5 = vector.shape_cast %4 : vector<1x4x256xbf16> to vector<4x256xbf16>
    %6 = arith.extf %5 : vector<4x256xbf16> to vector<4x256xf32>
    %7 = vector.broadcast %2 : vector<4x1xf32> to vector<4x256xf32>
    %8 = arith.mulf %6, %7 : vector<4x256xf32>
    %9 = vector.broadcast %3 : vector<4x1xf32> to vector<4x256xf32>
    %10 = arith.addf %8, %9 : vector<4x256xf32>
    %cst_7 = arith.constant 0.000000e+00 : f32
    %11 = vector.broadcast %cst_7 : f32 to vector<4x256xf32>
    %12 = arith.maximumf %10, %11 : vector<4x256xf32>
    %13 = tpu.transpose %12, [1, 0] : vector<4x256xf32> -> vector<256x4xf32>
    %14 = vector.shape_cast %13 : vector<256x4xf32> to vector<16x16x4xf32>
    %15 = arith.truncf %14 : vector<16x16x4xf32> to vector<16x16x4xbf16>
    %cst_8 = arith.constant 0.000000e+00 : bf16
    %16 = vector.broadcast %cst_8 : bf16 to vector<1x16x4xbf16>
    %17 = tpu.concatenate %16, %15, %16 in 0 : vector<1x16x4xbf16>, vector<16x16x4xbf16>, vector<1x16x4xbf16> -> vector<18x16x4xbf16>
    %cst_9 = arith.constant 0.000000e+00 : bf16
    %18 = vector.broadcast %cst_9 : bf16 to vector<18x1x4xbf16>
    %19 = tpu.concatenate %18, %17, %18 in 1 : vector<18x1x4xbf16>, vector<18x16x4xbf16>, vector<18x1x4xbf16> -> vector<18x18x4xbf16>
    %20 = vector.extract_strided_slice %19 {offsets = [0, 0, 0], sizes = [16, 18, 4], strides = [1, 1, 1]} : vector<18x18x4xbf16> to vector<16x18x4xbf16>
    %21 = vector.extract_strided_slice %20 {offsets = [0, 0, 0], sizes = [16, 16, 4], strides = [1, 1, 1]} : vector<16x18x4xbf16> to vector<16x16x4xbf16>
    %22 = vector.shape_cast %21 : vector<16x16x4xbf16> to vector<256x4xbf16>
    %23 = vector.extract_strided_slice %20 {offsets = [0, 1, 0], sizes = [16, 16, 4], strides = [1, 1, 1]} : vector<16x18x4xbf16> to vector<16x16x4xbf16>
    %24 = vector.shape_cast %23 : vector<16x16x4xbf16> to vector<256x4xbf16>
    %25 = vector.extract_strided_slice %20 {offsets = [0, 2, 0], sizes = [16, 16, 4], strides = [1, 1, 1]} : vector<16x18x4xbf16> to vector<16x16x4xbf16>
    %26 = vector.shape_cast %25 : vector<16x16x4xbf16> to vector<256x4xbf16>
    %27 = tpu.concatenate %22, %24, %26 in 1 : vector<256x4xbf16>, vector<256x4xbf16>, vector<256x4xbf16> -> vector<256x12xbf16>
    %c0_10 = arith.constant 0 : index
    %c0_11 = arith.constant 0 : index
    %c0_12 = arith.constant 0 : index
    %28 = vector.load %arg4[%c0_10, %c0_11, %c0_12] : memref<3x12x4xbf16, #tpu.memory_space<vmem>>, vector<1x12x4xbf16>
    %29 = vector.shape_cast %28 : vector<1x12x4xbf16> to vector<12x4xbf16>
    %cst_13 = arith.constant dense<0.000000e+00> : vector<256x4xf32>
    %30 = tpu.matmul %27, %29, %cst_13 {dimension_numbers = #tpu.dot_dimension_numbers<[1], [0], [0], [1], [0, 0, 1, 1], [], []>} : vector<256x12xbf16>, vector<12x4xbf16>, vector<256x4xf32> -> vector<256x4xf32>
    %31 = vector.extract_strided_slice %19 {offsets = [1, 0, 0], sizes = [16, 18, 4], strides = [1, 1, 1]} : vector<18x18x4xbf16> to vector<16x18x4xbf16>
    %32 = vector.extract_strided_slice %31 {offsets = [0, 0, 0], sizes = [16, 16, 4], strides = [1, 1, 1]} : vector<16x18x4xbf16> to vector<16x16x4xbf16>
    %33 = vector.shape_cast %32 : vector<16x16x4xbf16> to vector<256x4xbf16>
    %34 = vector.extract_strided_slice %31 {offsets = [0, 1, 0], sizes = [16, 16, 4], strides = [1, 1, 1]} : vector<16x18x4xbf16> to vector<16x16x4xbf16>
    %35 = vector.shape_cast %34 : vector<16x16x4xbf16> to vector<256x4xbf16>
    %36 = vector.extract_strided_slice %31 {offsets = [0, 2, 0], sizes = [16, 16, 4], strides = [1, 1, 1]} : vector<16x18x4xbf16> to vector<16x16x4xbf16>
    %37 = vector.shape_cast %36 : vector<16x16x4xbf16> to vector<256x4xbf16>
    %38 = tpu.concatenate %33, %35, %37 in 1 : vector<256x4xbf16>, vector<256x4xbf16>, vector<256x4xbf16> -> vector<256x12xbf16>
    %c1 = arith.constant 1 : index
    %c0_14 = arith.constant 0 : index
    %c0_15 = arith.constant 0 : index
    %39 = vector.load %arg4[%c1, %c0_14, %c0_15] : memref<3x12x4xbf16, #tpu.memory_space<vmem>>, vector<1x12x4xbf16>
    %40 = vector.shape_cast %39 : vector<1x12x4xbf16> to vector<12x4xbf16>
    %cst_16 = arith.constant dense<0.000000e+00> : vector<256x4xf32>
    %41 = tpu.matmul %38, %40, %cst_16 {dimension_numbers = #tpu.dot_dimension_numbers<[1], [0], [0], [1], [0, 0, 1, 1], [], []>} : vector<256x12xbf16>, vector<12x4xbf16>, vector<256x4xf32> -> vector<256x4xf32>
    %42 = arith.addf %30, %41 : vector<256x4xf32>
    %43 = vector.extract_strided_slice %19 {offsets = [2, 0, 0], sizes = [16, 18, 4], strides = [1, 1, 1]} : vector<18x18x4xbf16> to vector<16x18x4xbf16>
    %44 = vector.extract_strided_slice %43 {offsets = [0, 0, 0], sizes = [16, 16, 4], strides = [1, 1, 1]} : vector<16x18x4xbf16> to vector<16x16x4xbf16>
    %45 = vector.shape_cast %44 : vector<16x16x4xbf16> to vector<256x4xbf16>
    %46 = vector.extract_strided_slice %43 {offsets = [0, 1, 0], sizes = [16, 16, 4], strides = [1, 1, 1]} : vector<16x18x4xbf16> to vector<16x16x4xbf16>
    %47 = vector.shape_cast %46 : vector<16x16x4xbf16> to vector<256x4xbf16>
    %48 = vector.extract_strided_slice %43 {offsets = [0, 2, 0], sizes = [16, 16, 4], strides = [1, 1, 1]} : vector<16x18x4xbf16> to vector<16x16x4xbf16>
    %49 = vector.shape_cast %48 : vector<16x16x4xbf16> to vector<256x4xbf16>
    %50 = tpu.concatenate %45, %47, %49 in 1 : vector<256x4xbf16>, vector<256x4xbf16>, vector<256x4xbf16> -> vector<256x12xbf16>
    %c2 = arith.constant 2 : index
    %c0_17 = arith.constant 0 : index
    %c0_18 = arith.constant 0 : index
    %51 = vector.load %arg4[%c2, %c0_17, %c0_18] : memref<3x12x4xbf16, #tpu.memory_space<vmem>>, vector<1x12x4xbf16>
    %52 = vector.shape_cast %51 : vector<1x12x4xbf16> to vector<12x4xbf16>
    %cst_19 = arith.constant dense<0.000000e+00> : vector<256x4xf32>
    %53 = tpu.matmul %50, %52, %cst_19 {dimension_numbers = #tpu.dot_dimension_numbers<[1], [0], [0], [1], [0, 0, 1, 1], [], []>} : vector<256x12xbf16>, vector<12x4xbf16>, vector<256x4xf32> -> vector<256x4xf32>
    %54 = arith.addf %42, %53 : vector<256x4xf32>
    %cst_20 = arith.constant dense<0.000000e+00> : vector<4xf32>
    %55 = vector.multi_reduction <add>, %54, %cst_20 [0] : vector<256x4xf32> to vector<4xf32>
    %56 = vector.shape_cast %55 : vector<4xf32> to vector<1x4xf32>
    %57 = arith.addf %0, %56 : vector<1x4xf32>
    %58 = arith.mulf %54, %54 : vector<256x4xf32>
    %cst_21 = arith.constant dense<0.000000e+00> : vector<4xf32>
    %59 = vector.multi_reduction <add>, %58, %cst_21 [0] : vector<256x4xf32> to vector<4xf32>
    %60 = vector.shape_cast %59 : vector<4xf32> to vector<1x4xf32>
    %61 = arith.addf %1, %60 : vector<1x4xf32>
    %62 = tpu.transpose %54, [1, 0] : vector<256x4xf32> -> vector<4x256xf32>
    %63 = arith.truncf %62 : vector<4x256xf32> to vector<4x256xbf16>
    %c0_22 = arith.constant 0 : index
    %c0_23 = arith.constant 0 : index
    %c0_24 = arith.constant 0 : index
    %64 = vector.load %arg5[%c0_22, %c0_23, %c0_24] : memref<2x4x256xbf16, #tpu.memory_space<vmem>>, vector<1x4x256xbf16>
    %65 = vector.shape_cast %64 : vector<1x4x256xbf16> to vector<4x256xbf16>
    %66 = vector.shape_cast %63 : vector<4x256xbf16> to vector<1x4x256xbf16>
    tpu.vector_store %arg5[%c0_22, %c0_23, %c0_24], %66 {strides = array<i32>} : memref<2x4x256xbf16, #tpu.memory_space<vmem>>, vector<1x4x256xbf16>,
    %c1_25 = arith.constant 1 : index
    %c0_26 = arith.constant 0 : index
    %c0_27 = arith.constant 0 : index
    %67 = vector.load %arg1[%c1_25, %c0_26, %c0_27] : memref<2x4x256xbf16, #tpu.memory_space<vmem>>, vector<1x4x256xbf16>
    %68 = vector.shape_cast %67 : vector<1x4x256xbf16> to vector<4x256xbf16>
    %69 = arith.extf %68 : vector<4x256xbf16> to vector<4x256xf32>
    %70 = vector.broadcast %2 : vector<4x1xf32> to vector<4x256xf32>
    %71 = arith.mulf %69, %70 : vector<4x256xf32>
    %72 = vector.broadcast %3 : vector<4x1xf32> to vector<4x256xf32>
    %73 = arith.addf %71, %72 : vector<4x256xf32>
    %cst_28 = arith.constant 0.000000e+00 : f32
    %74 = vector.broadcast %cst_28 : f32 to vector<4x256xf32>
    %75 = arith.maximumf %73, %74 : vector<4x256xf32>
    %76 = tpu.transpose %75, [1, 0] : vector<4x256xf32> -> vector<256x4xf32>
    %77 = vector.shape_cast %76 : vector<256x4xf32> to vector<16x16x4xf32>
    %78 = arith.truncf %77 : vector<16x16x4xf32> to vector<16x16x4xbf16>
    %cst_29 = arith.constant 0.000000e+00 : bf16
    %79 = vector.broadcast %cst_29 : bf16 to vector<1x16x4xbf16>
    %80 = tpu.concatenate %79, %78, %79 in 0 : vector<1x16x4xbf16>, vector<16x16x4xbf16>, vector<1x16x4xbf16> -> vector<18x16x4xbf16>
    %cst_30 = arith.constant 0.000000e+00 : bf16
    %81 = vector.broadcast %cst_30 : bf16 to vector<18x1x4xbf16>
    %82 = tpu.concatenate %81, %80, %81 in 1 : vector<18x1x4xbf16>, vector<18x16x4xbf16>, vector<18x1x4xbf16> -> vector<18x18x4xbf16>
    %83 = vector.extract_strided_slice %82 {offsets = [0, 0, 0], sizes = [16, 18, 4], strides = [1, 1, 1]} : vector<18x18x4xbf16> to vector<16x18x4xbf16>
    %84 = vector.extract_strided_slice %83 {offsets = [0, 0, 0], sizes = [16, 16, 4], strides = [1, 1, 1]} : vector<16x18x4xbf16> to vector<16x16x4xbf16>
    %85 = vector.shape_cast %84 : vector<16x16x4xbf16> to vector<256x4xbf16>
    %86 = vector.extract_strided_slice %83 {offsets = [0, 1, 0], sizes = [16, 16, 4], strides = [1, 1, 1]} : vector<16x18x4xbf16> to vector<16x16x4xbf16>
    %87 = vector.shape_cast %86 : vector<16x16x4xbf16> to vector<256x4xbf16>
    %88 = vector.extract_strided_slice %83 {offsets = [0, 2, 0], sizes = [16, 16, 4], strides = [1, 1, 1]} : vector<16x18x4xbf16> to vector<16x16x4xbf16>
    %89 = vector.shape_cast %88 : vector<16x16x4xbf16> to vector<256x4xbf16>
    %90 = tpu.concatenate %85, %87, %89 in 1 : vector<256x4xbf16>, vector<256x4xbf16>, vector<256x4xbf16> -> vector<256x12xbf16>
    %c0_31 = arith.constant 0 : index
    %c0_32 = arith.constant 0 : index
    %c0_33 = arith.constant 0 : index
    %91 = vector.load %arg4[%c0_31, %c0_32, %c0_33] : memref<3x12x4xbf16, #tpu.memory_space<vmem>>, vector<1x12x4xbf16>
    %92 = vector.shape_cast %91 : vector<1x12x4xbf16> to vector<12x4xbf16>
    %cst_34 = arith.constant dense<0.000000e+00> : vector<256x4xf32>
    %93 = tpu.matmul %90, %92, %cst_34 {dimension_numbers = #tpu.dot_dimension_numbers<[1], [0], [0], [1], [0, 0, 1, 1], [], []>} : vector<256x12xbf16>, vector<12x4xbf16>, vector<256x4xf32> -> vector<256x4xf32>
    %94 = vector.extract_strided_slice %82 {offsets = [1, 0, 0], sizes = [16, 18, 4], strides = [1, 1, 1]} : vector<18x18x4xbf16> to vector<16x18x4xbf16>
    %95 = vector.extract_strided_slice %94 {offsets = [0, 0, 0], sizes = [16, 16, 4], strides = [1, 1, 1]} : vector<16x18x4xbf16> to vector<16x16x4xbf16>
    %96 = vector.shape_cast %95 : vector<16x16x4xbf16> to vector<256x4xbf16>
    %97 = vector.extract_strided_slice %94 {offsets = [0, 1, 0], sizes = [16, 16, 4], strides = [1, 1, 1]} : vector<16x18x4xbf16> to vector<16x16x4xbf16>
    %98 = vector.shape_cast %97 : vector<16x16x4xbf16> to vector<256x4xbf16>
    %99 = vector.extract_strided_slice %94 {offsets = [0, 2, 0], sizes = [16, 16, 4], strides = [1, 1, 1]} : vector<16x18x4xbf16> to vector<16x16x4xbf16>
    %100 = vector.shape_cast %99 : vector<16x16x4xbf16> to vector<256x4xbf16>
    %101 = tpu.concatenate %96, %98, %100 in 1 : vector<256x4xbf16>, vector<256x4xbf16>, vector<256x4xbf16> -> vector<256x12xbf16>
    %c1_35 = arith.constant 1 : index
    %c0_36 = arith.constant 0 : index
    %c0_37 = arith.constant 0 : index
    %102 = vector.load %arg4[%c1_35, %c0_36, %c0_37] : memref<3x12x4xbf16, #tpu.memory_space<vmem>>, vector<1x12x4xbf16>
    %103 = vector.shape_cast %102 : vector<1x12x4xbf16> to vector<12x4xbf16>
    %cst_38 = arith.constant dense<0.000000e+00> : vector<256x4xf32>
    %104 = tpu.matmul %101, %103, %cst_38 {dimension_numbers = #tpu.dot_dimension_numbers<[1], [0], [0], [1], [0, 0, 1, 1], [], []>} : vector<256x12xbf16>, vector<12x4xbf16>, vector<256x4xf32> -> vector<256x4xf32>
    %105 = arith.addf %93, %104 : vector<256x4xf32>
    %106 = vector.extract_strided_slice %82 {offsets = [2, 0, 0], sizes = [16, 18, 4], strides = [1, 1, 1]} : vector<18x18x4xbf16> to vector<16x18x4xbf16>
    %107 = vector.extract_strided_slice %106 {offsets = [0, 0, 0], sizes = [16, 16, 4], strides = [1, 1, 1]} : vector<16x18x4xbf16> to vector<16x16x4xbf16>
    %108 = vector.shape_cast %107 : vector<16x16x4xbf16> to vector<256x4xbf16>
    %109 = vector.extract_strided_slice %106 {offsets = [0, 1, 0], sizes = [16, 16, 4], strides = [1, 1, 1]} : vector<16x18x4xbf16> to vector<16x16x4xbf16>
    %110 = vector.shape_cast %109 : vector<16x16x4xbf16> to vector<256x4xbf16>
    %111 = vector.extract_strided_slice %106 {offsets = [0, 2, 0], sizes = [16, 16, 4], strides = [1, 1, 1]} : vector<16x18x4xbf16> to vector<16x16x4xbf16>
    %112 = vector.shape_cast %111 : vector<16x16x4xbf16> to vector<256x4xbf16>
    %113 = tpu.concatenate %108, %110, %112 in 1 : vector<256x4xbf16>, vector<256x4xbf16>, vector<256x4xbf16> -> vector<256x12xbf16>
    %c2_39 = arith.constant 2 : index
    %c0_40 = arith.constant 0 : index
    %c0_41 = arith.constant 0 : index
    %114 = vector.load %arg4[%c2_39, %c0_40, %c0_41] : memref<3x12x4xbf16, #tpu.memory_space<vmem>>, vector<1x12x4xbf16>
    %115 = vector.shape_cast %114 : vector<1x12x4xbf16> to vector<12x4xbf16>
    %cst_42 = arith.constant dense<0.000000e+00> : vector<256x4xf32>
    %116 = tpu.matmul %113, %115, %cst_42 {dimension_numbers = #tpu.dot_dimension_numbers<[1], [0], [0], [1], [0, 0, 1, 1], [], []>} : vector<256x12xbf16>, vector<12x4xbf16>, vector<256x4xf32> -> vector<256x4xf32>
    %117 = arith.addf %105, %116 : vector<256x4xf32>
    %cst_43 = arith.constant dense<0.000000e+00> : vector<4xf32>
    %118 = vector.multi_reduction <add>, %117, %cst_43 [0] : vector<256x4xf32> to vector<4xf32>
    %119 = vector.shape_cast %118 : vector<4xf32> to vector<1x4xf32>
    %120 = arith.addf %57, %119 : vector<1x4xf32>
    %121 = arith.mulf %117, %117 : vector<256x4xf32>
    %cst_44 = arith.constant dense<0.000000e+00> : vector<4xf32>
    %122 = vector.multi_reduction <add>, %121, %cst_44 [0] : vector<256x4xf32> to vector<4xf32>
    %123 = vector.shape_cast %122 : vector<4xf32> to vector<1x4xf32>
    %124 = arith.addf %61, %123 : vector<1x4xf32>
    %125 = tpu.transpose %117, [1, 0] : vector<256x4xf32> -> vector<4x256xf32>
    %126 = arith.truncf %125 : vector<4x256xf32> to vector<4x256xbf16>
    %c1_45 = arith.constant 1 : index
    %c0_46 = arith.constant 0 : index
    %c0_47 = arith.constant 0 : index
    %127 = vector.load %arg5[%c1_45, %c0_46, %c0_47] : memref<2x4x256xbf16, #tpu.memory_space<vmem>>, vector<1x4x256xbf16>
    %128 = vector.shape_cast %127 : vector<1x4x256xbf16> to vector<4x256xbf16>
    %129 = vector.shape_cast %126 : vector<4x256xbf16> to vector<1x4x256xbf16>
    tpu.vector_store %arg5[%c1_45, %c0_46, %c0_47], %129 {strides = array<i32>} : memref<2x4x256xbf16, #tpu.memory_space<vmem>>, vector<1x4x256xbf16>,
    %c0_48 = arith.constant 0 : index
    %c0_49 = arith.constant 0 : index
    %c0_50 = arith.constant 0 : index
    %130 = vector.load %arg6[%c0_48, %c0_49, %c0_50] : memref<1x1x4xf32, #tpu.memory_space<vmem>>, vector<1x1x4xf32>
    %131 = vector.shape_cast %130 : vector<1x1x4xf32> to vector<1x4xf32>
    %132 = vector.shape_cast %120 : vector<1x4xf32> to vector<1x1x4xf32>
    tpu.vector_store %arg6[%c0_48, %c0_49, %c0_50], %132 {strides = array<i32>} : memref<1x1x4xf32, #tpu.memory_space<vmem>>, vector<1x1x4xf32>,
    %c0_51 = arith.constant 0 : index
    %c0_52 = arith.constant 0 : index
    %c0_53 = arith.constant 0 : index
    %133 = vector.load %arg7[%c0_51, %c0_52, %c0_53] : memref<1x1x4xf32, #tpu.memory_space<vmem>>, vector<1x1x4xf32>
    %134 = vector.shape_cast %133 : vector<1x1x4xf32> to vector<1x4xf32>
    %135 = vector.shape_cast %124 : vector<1x4xf32> to vector<1x1x4xf32>
    tpu.vector_store %arg7[%c0_51, %c0_52, %c0_53], %135 {strides = array<i32>} : memref<1x1x4xf32, #tpu.memory_space<vmem>>, vector<1x1x4xf32>,
    return
  }
  func.func @transform_0(%arg0: i32) -> (i32, i32, i32) {
    %c0_i32 = arith.constant 0 : i32
    %c0_i32_0 = arith.constant 0 : i32
    %c0_i32_1 = arith.constant 0 : i32
    return %arg0, %c0_i32, %c0_i32_0 : i32, i32, i32
  }
  func.func @transform_1(%arg0: i32) -> (i32, i32) {
    %c0_i32 = arith.constant 0 : i32
    %c0_i32_0 = arith.constant 0 : i32
    %c0_i32_1 = arith.constant 0 : i32
    return %c0_i32, %c0_i32_0 : i32, i32
  }
  func.func @transform_2(%arg0: i32) -> (i32, i32) {
    %c0_i32 = arith.constant 0 : i32
    %c0_i32_0 = arith.constant 0 : i32
    %c0_i32_1 = arith.constant 0 : i32
    return %c0_i32, %c0_i32_0 : i32, i32
  }
  func.func @transform_3(%arg0: i32) -> (i32, i32, i32) {
    %c0_i32 = arith.constant 0 : i32
    %c0_i32_0 = arith.constant 0 : i32
    %c0_i32_1 = arith.constant 0 : i32
    %c0_i32_2 = arith.constant 0 : i32
    return %c0_i32, %c0_i32_0, %c0_i32_1 : i32, i32, i32
  }
  func.func @transform_4(%arg0: i32) -> (i32, i32, i32) {
    %c0_i32 = arith.constant 0 : i32
    %c0_i32_0 = arith.constant 0 : i32
    %c0_i32_1 = arith.constant 0 : i32
    return %arg0, %c0_i32, %c0_i32_0 : i32, i32, i32
  }
  func.func @transform_5(%arg0: i32) -> (i32, i32, i32) {
    %c0_i32 = arith.constant 0 : i32
    %c0_i32_0 = arith.constant 0 : i32
    %c0_i32_1 = arith.constant 0 : i32
    return %arg0, %c0_i32, %c0_i32_0 : i32, i32, i32
  }
  func.func @transform_6(%arg0: i32) -> (i32, i32, i32) {
    %c0_i32 = arith.constant 0 : i32
    %c0_i32_0 = arith.constant 0 : i32
    %c0_i32_1 = arith.constant 0 : i32
    return %arg0, %c0_i32, %c0_i32_0 : i32, i32, i32
  }
}

</mosaic_0001>

<llo_original>
// kernel: basic_block_pallas.5
$region0: #{basic_block_pallas.5}
  #allocation0 [shape = 'u32[]', space=smem, size = 0x4, offset = 0x4, fixed_abs, tag = 'smem constant byte address 0x4 - core index']
  #allocation1 [shape = 'u32[144,128]{1,0:T(1,128)}', space=vmem, size = 0x12000, scoped, tag = 'internal scratch']
  %s0 = inlined_call_operand.vmem [shape: bf16[2,4,256], index: 0, kind: input, shape index: {}]
  %s1 = inlined_call_operand.vmem [shape: f32[2,4,256], index: 1, kind: input, shape index: {}]
  %s2 = inlined_call_operand.vmem [shape: f32[4,1], index: 2, kind: input, shape index: {}]
  %s3 = inlined_call_operand.vmem [shape: f32[4,1], index: 3, kind: input, shape index: {}]
  %s4 = inlined_call_operand.vmem [shape: f32[2,4,256], index: 4, kind: output, shape index: {}]
  %s5 = sld [smem:[#allocation0]]
  $region26: #{basic_block_pallas.5} parent=0
    _
  %s7 = ssub.s32 1, %s5
  %s8 = scalar_select 0, %s7, %s5
  // Predicated region
  $region2: #{basic_block_pallas.5} parent=0 // pred_check
    _
  $region3: #{basic_block_pallas.5} parent=0 // pred_check_branch
    %10 = sbr.rel (0) target = $region5
  $region4: #{basic_block_pallas.5} parent=0 // pred_region
    _
  $region5: #{basic_block_pallas.5} parent=0 // pred_fallthru
    _
  // Predicated region
  $region6: #{basic_block_pallas.5} parent=0 // pred_check
    _
  $region7: #{basic_block_pallas.5} parent=0 // pred_check_branch
    %12 = sbr.rel (0) target = $region9
  $region8: #{basic_block_pallas.5} parent=0 // pred_region
    _
  $region9: #{basic_block_pallas.5} parent=0 // pred_fallthru
    _
  // Predicated region
  $region10: #{basic_block_pallas.5} parent=0 // pred_check
    _
  $region11: #{basic_block_pallas.5} parent=0 // pred_check_branch
    %14 = sbr.rel (0) target = $region13
  $region12: #{basic_block_pallas.5} parent=0 // pred_region
    _
  $region13: #{basic_block_pallas.5} parent=0 // pred_fallthru
    _
  // Predicated region
  $region14: #{basic_block_pallas.5} parent=0 // pred_check
    _
  $region15: #{basic_block_pallas.5} parent=0 // pred_check_branch
    %16 = sbr.rel (0) target = $region17
  $region16: #{basic_block_pallas.5} parent=0 // pred_region
    _
  $region17: #{basic_block_pallas.5} parent=0 // pred_fallthru
    _
  %v17 = vld [vmem:[%s2] sm:$0xf]
  %v18 = vld [vmem:[%s3] sm:$0xf]
  %v19 = vld [vmem:[%s0] sm:$0xf]
  %v20 = vld [vmem:[%s0 + $0x4] sm:$0xf]
  %v21 = vunpack.c.l.bf16 %v19
  %v22 = vunpack.c.l.bf16 %v20
  %24 = vset.pattern.permute.xlu0 0
  %25 = vperm.xlu0 %24, %v17
  %v26 = vpop.permute.xlu0 %25
  %v28 = vunpack.c.l.s4 839922192
  %v29 = vunpack.c.0.s8 %v28
  %v30 = vlaneseq
  %v31 = vshrl.u32 %v30, 7
  %v32 = vsub.s32 %v29, %v31
  %v33 = vrot.slane %v26, %v32
  %v35 = vmul.f32 %v21, %v33
  %v36 = vmul.f32 %v22, %v33
  %38 = vset.pattern.permute.xlu0 0
  %39 = vperm.xlu0 %38, %v18
  %v40 = vpop.permute.xlu0 %39
  %v42 = vunpack.c.l.s4 839922192
  %v43 = vunpack.c.0.s8 %v42
  %v44 = vlaneseq
  %v45 = vshrl.u32 %v44, 7
  %v46 = vsub.s32 %v43, %v45
  %v47 = vrot.slane %v40, %v46
  %v49 = vadd.f32 %v35, %v47
  %v50 = vadd.f32 %v36, %v47
  %v51 = vld [vmem:[%s1] sm:$0xff]
  %v52 = vld [vmem:[%s1 + $0x8] sm:$0xff]
  %v53 = vadd.f32 %v49, %v51
  %v54 = vadd.f32 %v50, %v52
  %v55 = vmax.f32 %v53, 0.0
  %v56 = vmax.f32 %v54, 0.0
  %57 = vst [vmem:[%s4] sm:$0xff] %v55
  %58 = vst [vmem:[%s4 + $0x8] sm:$0xff] %v56
  // Predicated region
  $region18: #{basic_block_pallas.5} parent=0 // pred_check
    _
  $region19: #{basic_block_pallas.5} parent=0 // pred_check_branch
    %60 = sbr.rel (0) target = $region21
  $region20: #{basic_block_pallas.5} parent=0 // pred_region
    _
  $region21: #{basic_block_pallas.5} parent=0 // pred_fallthru
    _
  // Predicated region
  $region22: #{basic_block_pallas.5} parent=0 // pred_check
    _
  $region23: #{basic_block_pallas.5} parent=0 // pred_check_branch
    %62 = sbr.rel (0) target = $region25
  $region24: #{basic_block_pallas.5} parent=0 // pred_region
    _
  $region25: #{basic_block_pallas.5} parent=0 // pred_fallthru
    _

// kernel: basic_block_pallas.3
$region0: #{basic_block_pallas.3}
  #allocation0 [shape = 'u32[]', space=smem, size = 0x4, offset = 0x4, fixed_abs, tag = 'smem constant byte address 0x4 - core index']
  #allocation1 [shape = 'u32[144,128]{1,0:T(1,128)}', space=vmem, size = 0x12000, scoped, tag = 'internal scratch']
  %s0 = inlined_call_operand.vmem [shape: f32[2,4,256], index: 0, kind: input, shape index: {}]
  %s1 = inlined_call_operand.vmem [shape: bf16[3,12,4], index: 1, kind: input, shape index: {}]
  %s2 = inlined_call_operand.vmem [shape: bf16[2,4,256], index: 2, kind: output, shape index: {0}]
  %s3 = inlined_call_operand.vmem [shape: f32[1,1,4], index: 3, kind: output, shape index: {1}]
  %s4 = inlined_call_operand.vmem [shape: f32[1,1,4], index: 4, kind: output, shape index: {2}]
  %5 = xla_tuple %s2, %s3, %s4
  %s6 = sld [smem:[#allocation0]]
  $region34: #{basic_block_pallas.3} parent=0
    _
  %s8 = ssub.s32 1, %s6
  %s9 = scalar_select 0, %s8, %s6
  // Predicated region
  $region2: #{basic_block_pallas.3} parent=0 // pred_check
    _
  $region3: #{basic_block_pallas.3} parent=0 // pred_check_branch
    %11 = sbr.rel (0) target = $region5
  $region4: #{basic_block_pallas.3} parent=0 // pred_region
    _
  $region5: #{basic_block_pallas.3} parent=0 // pred_fallthru
    _
  // Predicated region
  $region6: #{basic_block_pallas.3} parent=0 // pred_check
    _
  $region7: #{basic_block_pallas.3} parent=0 // pred_check_branch
    %13 = sbr.rel (0) target = $region9
  $region8: #{basic_block_pallas.3} parent=0 // pred_region
    _
  $region9: #{basic_block_pallas.3} parent=0 // pred_fallthru
    _
  %v15 = vld [vmem:[%s0] sm:$0xff]
  %v17 = vcombine.high %v15, %v15
  %19 = vxpose.xlu0.b32.start [1/16] %v15, 128
  %20 = vxpose.xlu0.b32.cont [2/16] 0.0, 128
  %21 = vxpose.xlu0.b32.cont [3/16] 0.0, 128
  %22 = vxpose.xlu0.b32.cont [4/16] 0.0, 128
  %23 = vxpose.xlu0.b32.cont [5/16] 0.0, 128
  %24 = vxpose.xlu0.b32.cont [6/16] 0.0, 128
  %25 = vxpose.xlu0.b32.cont [7/16] 0.0, 128
  %26 = vxpose.xlu0.b32.cont [8/16] 0.0, 128
  %27 = vxpose.xlu0.b32.cont [9/16] 0.0, 128
  %28 = vxpose.xlu0.b32.cont [10/16] 0.0, 128
  %29 = vxpose.xlu0.b32.cont [11/16] 0.0, 128
  %30 = vxpose.xlu0.b32.cont [12/16] 0.0, 128
  %31 = vxpose.xlu0.b32.cont [13/16] 0.0, 128
  %32 = vxpose.xlu0.b32.cont [14/16] 0.0, 128
  %33 = vxpose.xlu0.b32.cont [15/16] 0.0, 128
  %34 = vxpose.xlu0.b32.end [16/16] 0.0, 128
  %v35 = vpop.trf.xlu0
  %v36 = vpop.trf.xlu0
  %v37 = vpop.trf.xlu0
  %v38 = vpop.trf.xlu0
  %v39 = vpop.trf.xlu0
  %v40 = vpop.trf.xlu0
  %v41 = vpop.trf.xlu0
  %v42 = vpop.trf.xlu0
  %v43 = vpop.trf.xlu0
  %v44 = vpop.trf.xlu0
  %v45 = vpop.trf.xlu0
  %v46 = vpop.trf.xlu0
  %v47 = vpop.trf.xlu0
  %v48 = vpop.trf.xlu0
  %v49 = vpop.trf.xlu0
  %v50 = vpop.trf.xlu0
  %51 = vxpose.xlu0.b32.start [1/16] %v17, 128
  %52 = vxpose.xlu0.b32.cont [2/16] 0.0, 128
  %53 = vxpose.xlu0.b32.cont [3/16] 0.0, 128
  %54 = vxpose.xlu0.b32.cont [4/16] 0.0, 128
  %55 = vxpose.xlu0.b32.cont [5/16] 0.0, 128
  %56 = vxpose.xlu0.b32.cont [6/16] 0.0, 128
  %57 = vxpose.xlu0.b32.cont [7/16] 0.0, 128
  %58 = vxpose.xlu0.b32.cont [8/16] 0.0, 128
  %59 = vxpose.xlu0.b32.cont [9/16] 0.0, 128
  %60 = vxpose.xlu0.b32.cont [10/16] 0.0, 128
  %61 = vxpose.xlu0.b32.cont [11/16] 0.0, 128
  %62 = vxpose.xlu0.b32.cont [12/16] 0.0, 128
  %63 = vxpose.xlu0.b32.cont [13/16] 0.0, 128
  %64 = vxpose.xlu0.b32.cont [14/16] 0.0, 128
  %65 = vxpose.xlu0.b32.cont [15/16] 0.0, 128
  %66 = vxpose.xlu0.b32.end [16/16] 0.0, 128
  %v67 = vpop.trf.xlu0
  %v68 = vpop.trf.xlu0
  %v69 = vpop.trf.xlu0
  %v70 = vpop.trf.xlu0
  %v71 = vpop.trf.xlu0
  %v72 = vpop.trf.xlu0
  %v73 = vpop.trf.xlu0
  %v74 = vpop.trf.xlu0
  %v75 = vpop.trf.xlu0
  %v76 = vpop.trf.xlu0
  %v77 = vpop.trf.xlu0
  %v78 = vpop.trf.xlu0
  %v79 = vpop.trf.xlu0
  %v80 = vpop.trf.xlu0
  %v81 = vpop.trf.xlu0
  %v82 = vpop.trf.xlu0
  %v83 = vpack.c.bf16 %v36, %v35
  %v84 = vpack.c.bf16 %v38, %v37
  %v85 = vpack.c.bf16 %v40, %v39
  %v86 = vpack.c.bf16 %v42, %v41
  %v87 = vpack.c.bf16 %v44, %v43
  %v88 = vpack.c.bf16 %v46, %v45
  %v89 = vpack.c.bf16 %v48, %v47
  %v90 = vpack.c.bf16 %v50, %v49
  %v91 = vpack.c.bf16 %v68, %v67
  %v92 = vpack.c.bf16 %v70, %v69
  %v93 = vpack.c.bf16 %v72, %v71
  %v94 = vpack.c.bf16 %v74, %v73
  %v95 = vpack.c.bf16 %v76, %v75
  %v96 = vpack.c.bf16 %v78, %v77
  %v97 = vpack.c.bf16 %v80, %v79
  %v98 = vpack.c.bf16 %v82, %v81
  %v100 = vshrl.u32 0, 16
  %v102 = vrot.slane %v100, 7
  %v103 = vshll.u32 0, 16
  %v105 = vor.u32 %v102, %v103
  %v107 = vshrl.u32 %v83, 16
  %v109 = vrot.slane %v107, 7
  %v110 = vshll.u32 %v83, 16
  %v112 = vor.u32 %v109, %v110
  %v114 = vshrl.u32 %v84, 16
  %v116 = vrot.slane %v114, 7
  %v117 = vshll.u32 %v84, 16
  %v119 = vor.u32 %v116, %v117
  %v121 = vshrl.u32 %v85, 16
  %v123 = vrot.slane %v121, 7
  %v124 = vshll.u32 %v85, 16
  %v126 = vor.u32 %v123, %v124
  %v128 = vshrl.u32 %v86, 16
  %v130 = vrot.slane %v128, 7
  %v131 = vshll.u32 %v86, 16
  %v133 = vor.u32 %v130, %v131
  %v135 = vshrl.u32 %v87, 16
  %v137 = vrot.slane %v135, 7
  %v138 = vshll.u32 %v87, 16
  %v140 = vor.u32 %v137, %v138
  %v142 = vshrl.u32 %v88, 16
  %v144 = vrot.slane %v142, 7
  %v145 = vshll.u32 %v88, 16
  %v147 = vor.u32 %v144, %v145
  %v149 = vshrl.u32 %v89, 16
  %v151 = vrot.slane %v149, 7
  %v152 = vshll.u32 %v89, 16
  %v154 = vor.u32 %v151, %v152
  %v156 = vshrl.u32 %v90, 16
  %v158 = vrot.slane %v156, 7
  %v159 = vshll.u32 %v90, 16
  %v161 = vor.u32 %v158, %v159
  %v163 = vshrl.u32 %v91, 16
  %v165 = vrot.slane %v163, 7
  %v166 = vshll.u32 %v91, 16
  %v168 = vor.u32 %v165, %v166
  %v170 = vshrl.u32 %v92, 16
  %v172 = vrot.slane %v170, 7
  %v173 = vshll.u32 %v92, 16
  %v175 = vor.u32 %v172, %v173
  %v177 = vshrl.u32 %v93, 16
  %v179 = vrot.slane %v177, 7
  %v180 = vshll.u32 %v93, 16
  %v182 = vor.u32 %v179, %v180
  %v184 = vshrl.u32 %v94, 16
  %v186 = vrot.slane %v184, 7
  %v187 = vshll.u32 %v94, 16
  %v189 = vor.u32 %v186, %v187
  %v191 = vshrl.u32 %v95, 16
  %v193 = vrot.slane %v191, 7
  %v194 = vshll.u32 %v95, 16
  %v196 = vor.u32 %v193, %v194
  %v198 = vshrl.u32 %v96, 16
  %v200 = vrot.slane %v198, 7
  %v201 = vshll.u32 %v96, 16
  %v203 = vor.u32 %v200, %v201
  %v205 = vshrl.u32 %v97, 16
  %v207 = vrot.slane %v205, 7
  %v208 = vshll.u32 %v97, 16
  %v210 = vor.u32 %v207, %v208
  %v212 = vshrl.u32 %v98, 16
  %v214 = vrot.slane %v212, 7
  %v215 = vshll.u32 %v98, 16
  %v217 = vor.u32 %v214, %v215
  %vm252 = vcmask 1040384
  %vm253 = vsmask.f32 256
  %vm254 = vmand %vm252, %vm253
  %v255 = vsel %vm254, 0, %v105
  %v256 = vsel %vm254, 0, %v112
  %v257 = vsel %vm254, 0, %v119
  %v258 = vsel %vm254, 0, %v126
  %v259 = vsel %vm254, 0, %v133
  %v260 = vsel %vm254, 0, %v140
  %v261 = vsel %vm254, 0, %v147
  %v262 = vsel %vm254, 0, %v154
  %v263 = vsel %vm254, 0, %v161
  %v264 = vsel %vm254, 0, %v168
  %v265 = vsel %vm254, 0, %v175
  %v266 = vsel %vm254, 0, %v182
  %v267 = vsel %vm254, 0, %v189
  %v268 = vsel %vm254, 0, %v196
  %v269 = vsel %vm254, 0, %v203
  %v270 = vsel %vm254, 0, %v210
  %v271 = vsel %vm254, 0, %v217
  %v272 = vsel %vm254, %v102, 0
  %v273 = vsel %vm254, %v109, 0
  %v274 = vsel %vm254, %v116, 0
  %v275 = vsel %vm254, %v123, 0
  %v276 = vsel %vm254, %v130, 0
  %v277 = vsel %vm254, %v137, 0
  %v278 = vsel %vm254, %v144, 0
  %v279 = vsel %vm254, %v151, 0
  %v280 = vsel %vm254, %v158, 0
  %v281 = vsel %vm254, %v165, 0
  %v282 = vsel %vm254, %v172, 0
  %v283 = vsel %vm254, %v179, 0
  %v284 = vsel %vm254, %v186, 0
  %v285 = vsel %vm254, %v193, 0
  %v286 = vsel %vm254, %v200, 0
  %v287 = vsel %vm254, %v207, 0
  %v288 = vsel %vm254, %v214, 0
  %vm289 = vsmask.f32 7424
  %v291 = vshrl.u32 %v255, 16
  %v293 = vshll.u32 %v255, 16
  %v295 = vrot.slane %v293, 1
  %v296 = vor.u32 %v291, %v295
  %v298 = vshll.u32 %v272, 16
  %v300 = vrot.slane %v298, 1
  %v301 = vsel %vm289, %v296, %v300
  %v303 = vshrl.u32 %v256, 16
  %v305 = vshll.u32 %v256, 16
  %v307 = vrot.slane %v305, 1
  %v308 = vor.u32 %v303, %v307
  %v310 = vshll.u32 %v273, 16
  %v312 = vrot.slane %v310, 1
  %v313 = vsel %vm289, %v308, %v312
  %v315 = vshrl.u32 %v257, 16
  %v317 = vshll.u32 %v257, 16
  %v319 = vrot.slane %v317, 1
  %v320 = vor.u32 %v315, %v319
  %v322 = vshll.u32 %v274, 16
  %v324 = vrot.slane %v322, 1
  %v325 = vsel %vm289, %v320, %v324
  %v327 = vshrl.u32 %v258, 16
  %v329 = vshll.u32 %v258, 16
  %v331 = vrot.slane %v329, 1
  %v332 = vor.u32 %v327, %v331
  %v334 = vshll.u32 %v275, 16
  %v336 = vrot.slane %v334, 1
  %v337 = vsel %vm289, %v332, %v336
  %v339 = vshrl.u32 %v259, 16
  %v341 = vshll.u32 %v259, 16
  %v343 = vrot.slane %v341, 1
  %v344 = vor.u32 %v339, %v343
  %v346 = vshll.u32 %v276, 16
  %v348 = vrot.slane %v346, 1
  %v349 = vsel %vm289, %v344, %v348
  %v351 = vshrl.u32 %v260, 16
  %v353 = vshll.u32 %v260, 16
  %v355 = vrot.slane %v353, 1
  %v356 = vor.u32 %v351, %v355
  %v358 = vshll.u32 %v277, 16
  %v360 = vrot.slane %v358, 1
  %v361 = vsel %vm289, %v356, %v360
  %v363 = vshrl.u32 %v261, 16
  %v365 = vshll.u32 %v261, 16
  %v367 = vrot.slane %v365, 1
  %v368 = vor.u32 %v363, %v367
  %v370 = vshll.u32 %v278, 16
  %v372 = vrot.slane %v370, 1
  %v373 = vsel %vm289, %v368, %v372
  %v375 = vshrl.u32 %v262, 16
  %v377 = vshll.u32 %v262, 16
  %v379 = vrot.slane %v377, 1
  %v380 = vor.u32 %v375, %v379
  %v382 = vshll.u32 %v279, 16
  %v384 = vrot.slane %v382, 1
  %v385 = vsel %vm289, %v380, %v384
  %v387 = vshrl.u32 %v263, 16
  %v389 = vshll.u32 %v263, 16
  %v391 = vrot.slane %v389, 1
  %v392 = vor.u32 %v387, %v391
  %v394 = vshll.u32 %v280, 16
  %v396 = vrot.slane %v394, 1
  %v397 = vsel %vm289, %v392, %v396
  %v399 = vshrl.u32 %v264, 16
  %v401 = vshll.u32 %v264, 16
  %v403 = vrot.slane %v401, 1
  %v404 = vor.u32 %v399, %v403
  %v406 = vshll.u32 %v281, 16
  %v408 = vrot.slane %v406, 1
  %v409 = vsel %vm289, %v404, %v408
  %v411 = vshrl.u32 %v265, 16
  %v413 = vshll.u32 %v265, 16
  %v415 = vrot.slane %v413, 1
  %v416 = vor.u32 %v411, %v415
  %v418 = vshll.u32 %v282, 16
  %v420 = vrot.slane %v418, 1
  %v421 = vsel %vm289, %v416, %v420
  %v423 = vshrl.u32 %v266, 16
  %v425 = vshll.u32 %v266, 16
  %v427 = vrot.slane %v425, 1
  %v428 = vor.u32 %v423, %v427
  %v430 = vshll.u32 %v283, 16
  %v432 = vrot.slane %v430, 1
  %v433 = vsel %vm289, %v428, %v432
  %v435 = vshrl.u32 %v267, 16
  %v437 = vshll.u32 %v267, 16
  %v439 = vrot.slane %v437, 1
  %v440 = vor.u32 %v435, %v439
  %v442 = vshll.u32 %v284, 16
  %v444 = vrot.slane %v442, 1
  %v445 = vsel %vm289, %v440, %v444
  %v447 = vshrl.u32 %v268, 16
  %v449 = vshll.u32 %v268, 16
  %v451 = vrot.slane %v449, 1
  %v452 = vor.u32 %v447, %v451
  %v454 = vshll.u32 %v285, 16
  %v456 = vrot.slane %v454, 1
  %v457 = vsel %vm289, %v452, %v456
  %v459 = vshrl.u32 %v269, 16
  %v461 = vshll.u32 %v269, 16
  %v463 = vrot.slane %v461, 1
  %v464 = vor.u32 %v459, %v463
  %v466 = vshll.u32 %v286, 16
  %v468 = vrot.slane %v466, 1
  %v469 = vsel %vm289, %v464, %v468
  %v471 = vshrl.u32 %v270, 16
  %v473 = vshll.u32 %v270, 16
  %v475 = vrot.slane %v473, 1
  %v476 = vor.u32 %v471, %v475
  %v478 = vshll.u32 %v287, 16
  %v480 = vrot.slane %v478, 1
  %v481 = vsel %vm289, %v476, %v480
  %vm514 = vcmask 1046528
  %v515 = vrot.slane %v255, 1
  %v516 = vrot.slane %v272, 1
  %v517 = vsel %vm514, %v515, %v516
  %v518 = vrot.slane %v256, 1
  %v519 = vrot.slane %v273, 1
  %v520 = vsel %vm514, %v518, %v519
  %v521 = vrot.slane %v257, 1
  %v522 = vrot.slane %v274, 1
  %v523 = vsel %vm514, %v521, %v522
  %v524 = vrot.slane %v258, 1
  %v525 = vrot.slane %v275, 1
  %v526 = vsel %vm514, %v524, %v525
  %v527 = vrot.slane %v259, 1
  %v528 = vrot.slane %v276, 1
  %v529 = vsel %vm514, %v527, %v528
  %v530 = vrot.slane %v260, 1
  %v531 = vrot.slane %v277, 1
  %v532 = vsel %vm514, %v530, %v531
  %v533 = vrot.slane %v261, 1
  %v534 = vrot.slane %v278, 1
  %v535 = vsel %vm514, %v533, %v534
  %v536 = vrot.slane %v262, 1
  %v537 = vrot.slane %v279, 1
  %v538 = vsel %vm514, %v536, %v537
  %v539 = vrot.slane %v263, 1
  %v540 = vrot.slane %v280, 1
  %v541 = vsel %vm514, %v539, %v540
  %v542 = vrot.slane %v264, 1
  %v543 = vrot.slane %v281, 1
  %v544 = vsel %vm514, %v542, %v543
  %v545 = vrot.slane %v265, 1
  %v546 = vrot.slane %v282, 1
  %v547 = vsel %vm514, %v545, %v546
  %v548 = vrot.slane %v266, 1
  %v549 = vrot.slane %v283, 1
  %v550 = vsel %vm514, %v548, %v549
  %v551 = vrot.slane %v267, 1
  %v552 = vrot.slane %v284, 1
  %v553 = vsel %vm514, %v551, %v552
  %v554 = vrot.slane %v268, 1
  %v555 = vrot.slane %v285, 1
  %v556 = vsel %vm514, %v554, %v555
  %v557 = vrot.slane %v269, 1
  %v558 = vrot.slane %v286, 1
  %v559 = vsel %vm514, %v557, %v558
  %v560 = vrot.slane %v270, 1
  %v561 = vrot.slane %v287, 1
  %v562 = vsel %vm514, %v560, %v561
  %563 = vrot.lane.b32.xlu0 %v301, 4
  %v564 = vpop.permute.xlu0 %563
  %565 = vrot.lane.b32.xlu0 %v313, 4
  %v566 = vpop.permute.xlu0 %565
  %567 = vrot.lane.b32.xlu0 %v325, 4
  %v568 = vpop.permute.xlu0 %567
  %569 = vrot.lane.b32.xlu0 %v337, 4
  %v570 = vpop.permute.xlu0 %569
  %571 = vrot.lane.b32.xlu0 %v349, 4
  %v572 = vpop.permute.xlu0 %571
  %573 = vrot.lane.b32.xlu0 %v361, 4
  %v574 = vpop.permute.xlu0 %573
  %575 = vrot.lane.b32.xlu0 %v373, 4
  %v576 = vpop.permute.xlu0 %575
  %577 = vrot.lane.b32.xlu0 %v385, 4
  %v578 = vpop.permute.xlu0 %577
  %579 = vrot.lane.b32.xlu0 %v397, 4
  %v580 = vpop.permute.xlu0 %579
  %581 = vrot.lane.b32.xlu0 %v409, 4
  %v582 = vpop.permute.xlu0 %581
  %583 = vrot.lane.b32.xlu0 %v421, 4
  %v584 = vpop.permute.xlu0 %583
  %585 = vrot.lane.b32.xlu0 %v433, 4
  %v586 = vpop.permute.xlu0 %585
  %587 = vrot.lane.b32.xlu0 %v445, 4
  %v588 = vpop.permute.xlu0 %587
  %589 = vrot.lane.b32.xlu0 %v457, 4
  %v590 = vpop.permute.xlu0 %589
  %591 = vrot.lane.b32.xlu0 %v469, 4
  %v592 = vpop.permute.xlu0 %591
  %593 = vrot.lane.b32.xlu0 %v481, 4
  %v594 = vpop.permute.xlu0 %593
  %595 = vrot.lane.b32.xlu0 %v517, 8
  %v596 = vpop.permute.xlu0 %595
  %597 = vrot.lane.b32.xlu0 %v520, 8
  %v598 = vpop.permute.xlu0 %597
  %599 = vrot.lane.b32.xlu0 %v523, 8
  %v600 = vpop.permute.xlu0 %599
  %601 = vrot.lane.b32.xlu0 %v526, 8
  %v602 = vpop.permute.xlu0 %601
  %603 = vrot.lane.b32.xlu0 %v529, 8
  %v604 = vpop.permute.xlu0 %603
  %605 = vrot.lane.b32.xlu0 %v532, 8
  %v606 = vpop.permute.xlu0 %605
  %607 = vrot.lane.b32.xlu0 %v535, 8
  %v608 = vpop.permute.xlu0 %607
  %609 = vrot.lane.b32.xlu0 %v538, 8
  %v610 = vpop.permute.xlu0 %609
  %611 = vrot.lane.b32.xlu0 %v541, 8
  %v612 = vpop.permute.xlu0 %611
  %613 = vrot.lane.b32.xlu0 %v544, 8
  %v614 = vpop.permute.xlu0 %613
  %615 = vrot.lane.b32.xlu0 %v547, 8
  %v616 = vpop.permute.xlu0 %615
  %617 = vrot.lane.b32.xlu0 %v550, 8
  %v618 = vpop.permute.xlu0 %617
  %619 = vrot.lane.b32.xlu0 %v553, 8
  %v620 = vpop.permute.xlu0 %619
  %621 = vrot.lane.b32.xlu0 %v556, 8
  %v622 = vpop.permute.xlu0 %621
  %623 = vrot.lane.b32.xlu0 %v559, 8
  %v624 = vpop.permute.xlu0 %623
  %625 = vrot.lane.b32.xlu0 %v562, 8
  %v626 = vpop.permute.xlu0 %625
  %vm627 = vcmask 31744
  %v629 = vsel %vm627, %v255, %v564
  %v631 = vsel %vm627, %v256, %v566
  %v633 = vsel %vm627, %v257, %v568
  %v635 = vsel %vm627, %v258, %v570
  %v637 = vsel %vm627, %v259, %v572
  %v639 = vsel %vm627, %v260, %v574
  %v641 = vsel %vm627, %v261, %v576
  %v643 = vsel %vm627, %v262, %v578
  %v645 = vsel %vm627, %v263, %v580
  %v647 = vsel %vm627, %v264, %v582
  %v649 = vsel %vm627, %v265, %v584
  %v651 = vsel %vm627, %v266, %v586
  %v653 = vsel %vm627, %v267, %v588
  %v655 = vsel %vm627, %v268, %v590
  %v657 = vsel %vm627, %v269, %v592
  %v659 = vsel %vm627, %v270, %v594
  %vm660 = vcmask 64512
  %v662 = vsel %vm660, %v629, %v596
  %v664 = vsel %vm660, %v631, %v598
  %v666 = vsel %vm660, %v633, %v600
  %v668 = vsel %vm660, %v635, %v602
  %v670 = vsel %vm660, %v637, %v604
  %v672 = vsel %vm660, %v639, %v606
  %v674 = vsel %vm660, %v641, %v608
  %v676 = vsel %vm660, %v643, %v610
  %v678 = vsel %vm660, %v645, %v612
  %v680 = vsel %vm660, %v647, %v614
  %v682 = vsel %vm660, %v649, %v616
  %v684 = vsel %vm660, %v651, %v618
  %v686 = vsel %vm660, %v653, %v620
  %v688 = vsel %vm660, %v655, %v622
  %v690 = vsel %vm660, %v657, %v624
  %v692 = vsel %vm660, %v659, %v626
  %v693 = vld [vmem:[%s1] sm:$0xf]
  %v694 = vld [vmem:[%s1 + $0x4] sm:$0x3]
  %v696 = vshrl.u32 %v271, 16
  %v698 = vshll.u32 %v271, 16
  %v700 = vrot.slane %v698, 1
  %v701 = vor.u32 %v696, %v700
  %v703 = vshll.u32 %v288, 16
  %v705 = vrot.slane %v703, 1
  %v706 = vsel %vm289, %v701, %v705
  %v709 = vrot.slane %v271, 1
  %v710 = vrot.slane %v288, 1
  %v711 = vsel %vm514, %v709, %v710
  %712 = vrot.lane.b32.xlu0 %v706, 4
  %v713 = vpop.permute.xlu0 %712
  %714 = vrot.lane.b32.xlu0 %v711, 8
  %v715 = vpop.permute.xlu0 %714
  %v717 = vsel %vm627, %v271, %v713
  %v719 = vsel %vm660, %v717, %v715
  %s720 = scalar_lea.vmem %s1, 8
  %v721 = vld [vmem:[%s720] sm:$0xf]
  %v722 = vld [vmem:[%s720 + $0x4] sm:$0x3]
  %v725 = vunpack.c.l.b16 %v721
  %v726 = vunpack.c.l.b16 %v722
  %v727 = vpack.c.b16 %v726, %v725
  %vm728 = vcmask 97280
  %v729 = vsel %vm728, %v664, 0
  %v731 = vsel %vm728, %v666, 0
  %v733 = vsel %vm728, %v668, 0
  %v735 = vsel %vm728, %v670, 0
  %v737 = vsel %vm728, %v672, 0
  %v739 = vsel %vm728, %v674, 0
  %v741 = vsel %vm728, %v676, 0
  %v743 = vsel %vm728, %v678, 0
  %v745 = vsel %vm728, %v680, 0
  %v747 = vsel %vm728, %v682, 0
  %v749 = vsel %vm728, %v684, 0
  %v751 = vsel %vm728, %v686, 0
  %v753 = vsel %vm728, %v688, 0
  %v755 = vsel %vm728, %v690, 0
  %v757 = vsel %vm728, %v692, 0
  %v759 = vsel %vm728, %v719, 0
  %vm761 = vcmask 1045504
  %v763 = vsel %vm761, %v727, 0
  %765 = vmatprep.subr.bf16.mxu0 0
  %766 = vmatpush1.bf16.msra.mxu0 0
  %767 = vmatprep.subr.bf16.mxu0 0
  %768 = vmatpush1.bf16.msra.mxu0 0
  %769 = vmatprep.subr.bf16.mxu0 0
  %770 = vmatpush1.bf16.msra.mxu0 0
  %771 = vmatprep.subr.bf16.mxu0 0
  %772 = vmatpush1.bf16.msra.mxu0 0
  %773 = vmatprep.subr.bf16.mxu0 0
  %774 = vmatpush1.bf16.msra.mxu0 0
  %775 = vmatprep.subr.bf16.mxu0 0
  %776 = vmatpush1.bf16.msra.mxu0 0
  %777 = vmatprep.subr.bf16.mxu0 0
  %778 = vmatpush1.bf16.msra.mxu0 0
  %779 = vmatprep.subr.bf16.mxu0 0
  %780 = vmatpush1.bf16.msra.mxu0 %v763
  %781 = vmatprep.subr.bf16.mxu0 0
  %782 = vmatpush2.bf16.msra.mxu0 0
  %783 = vmatprep.subr.bf16.mxu0 0
  %784 = vmatpush2.bf16.msra.mxu0 0
  %785 = vmatprep.subr.bf16.mxu0 0
  %786 = vmatpush2.bf16.msra.mxu0 0
  %787 = vmatprep.subr.bf16.mxu0 0
  %788 = vmatpush2.bf16.msra.mxu0 0
  %789 = vmatprep.subr.bf16.mxu0 0
  %790 = vmatpush2.bf16.msra.mxu0 0
  %791 = vmatprep.subr.bf16.mxu0 0
  %792 = vmatpush2.bf16.msra.mxu0 0
  %793 = vmatprep.subr.bf16.mxu0 0
  %794 = vmatpush2.bf16.msra.mxu0 0
  %795 = vmatprep.subr.bf16.mxu0 0
  %796 = vmatpush2.bf16.msra.mxu0 0
  %797 = vmatprep.mubr.bf16.mxu0 0
  %798 = vmatmul.mubr.bf16.gmra.mxu0 %v729
  %v799 = vpop.f32.mrf.mxu0
  %v800 = vadd.f32 0.0, %v799
  %v801 = vpop.f32.mrf.mxu0
  %v802 = vpop.f32.mrf.mxu0
  %v803 = vadd.f32 0.0, %v802
  %v804 = vpop.f32.mrf.mxu0
  %805 = vmatprep.mubr.bf16.mxu0 0
  %806 = vmatmul.mubr.bf16.gmra.mxu0 %v731
  %v807 = vpop.f32.mrf.mxu0
  %v808 = vadd.f32 0.0, %v807
  %v809 = vpop.f32.mrf.mxu0
  %v810 = vpop.f32.mrf.mxu0
  %v811 = vadd.f32 0.0, %v810
  %v812 = vpop.f32.mrf.mxu0
  %813 = vmatprep.mubr.bf16.mxu0 0
  %814 = vmatmul.mubr.bf16.gmra.mxu0 %v733
  %v815 = vpop.f32.mrf.mxu0
  %v816 = vadd.f32 0.0, %v815
  %v817 = vpop.f32.mrf.mxu0
  %v818 = vpop.f32.mrf.mxu0
  %v819 = vadd.f32 0.0, %v818
  %v820 = vpop.f32.mrf.mxu0
  %821 = vmatprep.mubr.bf16.mxu0 0
  %822 = vmatmul.mubr.bf16.gmra.mxu0 %v735
  %v823 = vpop.f32.mrf.mxu0
  %v824 = vadd.f32 0.0, %v823
  %v825 = vpop.f32.mrf.mxu0
  %v826 = vpop.f32.mrf.mxu0
  %v827 = vadd.f32 0.0, %v826
  %v828 = vpop.f32.mrf.mxu0
  %829 = vmatprep.mubr.bf16.mxu0 0
  %830 = vmatmul.mubr.bf16.gmra.mxu0 %v737
  %v831 = vpop.f32.mrf.mxu0
  %v832 = vadd.f32 0.0, %v831
  %v833 = vpop.f32.mrf.mxu0
  %v834 = vpop.f32.mrf.mxu0
  %v835 = vadd.f32 0.0, %v834
  %v836 = vpop.f32.mrf.mxu0
  %837 = vmatprep.mubr.bf16.mxu0 0
  %838 = vmatmul.mubr.bf16.gmra.mxu0 %v739
  %v839 = vpop.f32.mrf.mxu0
  %v840 = vadd.f32 0.0, %v839
  %v841 = vpop.f32.mrf.mxu0
  %v842 = vpop.f32.mrf.mxu0
  %v843 = vadd.f32 0.0, %v842
  %v844 = vpop.f32.mrf.mxu0
  %845 = vmatprep.mubr.bf16.mxu0 0
  %846 = vmatmul.mubr.bf16.gmra.mxu0 %v741
  %v847 = vpop.f32.mrf.mxu0
  %v848 = vadd.f32 0.0, %v847
  %v849 = vpop.f32.mrf.mxu0
  %v850 = vpop.f32.mrf.mxu0
  %v851 = vadd.f32 0.0, %v850
  %v852 = vpop.f32.mrf.mxu0
  %853 = vmatprep.mubr.bf16.mxu0 0
  %854 = vmatmul.mubr.bf16.gmra.mxu0 %v743
  %v855 = vpop.f32.mrf.mxu0
  %v856 = vadd.f32 0.0, %v855
  %v857 = vpop.f32.mrf.mxu0
  %v858 = vpop.f32.mrf.mxu0
  %v859 = vadd.f32 0.0, %v858
  %v860 = vpop.f32.mrf.mxu0
  %861 = vmatprep.mubr.bf16.mxu0 0
  %862 = vmatmul.mubr.bf16.gmra.mxu0 %v745
  %v863 = vpop.f32.mrf.mxu0
  %v864 = vadd.f32 0.0, %v863
  %v865 = vpop.f32.mrf.mxu0
  %v866 = vpop.f32.mrf.mxu0
  %v867 = vadd.f32 0.0, %v866
  %v868 = vpop.f32.mrf.mxu0
  %869 = vmatprep.mubr.bf16.mxu0 0
  %870 = vmatmul.mubr.bf16.gmra.mxu0 %v747
  %v871 = vpop.f32.mrf.mxu0
  %v872 = vadd.f32 0.0, %v871
  %v873 = vpop.f32.mrf.mxu0
  %v874 = vpop.f32.mrf.mxu0
  %v875 = vadd.f32 0.0, %v874
  %v876 = vpop.f32.mrf.mxu0
  %877 = vmatprep.mubr.bf16.mxu0 0
  %878 = vmatmul.mubr.bf16.gmra.mxu0 %v749
  %v879 = vpop.f32.mrf.mxu0
  %v880 = vadd.f32 0.0, %v879
  %v881 = vpop.f32.mrf.mxu0
  %v882 = vpop.f32.mrf.mxu0
  %v883 = vadd.f32 0.0, %v882
  %v884 = vpop.f32.mrf.mxu0
  %885 = vmatprep.mubr.bf16.mxu0 0
  %886 = vmatmul.mubr.bf16.gmra.mxu0 %v751
  %v887 = vpop.f32.mrf.mxu0
  %v888 = vadd.f32 0.0, %v887
  %v889 = vpop.f32.mrf.mxu0
  %v890 = vpop.f32.mrf.mxu0
  %v891 = vadd.f32 0.0, %v890
  %v892 = vpop.f32.mrf.mxu0
  %893 = vmatprep.mubr.bf16.mxu0 0
  %894 = vmatmul.mubr.bf16.gmra.mxu0 %v753
  %v895 = vpop.f32.mrf.mxu0
  %v896 = vadd.f32 0.0, %v895
  %v897 = vpop.f32.mrf.mxu0
  %v898 = vpop.f32.mrf.mxu0
  %v899 = vadd.f32 0.0, %v898
  %v900 = vpop.f32.mrf.mxu0
  %901 = vmatprep.mubr.bf16.mxu0 0
  %902 = vmatmul.mubr.bf16.gmra.mxu0 %v755
  %v903 = vpop.f32.mrf.mxu0
  %v904 = vadd.f32 0.0, %v903
  %v905 = vpop.f32.mrf.mxu0
  %v906 = vpop.f32.mrf.mxu0
  %v907 = vadd.f32 0.0, %v906
  %v908 = vpop.f32.mrf.mxu0
  %909 = vmatprep.mubr.bf16.mxu0 0
  %910 = vmatmul.mubr.bf16.gmra.mxu0 %v757
  %v911 = vpop.f32.mrf.mxu0
  %v912 = vadd.f32 0.0, %v911
  %v913 = vpop.f32.mrf.mxu0
  %v914 = vpop.f32.mrf.mxu0
  %v915 = vadd.f32 0.0, %v914
  %v916 = vpop.f32.mrf.mxu0
  %917 = vmatprep.mubr.bf16.mxu0 0
  %918 = vmatmul.mubr.bf16.gmra.mxu0 %v759
  %v919 = vpop.f32.mrf.mxu0
  %v920 = vadd.f32 0.0, %v919
  %v921 = vpop.f32.mrf.mxu0
  %v922 = vpop.f32.mrf.mxu0
  %v923 = vadd.f32 0.0, %v922
  %v924 = vpop.f32.mrf.mxu0
  %925 = vdwg.mxu0
  %v928 = vunpack.c.l.b16 %v693
  %v929 = vunpack.c.l.b16 %v694
  %v930 = vpack.c.b16 %v929, %v928
  %v931 = vsel %vm728, %v662, 0
  %v934 = vsel %vm761, %v930, 0
  %936 = vmatprep.subr.bf16.mxu0 0
  %937 = vmatpush1.bf16.msra.mxu0 0
  %938 = vmatprep.subr.bf16.mxu0 0
  %939 = vmatpush1.bf16.msra.mxu0 0
  %940 = vmatprep.subr.bf16.mxu0 0
  %941 = vmatpush1.bf16.msra.mxu0 0
  %942 = vmatprep.subr.bf16.mxu0 0
  %943 = vmatpush1.bf16.msra.mxu0 0
  %944 = vmatprep.subr.bf16.mxu0 0
  %945 = vmatpush1.bf16.msra.mxu0 0
  %946 = vmatprep.subr.bf16.mxu0 0
  %947 = vmatpush1.bf16.msra.mxu0 0
  %948 = vmatprep.subr.bf16.mxu0 0
  %949 = vmatpush1.bf16.msra.mxu0 0
  %950 = vmatprep.subr.bf16.mxu0 0
  %951 = vmatpush1.bf16.msra.mxu0 %v934
  %952 = vmatprep.subr.bf16.mxu0 0
  %953 = vmatpush2.bf16.msra.mxu0 0
  %954 = vmatprep.subr.bf16.mxu0 0
  %955 = vmatpush2.bf16.msra.mxu0 0
  %956 = vmatprep.subr.bf16.mxu0 0
  %957 = vmatpush2.bf16.msra.mxu0 0
  %958 = vmatprep.subr.bf16.mxu0 0
  %959 = vmatpush2.bf16.msra.mxu0 0
  %960 = vmatprep.subr.bf16.mxu0 0
  %961 = vmatpush2.bf16.msra.mxu0 0
  %962 = vmatprep.subr.bf16.mxu0 0
  %963 = vmatpush2.bf16.msra.mxu0 0
  %964 = vmatprep.subr.bf16.mxu0 0
  %965 = vmatpush2.bf16.msra.mxu0 0
  %966 = vmatprep.subr.bf16.mxu0 0
  %967 = vmatpush2.bf16.msra.mxu0 0
  %968 = vmatprep.mubr.bf16.mxu0 0
  %969 = vmatmul.mubr.bf16.gmra.mxu0 %v931
  %v970 = vpop.f32.mrf.mxu0
  %v971 = vadd.f32 %v800, %v970
  %v972 = vpop.f32.mrf.mxu0
  %v973 = vpop.f32.mrf.mxu0
  %v974 = vadd.f32 %v803, %v973
  %v975 = vpop.f32.mrf.mxu0
  %976 = vmatprep.mubr.bf16.mxu0 0
  %977 = vmatmul.mubr.bf16.gmra.mxu0 %v729
  %v978 = vpop.f32.mrf.mxu0
  %v979 = vadd.f32 %v808, %v978
  %v980 = vpop.f32.mrf.mxu0
  %v981 = vpop.f32.mrf.mxu0
  %v982 = vadd.f32 %v811, %v981
  %v983 = vpop.f32.mrf.mxu0
  %984 = vmatprep.mubr.bf16.mxu0 0
  %985 = vmatmul.mubr.bf16.gmra.mxu0 %v731
  %v986 = vpop.f32.mrf.mxu0
  %v987 = vadd.f32 %v816, %v986
  %v988 = vpop.f32.mrf.mxu0
  %v989 = vpop.f32.mrf.mxu0
  %v990 = vadd.f32 %v819, %v989
  %v991 = vpop.f32.mrf.mxu0
  %992 = vmatprep.mubr.bf16.mxu0 0
  %993 = vmatmul.mubr.bf16.gmra.mxu0 %v733
  %v994 = vpop.f32.mrf.mxu0
  %v995 = vadd.f32 %v824, %v994
  %v996 = vpop.f32.mrf.mxu0
  %v997 = vpop.f32.mrf.mxu0
  %v998 = vadd.f32 %v827, %v997
  %v999 = vpop.f32.mrf.mxu0
  %1000 = vmatprep.mubr.bf16.mxu0 0
  %1001 = vmatmul.mubr.bf16.gmra.mxu0 %v735
  %v1002 = vpop.f32.mrf.mxu0
  %v1003 = vadd.f32 %v832, %v1002
  %v1004 = vpop.f32.mrf.mxu0
  %v1005 = vpop.f32.mrf.mxu0
  %v1006 = vadd.f32 %v835, %v1005
  %v1007 = vpop.f32.mrf.mxu0
  %1008 = vmatprep.mubr.bf16.mxu0 0
  %1009 = vmatmul.mubr.bf16.gmra.mxu0 %v737
  %v1010 = vpop.f32.mrf.mxu0
  %v1011 = vadd.f32 %v840, %v1010
  %v1012 = vpop.f32.mrf.mxu0
  %v1013 = vpop.f32.mrf.mxu0
  %v1014 = vadd.f32 %v843, %v1013
  %v1015 = vpop.f32.mrf.mxu0
  %1016 = vmatprep.mubr.bf16.mxu0 0
  %1017 = vmatmul.mubr.bf16.gmra.mxu0 %v739
  %v1018 = vpop.f32.mrf.mxu0
  %v1019 = vadd.f32 %v848, %v1018
  %v1020 = vpop.f32.mrf.mxu0
  %v1021 = vpop.f32.mrf.mxu0
  %v1022 = vadd.f32 %v851, %v1021
  %v1023 = vpop.f32.mrf.mxu0
  %1024 = vmatprep.mubr.bf16.mxu0 0
  %1025 = vmatmul.mubr.bf16.gmra.mxu0 %v741
  %v1026 = vpop.f32.mrf.mxu0
  %v1027 = vadd.f32 %v856, %v1026
  %v1028 = vpop.f32.mrf.mxu0
  %v1029 = vpop.f32.mrf.mxu0
  %v1030 = vadd.f32 %v859, %v1029
  %v1031 = vpop.f32.mrf.mxu0
  %1032 = vmatprep.mubr.bf16.mxu0 0
  %1033 = vmatmul.mubr.bf16.gmra.mxu0 %v743
  %v1034 = vpop.f32.mrf.mxu0
  %v1035 = vadd.f32 %v864, %v1034
  %v1036 = vpop.f32.mrf.mxu0
  %v1037 = vpop.f32.mrf.mxu0
  %v1038 = vadd.f32 %v867, %v1037
  %v1039 = vpop.f32.mrf.mxu0
  %1040 = vmatprep.mubr.bf16.mxu0 0
  %1041 = vmatmul.mubr.bf16.gmra.mxu0 %v745
  %v1042 = vpop.f32.mrf.mxu0
  %v1043 = vadd.f32 %v872, %v1042
  %v1044 = vpop.f32.mrf.mxu0
  %v1045 = vpop.f32.mrf.mxu0
  %v1046 = vadd.f32 %v875, %v1045
  %v1047 = vpop.f32.mrf.mxu0
  %1048 = vmatprep.mubr.bf16.mxu0 0
  %1049 = vmatmul.mubr.bf16.gmra.mxu0 %v747
  %v1050 = vpop.f32.mrf.mxu0
  %v1051 = vadd.f32 %v880, %v1050
  %v1052 = vpop.f32.mrf.mxu0
  %v1053 = vpop.f32.mrf.mxu0
  %v1054 = vadd.f32 %v883, %v1053
  %v1055 = vpop.f32.mrf.mxu0
  %1056 = vmatprep.mubr.bf16.mxu0 0
  %1057 = vmatmul.mubr.bf16.gmra.mxu0 %v749
  %v1058 = vpop.f32.mrf.mxu0
  %v1059 = vadd.f32 %v888, %v1058
  %v1060 = vpop.f32.mrf.mxu0
  %v1061 = vpop.f32.mrf.mxu0
  %v1062 = vadd.f32 %v891, %v1061
  %v1063 = vpop.f32.mrf.mxu0
  %1064 = vmatprep.mubr.bf16.mxu0 0
  %1065 = vmatmul.mubr.bf16.gmra.mxu0 %v751
  %v1066 = vpop.f32.mrf.mxu0
  %v1067 = vadd.f32 %v896, %v1066
  %v1068 = vpop.f32.mrf.mxu0
  %v1069 = vpop.f32.mrf.mxu0
  %v1070 = vadd.f32 %v899, %v1069
  %v1071 = vpop.f32.mrf.mxu0
  %1072 = vmatprep.mubr.bf16.mxu0 0
  %1073 = vmatmul.mubr.bf16.gmra.mxu0 %v753
  %v1074 = vpop.f32.mrf.mxu0
  %v1075 = vadd.f32 %v904, %v1074
  %v1076 = vpop.f32.mrf.mxu0
  %v1077 = vpop.f32.mrf.mxu0
  %v1078 = vadd.f32 %v907, %v1077
  %v1079 = vpop.f32.mrf.mxu0
  %1080 = vmatprep.mubr.bf16.mxu0 0
  %1081 = vmatmul.mubr.bf16.gmra.mxu0 %v755
  %v1082 = vpop.f32.mrf.mxu0
  %v1083 = vadd.f32 %v912, %v1082
  %v1084 = vpop.f32.mrf.mxu0
  %v1085 = vpop.f32.mrf.mxu0
  %v1086 = vadd.f32 %v915, %v1085
  %v1087 = vpop.f32.mrf.mxu0
  %1088 = vmatprep.mubr.bf16.mxu0 0
  %1089 = vmatmul.mubr.bf16.gmra.mxu0 %v757
  %v1090 = vpop.f32.mrf.mxu0
  %v1091 = vadd.f32 %v920, %v1090
  %v1092 = vpop.f32.mrf.mxu0
  %v1093 = vpop.f32.mrf.mxu0
  %v1094 = vadd.f32 %v923, %v1093
  %v1095 = vpop.f32.mrf.mxu0
  %1096 = vdwg.mxu0
  %s1097 = scalar_lea.vmem %s1, 16
  %v1098 = vld [vmem:[%s1097] sm:$0xf]
  %v1099 = vld [vmem:[%s1097 + $0x4] sm:$0x3]
  %v1102 = vunpack.c.l.b16 %v1098
  %v1103 = vunpack.c.l.b16 %v1099
  %v1104 = vpack.c.b16 %v1103, %v1102
  %v1106 = vsel %vm761, %v1104, 0
  %1108 = vmatprep.subr.bf16.mxu0 0
  %1109 = vmatpush1.bf16.msra.mxu0 0
  %1110 = vmatprep.subr.bf16.mxu0 0
  %1111 = vmatpush1.bf16.msra.mxu0 0
  %1112 = vmatprep.subr.bf16.mxu0 0
  %1113 = vmatpush1.bf16.msra.mxu0 0
  %1114 = vmatprep.subr.bf16.mxu0 0
  %1115 = vmatpush1.bf16.msra.mxu0 0
  %1116 = vmatprep.subr.bf16.mxu0 0
  %1117 = vmatpush1.bf16.msra.mxu0 0
  %1118 = vmatprep.subr.bf16.mxu0 0
  %1119 = vmatpush1.bf16.msra.mxu0 0
  %1120 = vmatprep.subr.bf16.mxu0 0
  %1121 = vmatpush1.bf16.msra.mxu0 0
  %1122 = vmatprep.subr.bf16.mxu0 0
  %1123 = vmatpush1.bf16.msra.mxu0 %v1106
  %1124 = vmatprep.subr.bf16.mxu0 0
  %1125 = vmatpush2.bf16.msra.mxu0 0
  %1126 = vmatprep.subr.bf16.mxu0 0
  %1127 = vmatpush2.bf16.msra.mxu0 0
  %1128 = vmatprep.subr.bf16.mxu0 0
  %1129 = vmatpush2.bf16.msra.mxu0 0
  %1130 = vmatprep.subr.bf16.mxu0 0
  %1131 = vmatpush2.bf16.msra.mxu0 0
  %1132 = vmatprep.subr.bf16.mxu0 0
  %1133 = vmatpush2.bf16.msra.mxu0 0
  %1134 = vmatprep.subr.bf16.mxu0 0
  %1135 = vmatpush2.bf16.msra.mxu0 0
  %1136 = vmatprep.subr.bf16.mxu0 0
  %1137 = vmatpush2.bf16.msra.mxu0 0
  %1138 = vmatprep.subr.bf16.mxu0 0
  %1139 = vmatpush2.bf16.msra.mxu0 0
  %1140 = vmatprep.mubr.bf16.mxu0 0
  %1141 = vmatmul.mubr.bf16.gmra.mxu0 %v731
  %v1142 = vpop.f32.mrf.mxu0
  %v1143 = vadd.f32 0.0, %v1142
  %v1144 = vpop.f32.mrf.mxu0
  %v1145 = vpop.f32.mrf.mxu0
  %v1146 = vadd.f32 0.0, %v1145
  %v1147 = vpop.f32.mrf.mxu0
  %1148 = vmatprep.mubr.bf16.mxu0 0
  %1149 = vmatmul.mubr.bf16.gmra.mxu0 %v733
  %v1150 = vpop.f32.mrf.mxu0
  %v1151 = vadd.f32 0.0, %v1150
  %v1152 = vpop.f32.mrf.mxu0
  %v1153 = vpop.f32.mrf.mxu0
  %v1154 = vadd.f32 0.0, %v1153
  %v1155 = vpop.f32.mrf.mxu0
  %1156 = vmatprep.mubr.bf16.mxu0 0
  %1157 = vmatmul.mubr.bf16.gmra.mxu0 %v735
  %v1158 = vpop.f32.mrf.mxu0
  %v1159 = vadd.f32 0.0, %v1158
  %v1160 = vpop.f32.mrf.mxu0
  %v1161 = vpop.f32.mrf.mxu0
  %v1162 = vadd.f32 0.0, %v1161
  %v1163 = vpop.f32.mrf.mxu0
  %1164 = vmatprep.mubr.bf16.mxu0 0
  %1165 = vmatmul.mubr.bf16.gmra.mxu0 %v737
  %v1166 = vpop.f32.mrf.mxu0
  %v1167 = vadd.f32 0.0, %v1166
  %v1168 = vpop.f32.mrf.mxu0
  %v1169 = vpop.f32.mrf.mxu0
  %v1170 = vadd.f32 0.0, %v1169
  %v1171 = vpop.f32.mrf.mxu0
  %1172 = vmatprep.mubr.bf16.mxu0 0
  %1173 = vmatmul.mubr.bf16.gmra.mxu0 %v739
  %v1174 = vpop.f32.mrf.mxu0
  %v1175 = vadd.f32 0.0, %v1174
  %v1176 = vpop.f32.mrf.mxu0
  %v1177 = vpop.f32.mrf.mxu0
  %v1178 = vadd.f32 0.0, %v1177
  %v1179 = vpop.f32.mrf.mxu0
  %1180 = vmatprep.mubr.bf16.mxu0 0
  %1181 = vmatmul.mubr.bf16.gmra.mxu0 %v741
  %v1182 = vpop.f32.mrf.mxu0
  %v1183 = vadd.f32 0.0, %v1182
  %v1184 = vpop.f32.mrf.mxu0
  %v1185 = vpop.f32.mrf.mxu0
  %v1186 = vadd.f32 0.0, %v1185
  %v1187 = vpop.f32.mrf.mxu0
  %1188 = vmatprep.mubr.bf16.mxu0 0
  %1189 = vmatmul.mubr.bf16.gmra.mxu0 %v743
  %v1190 = vpop.f32.mrf.mxu0
  %v1191 = vadd.f32 0.0, %v1190
  %v1192 = vpop.f32.mrf.mxu0
  %v1193 = vpop.f32.mrf.mxu0
  %v1194 = vadd.f32 0.0, %v1193
  %v1195 = vpop.f32.mrf.mxu0
  %1196 = vmatprep.mubr.bf16.mxu0 0
  %1197 = vmatmul.mubr.bf16.gmra.mxu0 %v745
  %v1198 = vpop.f32.mrf.mxu0
  %v1199 = vadd.f32 0.0, %v1198
  %v1200 = vpop.f32.mrf.mxu0
  %v1201 = vpop.f32.mrf.mxu0
  %v1202 = vadd.f32 0.0, %v1201
  %v1203 = vpop.f32.mrf.mxu0
  %1204 = vmatprep.mubr.bf16.mxu0 0
  %1205 = vmatmul.mubr.bf16.gmra.mxu0 %v747
  %v1206 = vpop.f32.mrf.mxu0
  %v1207 = vadd.f32 0.0, %v1206
  %v1208 = vpop.f32.mrf.mxu0
  %v1209 = vpop.f32.mrf.mxu0
  %v1210 = vadd.f32 0.0, %v1209
  %v1211 = vpop.f32.mrf.mxu0
  %1212 = vmatprep.mubr.bf16.mxu0 0
  %1213 = vmatmul.mubr.bf16.gmra.mxu0 %v749
  %v1214 = vpop.f32.mrf.mxu0
  %v1215 = vadd.f32 0.0, %v1214
  %v1216 = vpop.f32.mrf.mxu0
  %v1217 = vpop.f32.mrf.mxu0
  %v1218 = vadd.f32 0.0, %v1217
  %v1219 = vpop.f32.mrf.mxu0
  %1220 = vmatprep.mubr.bf16.mxu0 0
  %1221 = vmatmul.mubr.bf16.gmra.mxu0 %v751
  %v1222 = vpop.f32.mrf.mxu0
  %v1223 = vadd.f32 0.0, %v1222
  %v1224 = vpop.f32.mrf.mxu0
  %v1225 = vpop.f32.mrf.mxu0
  %v1226 = vadd.f32 0.0, %v1225
  %v1227 = vpop.f32.mrf.mxu0
  %1228 = vmatprep.mubr.bf16.mxu0 0
  %1229 = vmatmul.mubr.bf16.gmra.mxu0 %v753
  %v1230 = vpop.f32.mrf.mxu0
  %v1231 = vadd.f32 0.0, %v1230
  %v1232 = vpop.f32.mrf.mxu0
  %v1233 = vpop.f32.mrf.mxu0
  %v1234 = vadd.f32 0.0, %v1233
  %v1235 = vpop.f32.mrf.mxu0
  %1236 = vmatprep.mubr.bf16.mxu0 0
  %1237 = vmatmul.mubr.bf16.gmra.mxu0 %v755
  %v1238 = vpop.f32.mrf.mxu0
  %v1239 = vadd.f32 0.0, %v1238
  %v1240 = vpop.f32.mrf.mxu0
  %v1241 = vpop.f32.mrf.mxu0
  %v1242 = vadd.f32 0.0, %v1241
  %v1243 = vpop.f32.mrf.mxu0
  %1244 = vmatprep.mubr.bf16.mxu0 0
  %1245 = vmatmul.mubr.bf16.gmra.mxu0 %v757
  %v1246 = vpop.f32.mrf.mxu0
  %v1247 = vadd.f32 0.0, %v1246
  %v1248 = vpop.f32.mrf.mxu0
  %v1249 = vpop.f32.mrf.mxu0
  %v1250 = vadd.f32 0.0, %v1249
  %v1251 = vpop.f32.mrf.mxu0
  %1252 = vmatprep.mubr.bf16.mxu0 0
  %1253 = vmatmul.mubr.bf16.gmra.mxu0 %v759
  %v1254 = vpop.f32.mrf.mxu0
  %v1255 = vadd.f32 0.0, %v1254
  %v1256 = vpop.f32.mrf.mxu0
  %v1257 = vpop.f32.mrf.mxu0
  %v1258 = vadd.f32 0.0, %v1257
  %v1259 = vpop.f32.mrf.mxu0
  %1260 = vmatprep.mubr.bf16.mxu0 0
  %1261 = vmatmul.mubr.bf16.gmra.mxu0 %v931
  %v1262 = vpop.f32.mrf.mxu0
  %v1263 = vadd.f32 0.0, %v1262
  %v1264 = vpop.f32.mrf.mxu0
  %v1265 = vpop.f32.mrf.mxu0
  %v1266 = vadd.f32 0.0, %v1265
  %v1267 = vpop.f32.mrf.mxu0
  %1268 = vdwg.mxu0
  %v1269 = vadd.f32 %v971, %v1143
  %v1270 = vadd.f32 %v974, %v1146
  %v1271 = vadd.f32 %v979, %v1151
  %v1272 = vadd.f32 %v982, %v1154
  %v1273 = vadd.f32 %v987, %v1159
  %v1274 = vadd.f32 %v990, %v1162
  %v1275 = vadd.f32 %v995, %v1167
  %v1276 = vadd.f32 %v998, %v1170
  %v1277 = vadd.f32 %v1003, %v1175
  %v1278 = vadd.f32 %v1006, %v1178
  %v1279 = vadd.f32 %v1011, %v1183
  %v1280 = vadd.f32 %v1014, %v1186
  %v1281 = vadd.f32 %v1019, %v1191
  %v1282 = vadd.f32 %v1022, %v1194
  %v1283 = vadd.f32 %v1027, %v1199
  %v1284 = vadd.f32 %v1030, %v1202
  %v1285 = vadd.f32 %v1035, %v1207
  %v1286 = vadd.f32 %v1038, %v1210
  %v1287 = vadd.f32 %v1043, %v1215
  %v1288 = vadd.f32 %v1046, %v1218
  %v1289 = vadd.f32 %v1051, %v1223
  %v1290 = vadd.f32 %v1054, %v1226
  %v1291 = vadd.f32 %v1059, %v1231
  %v1292 = vadd.f32 %v1062, %v1234
  %v1293 = vadd.f32 %v1067, %v1239
  %v1294 = vadd.f32 %v1070, %v1242
  %v1295 = vadd.f32 %v1075, %v1247
  %v1296 = vadd.f32 %v1078, %v1250
  %v1297 = vadd.f32 %v1083, %v1255
  %v1298 = vadd.f32 %v1086, %v1258
  %v1299 = vadd.f32 %v1091, %v1263
  %v1300 = vadd.f32 %v1094, %v1266
  %v1301 = vsel %vm627, %v1269, 0.0
  %v1302 = vsel %vm627, %v1270, 0.0
  %v1303 = vadd.f32 %v1301, %v1302
  %v1304 = vsel %vm627, %v1271, 0.0
  %v1305 = vadd.f32 %v1303, %v1304
  %v1306 = vsel %vm627, %v1272, 0.0
  %v1307 = vadd.f32 %v1305, %v1306
  %v1308 = vsel %vm627, %v1273, 0.0
  %v1309 = vadd.f32 %v1307, %v1308
  %v1310 = vsel %vm627, %v1274, 0.0
  %v1311 = vadd.f32 %v1309, %v1310
  %v1312 = vsel %vm627, %v1275, 0.0
  %v1313 = vadd.f32 %v1311, %v1312
  %v1314 = vsel %vm627, %v1276, 0.0
  %v1315 = vadd.f32 %v1313, %v1314
  %v1316 = vsel %vm627, %v1277, 0.0
  %v1317 = vadd.f32 %v1315, %v1316
  %v1318 = vsel %vm627, %v1278, 0.0
  %v1319 = vadd.f32 %v1317, %v1318
  %v1320 = vsel %vm627, %v1279, 0.0
  %v1321 = vadd.f32 %v1319, %v1320
  %v1322 = vsel %vm627, %v1280, 0.0
  %v1323 = vadd.f32 %v1321, %v1322
  %v1324 = vsel %vm627, %v1281, 0.0
  %v1325 = vadd.f32 %v1323, %v1324
  %v1326 = vsel %vm627, %v1282, 0.0
  %v1327 = vadd.f32 %v1325, %v1326
  %v1328 = vsel %vm627, %v1283, 0.0
  %v1329 = vadd.f32 %v1327, %v1328
  %v1330 = vsel %vm627, %v1284, 0.0
  %v1331 = vadd.f32 %v1329, %v1330
  %v1332 = vsel %vm627, %v1285, 0.0
  %v1333 = vadd.f32 %v1331, %v1332
  %v1334 = vsel %vm627, %v1286, 0.0
  %v1335 = vadd.f32 %v1333, %v1334
  %v1336 = vsel %vm627, %v1287, 0.0
  %v1337 = vadd.f32 %v1335, %v1336
  %v1338 = vsel %vm627, %v1288, 0.0
  %v1339 = vadd.f32 %v1337, %v1338
  %v1340 = vsel %vm627, %v1289, 0.0
  %v1341 = vadd.f32 %v1339, %v1340
  %v1342 = vsel %vm627, %v1290, 0.0
  %v1343 = vadd.f32 %v1341, %v1342
  %v1344 = vsel %vm627, %v1291, 0.0
  %v1345 = vadd.f32 %v1343, %v1344
  %v1346 = vsel %vm627, %v1292, 0.0
  %v1347 = vadd.f32 %v1345, %v1346
  %v1348 = vsel %vm627, %v1293, 0.0
  %v1349 = vadd.f32 %v1347, %v1348
  %v1350 = vsel %vm627, %v1294, 0.0
  %v1351 = vadd.f32 %v1349, %v1350
  %v1352 = vsel %vm627, %v1295, 0.0
  %v1353 = vadd.f32 %v1351, %v1352
  %v1354 = vsel %vm627, %v1296, 0.0
  %v1355 = vadd.f32 %v1353, %v1354
  %v1356 = vsel %vm627, %v1297, 0.0
  %v1357 = vadd.f32 %v1355, %v1356
  %v1358 = vsel %vm627, %v1298, 0.0
  %v1359 = vadd.f32 %v1357, %v1358
  %v1360 = vsel %vm627, %v1299, 0.0
  %v1361 = vadd.f32 %v1359, %v1360
  %v1362 = vsel %vm627, %v1300, 0.0
  %v1363 = vadd.f32 %v1361, %v1362
  %v1364 = vrot.slane %v1363, 4
  %v1365 = vadd.f32 %v1363, %v1364
  %v1366 = vrot.slane %v1365, 2
  %v1367 = vadd.f32 %v1365, %v1366
  %v1368 = vrot.slane %v1367, 1
  %v1369 = vadd.f32 %v1367, %v1368
  %v1370 = vadd.f32 %v1369, 0.0
  %v1371 = vmul.f32 %v1269, %v1269
  %v1372 = vmul.f32 %v1270, %v1270
  %v1373 = vmul.f32 %v1271, %v1271
  %v1374 = vmul.f32 %v1272, %v1272
  %v1375 = vmul.f32 %v1273, %v1273
  %v1376 = vmul.f32 %v1274, %v1274
  %v1377 = vmul.f32 %v1275, %v1275
  %v1378 = vmul.f32 %v1276, %v1276
  %v1379 = vmul.f32 %v1277, %v1277
  %v1380 = vmul.f32 %v1278, %v1278
  %v1381 = vmul.f32 %v1279, %v1279
  %v1382 = vmul.f32 %v1280, %v1280
  %v1383 = vmul.f32 %v1281, %v1281
  %v1384 = vmul.f32 %v1282, %v1282
  %v1385 = vmul.f32 %v1283, %v1283
  %v1386 = vmul.f32 %v1284, %v1284
  %v1387 = vmul.f32 %v1285, %v1285
  %v1388 = vmul.f32 %v1286, %v1286
  %v1389 = vmul.f32 %v1287, %v1287
  %v1390 = vmul.f32 %v1288, %v1288
  %v1391 = vmul.f32 %v1289, %v1289
  %v1392 = vmul.f32 %v1290, %v1290
  %v1393 = vmul.f32 %v1291, %v1291
  %v1394 = vmul.f32 %v1292, %v1292
  %v1395 = vmul.f32 %v1293, %v1293
  %v1396 = vmul.f32 %v1294, %v1294
  %v1397 = vmul.f32 %v1295, %v1295
  %v1398 = vmul.f32 %v1296, %v1296
  %v1399 = vmul.f32 %v1297, %v1297
  %v1400 = vmul.f32 %v1298, %v1298
  %v1401 = vmul.f32 %v1299, %v1299
  %v1402 = vmul.f32 %v1300, %v1300
  %v1403 = vsel %vm627, %v1371, 0.0
  %v1404 = vsel %vm627, %v1372, 0.0
  %v1405 = vadd.f32 %v1403, %v1404
  %v1406 = vsel %vm627, %v1373, 0.0
  %v1407 = vadd.f32 %v1405, %v1406
  %v1408 = vsel %vm627, %v1374, 0.0
  %v1409 = vadd.f32 %v1407, %v1408
  %v1410 = vsel %vm627, %v1375, 0.0
  %v1411 = vadd.f32 %v1409, %v1410
  %v1412 = vsel %vm627, %v1376, 0.0
  %v1413 = vadd.f32 %v1411, %v1412
  %v1414 = vsel %vm627, %v1377, 0.0
  %v1415 = vadd.f32 %v1413, %v1414
  %v1416 = vsel %vm627, %v1378, 0.0
  %v1417 = vadd.f32 %v1415, %v1416
  %v1418 = vsel %vm627, %v1379, 0.0
  %v1419 = vadd.f32 %v1417, %v1418
  %v1420 = vsel %vm627, %v1380, 0.0
  %v1421 = vadd.f32 %v1419, %v1420
  %v1422 = vsel %vm627, %v1381, 0.0
  %v1423 = vadd.f32 %v1421, %v1422
  %v1424 = vsel %vm627, %v1382, 0.0
  %v1425 = vadd.f32 %v1423, %v1424
  %v1426 = vsel %vm627, %v1383, 0.0
  %v1427 = vadd.f32 %v1425, %v1426
  %v1428 = vsel %vm627, %v1384, 0.0
  %v1429 = vadd.f32 %v1427, %v1428
  %v1430 = vsel %vm627, %v1385, 0.0
  %v1431 = vadd.f32 %v1429, %v1430
  %v1432 = vsel %vm627, %v1386, 0.0
  %v1433 = vadd.f32 %v1431, %v1432
  %v1434 = vsel %vm627, %v1387, 0.0
  %v1435 = vadd.f32 %v1433, %v1434
  %v1436 = vsel %vm627, %v1388, 0.0
  %v1437 = vadd.f32 %v1435, %v1436
  %v1438 = vsel %vm627, %v1389, 0.0
  %v1439 = vadd.f32 %v1437, %v1438
  %v1440 = vsel %vm627, %v1390, 0.0
  %v1441 = vadd.f32 %v1439, %v1440
  %v1442 = vsel %vm627, %v1391, 0.0
  %v1443 = vadd.f32 %v1441, %v1442
  %v1444 = vsel %vm627, %v1392, 0.0
  %v1445 = vadd.f32 %v1443, %v1444
  %v1446 = vsel %vm627, %v1393, 0.0
  %v1447 = vadd.f32 %v1445, %v1446
  %v1448 = vsel %vm627, %v1394, 0.0
  %v1449 = vadd.f32 %v1447, %v1448
  %v1450 = vsel %vm627, %v1395, 0.0
  %v1451 = vadd.f32 %v1449, %v1450
  %v1452 = vsel %vm627, %v1396, 0.0
  %v1453 = vadd.f32 %v1451, %v1452
  %v1454 = vsel %vm627, %v1397, 0.0
  %v1455 = vadd.f32 %v1453, %v1454
  %v1456 = vsel %vm627, %v1398, 0.0
  %v1457 = vadd.f32 %v1455, %v1456
  %v1458 = vsel %vm627, %v1399, 0.0
  %v1459 = vadd.f32 %v1457, %v1458
  %v1460 = vsel %vm627, %v1400, 0.0
  %v1461 = vadd.f32 %v1459, %v1460
  %v1462 = vsel %vm627, %v1401, 0.0
  %v1463 = vadd.f32 %v1461, %v1462
  %v1464 = vsel %vm627, %v1402, 0.0
  %v1465 = vadd.f32 %v1463, %v1464
  %v1466 = vrot.slane %v1465, 4
  %v1467 = vadd.f32 %v1465, %v1466
  %v1468 = vrot.slane %v1467, 2
  %v1469 = vadd.f32 %v1467, %v1468
  %v1470 = vrot.slane %v1469, 1
  %v1471 = vadd.f32 %v1469, %v1470
  %v1472 = vadd.f32 %v1471, 0.0
  %1473 = vxpose.xlu0.b32.start [1/16] %v1269, 128
  %1474 = vxpose.xlu0.b32.cont [2/16] %v1270, 128
  %1475 = vxpose.xlu0.b32.cont [3/16] %v1271, 128
  %1476 = vxpose.xlu0.b32.cont [4/16] %v1272, 128
  %1477 = vxpose.xlu0.b32.cont [5/16] %v1273, 128
  %1478 = vxpose.xlu0.b32.cont [6/16] %v1274, 128
  %1479 = vxpose.xlu0.b32.cont [7/16] %v1275, 128
  %1480 = vxpose.xlu0.b32.cont [8/16] %v1276, 128
  %1481 = vxpose.xlu0.b32.cont [9/16] %v1277, 128
  %1482 = vxpose.xlu0.b32.cont [10/16] %v1278, 128
  %1483 = vxpose.xlu0.b32.cont [11/16] %v1279, 128
  %1484 = vxpose.xlu0.b32.cont [12/16] %v1280, 128
  %1485 = vxpose.xlu0.b32.cont [13/16] %v1281, 128
  %1486 = vxpose.xlu0.b32.cont [14/16] %v1282, 128
  %1487 = vxpose.xlu0.b32.cont [15/16] %v1283, 128
  %1488 = vxpose.xlu0.b32.end [16/16] %v1284, 128
  %v1489 = vpop.trf.xlu0
  %v1490 = vpop.trf.xlu0
  %v1491 = vpop.trf.xlu0
  %v1492 = vpop.trf.xlu0
  %v1493 = vpop.trf.xlu0
  %v1494 = vpop.trf.xlu0
  %v1495 = vpop.trf.xlu0
  %v1496 = vpop.trf.xlu0
  %v1497 = vpop.trf.xlu0
  %v1498 = vpop.trf.xlu0
  %v1499 = vpop.trf.xlu0
  %v1500 = vpop.trf.xlu0
  %v1501 = vpop.trf.xlu0
  %v1502 = vpop.trf.xlu0
  %v1503 = vpop.trf.xlu0
  %v1504 = vpop.trf.xlu0
  %1505 = vxpose.xlu0.b32.start [1/16] %v1285, 128
  %1506 = vxpose.xlu0.b32.cont [2/16] %v1286, 128
  %1507 = vxpose.xlu0.b32.cont [3/16] %v1287, 128
  %1508 = vxpose.xlu0.b32.cont [4/16] %v1288, 128
  %1509 = vxpose.xlu0.b32.cont [5/16] %v1289, 128
  %1510 = vxpose.xlu0.b32.cont [6/16] %v1290, 128
  %1511 = vxpose.xlu0.b32.cont [7/16] %v1291, 128
  %1512 = vxpose.xlu0.b32.cont [8/16] %v1292, 128
  %1513 = vxpose.xlu0.b32.cont [9/16] %v1293, 128
  %1514 = vxpose.xlu0.b32.cont [10/16] %v1294, 128
  %1515 = vxpose.xlu0.b32.cont [11/16] %v1295, 128
  %1516 = vxpose.xlu0.b32.cont [12/16] %v1296, 128
  %1517 = vxpose.xlu0.b32.cont [13/16] %v1297, 128
  %1518 = vxpose.xlu0.b32.cont [14/16] %v1298, 128
  %1519 = vxpose.xlu0.b32.cont [15/16] %v1299, 128
  %1520 = vxpose.xlu0.b32.end [16/16] %v1300, 128
  %v1521 = vpop.trf.xlu0
  %v1522 = vpop.trf.xlu0
  %v1523 = vpop.trf.xlu0
  %v1524 = vpop.trf.xlu0
  %v1525 = vpop.trf.xlu0
  %v1526 = vpop.trf.xlu0
  %v1527 = vpop.trf.xlu0
  %v1528 = vpop.trf.xlu0
  %v1529 = vpop.trf.xlu0
  %v1530 = vpop.trf.xlu0
  %v1531 = vpop.trf.xlu0
  %v1532 = vpop.trf.xlu0
  %v1533 = vpop.trf.xlu0
  %v1534 = vpop.trf.xlu0
  %v1535 = vpop.trf.xlu0
  %v1536 = vpop.trf.xlu0
  %v1537 = vpack.c.bf16 %v1489, %v1489
  %v1538 = vpack.c.bf16 %v1521, %v1521
  %v1541 = vcombine.low %v1537, %v1538
  %v1543 = vunpack.c.l.s4 1983009808
  %v1544 = vunpack.c.0.s8 %v1543
  %v1545 = vlaneseq
  %v1546 = vshrl.u32 %v1545, 7
  %v1547 = vsub.s32 %v1544, %v1546
  %v1548 = vrot.slane %v1541, %v1547
  %1550 = vst [vmem:[%s2] sm:$0xf] %v1548
  %s1551 = scalar_lea.vmem %s0, 8
  %v1552 = vld [vmem:[%s1551] sm:$0xff]
  %v1554 = vcombine.high %v1552, %v1552
  %1556 = vxpose.xlu0.b32.start [1/16] %v1552, 128
  %1557 = vxpose.xlu0.b32.cont [2/16] 0.0, 128
  %1558 = vxpose.xlu0.b32.cont [3/16] 0.0, 128
  %1559 = vxpose.xlu0.b32.cont [4/16] 0.0, 128
  %1560 = vxpose.xlu0.b32.cont [5/16] 0.0, 128
  %1561 = vxpose.xlu0.b32.cont [6/16] 0.0, 128
  %1562 = vxpose.xlu0.b32.cont [7/16] 0.0, 128
  %1563 = vxpose.xlu0.b32.cont [8/16] 0.0, 128
  %1564 = vxpose.xlu0.b32.cont [9/16] 0.0, 128
  %1565 = vxpose.xlu0.b32.cont [10/16] 0.0, 128
  %1566 = vxpose.xlu0.b32.cont [11/16] 0.0, 128
  %1567 = vxpose.xlu0.b32.cont [12/16] 0.0, 128
  %1568 = vxpose.xlu0.b32.cont [13/16] 0.0, 128
  %1569 = vxpose.xlu0.b32.cont [14/16] 0.0, 128
  %1570 = vxpose.xlu0.b32.cont [15/16] 0.0, 128
  %1571 = vxpose.xlu0.b32.end [16/16] 0.0, 128
  %v1572 = vpop.trf.xlu0
  %v1573 = vpop.trf.xlu0
  %v1574 = vpop.trf.xlu0
  %v1575 = vpop.trf.xlu0
  %v1576 = vpop.trf.xlu0
  %v1577 = vpop.trf.xlu0
  %v1578 = vpop.trf.xlu0
  %v1579 = vpop.trf.xlu0
  %v1580 = vpop.trf.xlu0
  %v1581 = vpop.trf.xlu0
  %v1582 = vpop.trf.xlu0
  %v1583 = vpop.trf.xlu0
  %v1584 = vpop.trf.xlu0
  %v1585 = vpop.trf.xlu0
  %v1586 = vpop.trf.xlu0
  %v1587 = vpop.trf.xlu0
  %1588 = vxpose.xlu0.b32.start [1/16] %v1554, 128
  %1589 = vxpose.xlu0.b32.cont [2/16] 0.0, 128
  %1590 = vxpose.xlu0.b32.cont [3/16] 0.0, 128
  %1591 = vxpose.xlu0.b32.cont [4/16] 0.0, 128
  %1592 = vxpose.xlu0.b32.cont [5/16] 0.0, 128
  %1593 = vxpose.xlu0.b32.cont [6/16] 0.0, 128
  %1594 = vxpose.xlu0.b32.cont [7/16] 0.0, 128
  %1595 = vxpose.xlu0.b32.cont [8/16] 0.0, 128
  %1596 = vxpose.xlu0.b32.cont [9/16] 0.0, 128
  %1597 = vxpose.xlu0.b32.cont [10/16] 0.0, 128
  %1598 = vxpose.xlu0.b32.cont [11/16] 0.0, 128
  %1599 = vxpose.xlu0.b32.cont [12/16] 0.0, 128
  %1600 = vxpose.xlu0.b32.cont [13/16] 0.0, 128
  %1601 = vxpose.xlu0.b32.cont [14/16] 0.0, 128
  %1602 = vxpose.xlu0.b32.cont [15/16] 0.0, 128
  %1603 = vxpose.xlu0.b32.end [16/16] 0.0, 128
  %v1604 = vpop.trf.xlu0
  %v1605 = vpop.trf.xlu0
  %v1606 = vpop.trf.xlu0
  %v1607 = vpop.trf.xlu0
  %v1608 = vpop.trf.xlu0
  %v1609 = vpop.trf.xlu0
  %v1610 = vpop.trf.xlu0
  %v1611 = vpop.trf.xlu0
  %v1612 = vpop.trf.xlu0
  %v1613 = vpop.trf.xlu0
  %v1614 = vpop.trf.xlu0
  %v1615 = vpop.trf.xlu0
  %v1616 = vpop.trf.xlu0
  %v1617 = vpop.trf.xlu0
  %v1618 = vpop.trf.xlu0
  %v1619 = vpop.trf.xlu0
  %v1620 = vpack.c.bf16 %v1573, %v1572
  %v1621 = vpack.c.bf16 %v1575, %v1574
  %v1622 = vpack.c.bf16 %v1577, %v1576
  %v1623 = vpack.c.bf16 %v1579, %v1578
  %v1624 = vpack.c.bf16 %v1581, %v1580
  %v1625 = vpack.c.bf16 %v1583, %v1582
  %v1626 = vpack.c.bf16 %v1585, %v1584
  %v1627 = vpack.c.bf16 %v1587, %v1586
  %v1628 = vpack.c.bf16 %v1605, %v1604
  %v1629 = vpack.c.bf16 %v1607, %v1606
  %v1630 = vpack.c.bf16 %v1609, %v1608
  %v1631 = vpack.c.bf16 %v1611, %v1610
  %v1632 = vpack.c.bf16 %v1613, %v1612
  %v1633 = vpack.c.bf16 %v1615, %v1614
  %v1634 = vpack.c.bf16 %v1617, %v1616
  %v1635 = vpack.c.bf16 %v1619, %v1618
  %v1637 = vshrl.u32 %v1620, 16
  %v1639 = vrot.slane %v1637, 7
  %v1640 = vshll.u32 %v1620, 16
  %v1642 = vor.u32 %v1639, %v1640
  %v1644 = vshrl.u32 %v1621, 16
  %v1646 = vrot.slane %v1644, 7
  %v1647 = vshll.u32 %v1621, 16
  %v1649 = vor.u32 %v1646, %v1647
  %v1651 = vshrl.u32 %v1622, 16
  %v1653 = vrot.slane %v1651, 7
  %v1654 = vshll.u32 %v1622, 16
  %v1656 = vor.u32 %v1653, %v1654
  %v1658 = vshrl.u32 %v1623, 16
  %v1660 = vrot.slane %v1658, 7
  %v1661 = vshll.u32 %v1623, 16
  %v1663 = vor.u32 %v1660, %v1661
  %v1665 = vshrl.u32 %v1624, 16
  %v1667 = vrot.slane %v1665, 7
  %v1668 = vshll.u32 %v1624, 16
  %v1670 = vor.u32 %v1667, %v1668
  %v1672 = vshrl.u32 %v1625, 16
  %v1674 = vrot.slane %v1672, 7
  %v1675 = vshll.u32 %v1625, 16
  %v1677 = vor.u32 %v1674, %v1675
  %v1679 = vshrl.u32 %v1626, 16
  %v1681 = vrot.slane %v1679, 7
  %v1682 = vshll.u32 %v1626, 16
  %v1684 = vor.u32 %v1681, %v1682
  %v1686 = vshrl.u32 %v1627, 16
  %v1688 = vrot.slane %v1686, 7
  %v1689 = vshll.u32 %v1627, 16
  %v1691 = vor.u32 %v1688, %v1689
  %v1693 = vshrl.u32 %v1628, 16
  %v1695 = vrot.slane %v1693, 7
  %v1696 = vshll.u32 %v1628, 16
  %v1698 = vor.u32 %v1695, %v1696
  %v1700 = vshrl.u32 %v1629, 16
  %v1702 = vrot.slane %v1700, 7
  %v1703 = vshll.u32 %v1629, 16
  %v1705 = vor.u32 %v1702, %v1703
  %v1707 = vshrl.u32 %v1630, 16
  %v1709 = vrot.slane %v1707, 7
  %v1710 = vshll.u32 %v1630, 16
  %v1712 = vor.u32 %v1709, %v1710
  %v1714 = vshrl.u32 %v1631, 16
  %v1716 = vrot.slane %v1714, 7
  %v1717 = vshll.u32 %v1631, 16
  %v1719 = vor.u32 %v1716, %v1717
  %v1721 = vshrl.u32 %v1632, 16
  %v1723 = vrot.slane %v1721, 7
  %v1724 = vshll.u32 %v1632, 16
  %v1726 = vor.u32 %v1723, %v1724
  %v1728 = vshrl.u32 %v1633, 16
  %v1730 = vrot.slane %v1728, 7
  %v1731 = vshll.u32 %v1633, 16
  %v1733 = vor.u32 %v1730, %v1731
  %v1735 = vshrl.u32 %v1634, 16
  %v1737 = vrot.slane %v1735, 7
  %v1738 = vshll.u32 %v1634, 16
  %v1740 = vor.u32 %v1737, %v1738
  %v1742 = vshrl.u32 %v1635, 16
  %v1744 = vrot.slane %v1742, 7
  %v1745 = vshll.u32 %v1635, 16
  %v1747 = vor.u32 %v1744, %v1745
  %v1780 = vsel %vm254, 0, %v1642
  %v1781 = vsel %vm254, 0, %v1649
  %v1782 = vsel %vm254, 0, %v1656
  %v1783 = vsel %vm254, 0, %v1663
  %v1784 = vsel %vm254, 0, %v1670
  %v1785 = vsel %vm254, 0, %v1677
  %v1786 = vsel %vm254, 0, %v1684
  %v1787 = vsel %vm254, 0, %v1691
  %v1788 = vsel %vm254, 0, %v1698
  %v1789 = vsel %vm254, 0, %v1705
  %v1790 = vsel %vm254, 0, %v1712
  %v1791 = vsel %vm254, 0, %v1719
  %v1792 = vsel %vm254, 0, %v1726
  %v1793 = vsel %vm254, 0, %v1733
  %v1794 = vsel %vm254, 0, %v1740
  %v1795 = vsel %vm254, 0, %v1747
  %v1796 = vsel %vm254, %v1639, 0
  %v1797 = vsel %vm254, %v1646, 0
  %v1798 = vsel %vm254, %v1653, 0
  %v1799 = vsel %vm254, %v1660, 0
  %v1800 = vsel %vm254, %v1667, 0
  %v1801 = vsel %vm254, %v1674, 0
  %v1802 = vsel %vm254, %v1681, 0
  %v1803 = vsel %vm254, %v1688, 0
  %v1804 = vsel %vm254, %v1695, 0
  %v1805 = vsel %vm254, %v1702, 0
  %v1806 = vsel %vm254, %v1709, 0
  %v1807 = vsel %vm254, %v1716, 0
  %v1808 = vsel %vm254, %v1723, 0
  %v1809 = vsel %vm254, %v1730, 0
  %v1810 = vsel %vm254, %v1737, 0
  %v1811 = vsel %vm254, %v1744, 0
  %v1813 = vshrl.u32 %v1780, 16
  %v1815 = vshll.u32 %v1780, 16
  %v1817 = vrot.slane %v1815, 1
  %v1818 = vor.u32 %v1813, %v1817
  %v1820 = vshll.u32 %v1796, 16
  %v1822 = vrot.slane %v1820, 1
  %v1823 = vsel %vm289, %v1818, %v1822
  %v1825 = vshrl.u32 %v1781, 16
  %v1827 = vshll.u32 %v1781, 16
  %v1829 = vrot.slane %v1827, 1
  %v1830 = vor.u32 %v1825, %v1829
  %v1832 = vshll.u32 %v1797, 16
  %v1834 = vrot.slane %v1832, 1
  %v1835 = vsel %vm289, %v1830, %v1834
  %v1837 = vshrl.u32 %v1782, 16
  %v1839 = vshll.u32 %v1782, 16
  %v1841 = vrot.slane %v1839, 1
  %v1842 = vor.u32 %v1837, %v1841
  %v1844 = vshll.u32 %v1798, 16
  %v1846 = vrot.slane %v1844, 1
  %v1847 = vsel %vm289, %v1842, %v1846
  %v1849 = vshrl.u32 %v1783, 16
  %v1851 = vshll.u32 %v1783, 16
  %v1853 = vrot.slane %v1851, 1
  %v1854 = vor.u32 %v1849, %v1853
  %v1856 = vshll.u32 %v1799, 16
  %v1858 = vrot.slane %v1856, 1
  %v1859 = vsel %vm289, %v1854, %v1858
  %v1861 = vshrl.u32 %v1784, 16
  %v1863 = vshll.u32 %v1784, 16
  %v1865 = vrot.slane %v1863, 1
  %v1866 = vor.u32 %v1861, %v1865
  %v1868 = vshll.u32 %v1800, 16
  %v1870 = vrot.slane %v1868, 1
  %v1871 = vsel %vm289, %v1866, %v1870
  %v1873 = vshrl.u32 %v1785, 16
  %v1875 = vshll.u32 %v1785, 16
  %v1877 = vrot.slane %v1875, 1
  %v1878 = vor.u32 %v1873, %v1877
  %v1880 = vshll.u32 %v1801, 16
  %v1882 = vrot.slane %v1880, 1
  %v1883 = vsel %vm289, %v1878, %v1882
  %v1885 = vshrl.u32 %v1786, 16
  %v1887 = vshll.u32 %v1786, 16
  %v1889 = vrot.slane %v1887, 1
  %v1890 = vor.u32 %v1885, %v1889
  %v1892 = vshll.u32 %v1802, 16
  %v1894 = vrot.slane %v1892, 1
  %v1895 = vsel %vm289, %v1890, %v1894
  %v1897 = vshrl.u32 %v1787, 16
  %v1899 = vshll.u32 %v1787, 16
  %v1901 = vrot.slane %v1899, 1
  %v1902 = vor.u32 %v1897, %v1901
  %v1904 = vshll.u32 %v1803, 16
  %v1906 = vrot.slane %v1904, 1
  %v1907 = vsel %vm289, %v1902, %v1906
  %v1909 = vshrl.u32 %v1788, 16
  %v1911 = vshll.u32 %v1788, 16
  %v1913 = vrot.slane %v1911, 1
  %v1914 = vor.u32 %v1909, %v1913
  %v1916 = vshll.u32 %v1804, 16
  %v1918 = vrot.slane %v1916, 1
  %v1919 = vsel %vm289, %v1914, %v1918
  %v1921 = vshrl.u32 %v1789, 16
  %v1923 = vshll.u32 %v1789, 16
  %v1925 = vrot.slane %v1923, 1
  %v1926 = vor.u32 %v1921, %v1925
  %v1928 = vshll.u32 %v1805, 16
  %v1930 = vrot.slane %v1928, 1
  %v1931 = vsel %vm289, %v1926, %v1930
  %v1933 = vshrl.u32 %v1790, 16
  %v1935 = vshll.u32 %v1790, 16
  %v1937 = vrot.slane %v1935, 1
  %v1938 = vor.u32 %v1933, %v1937
  %v1940 = vshll.u32 %v1806, 16
  %v1942 = vrot.slane %v1940, 1
  %v1943 = vsel %vm289, %v1938, %v1942
  %v1945 = vshrl.u32 %v1791, 16
  %v1947 = vshll.u32 %v1791, 16
  %v1949 = vrot.slane %v1947, 1
  %v1950 = vor.u32 %v1945, %v1949
  %v1952 = vshll.u32 %v1807, 16
  %v1954 = vrot.slane %v1952, 1
  %v1955 = vsel %vm289, %v1950, %v1954
  %v1957 = vshrl.u32 %v1792, 16
  %v1959 = vshll.u32 %v1792, 16
  %v1961 = vrot.slane %v1959, 1
  %v1962 = vor.u32 %v1957, %v1961
  %v1964 = vshll.u32 %v1808, 16
  %v1966 = vrot.slane %v1964, 1
  %v1967 = vsel %vm289, %v1962, %v1966
  %v1969 = vshrl.u32 %v1793, 16
  %v1971 = vshll.u32 %v1793, 16
  %v1973 = vrot.slane %v1971, 1
  %v1974 = vor.u32 %v1969, %v1973
  %v1976 = vshll.u32 %v1809, 16
  %v1978 = vrot.slane %v1976, 1
  %v1979 = vsel %vm289, %v1974, %v1978
  %v1981 = vshrl.u32 %v1794, 16
  %v1983 = vshll.u32 %v1794, 16
  %v1985 = vrot.slane %v1983, 1
  %v1986 = vor.u32 %v1981, %v1985
  %v1988 = vshll.u32 %v1810, 16
  %v1990 = vrot.slane %v1988, 1
  %v1991 = vsel %vm289, %v1986, %v1990
  %v2022 = vrot.slane %v1780, 1
  %v2023 = vrot.slane %v1796, 1
  %v2024 = vsel %vm514, %v2022, %v2023
  %v2025 = vrot.slane %v1781, 1
  %v2026 = vrot.slane %v1797, 1
  %v2027 = vsel %vm514, %v2025, %v2026
  %v2028 = vrot.slane %v1782, 1
  %v2029 = vrot.slane %v1798, 1
  %v2030 = vsel %vm514, %v2028, %v2029
  %v2031 = vrot.slane %v1783, 1
  %v2032 = vrot.slane %v1799, 1
  %v2033 = vsel %vm514, %v2031, %v2032
  %v2034 = vrot.slane %v1784, 1
  %v2035 = vrot.slane %v1800, 1
  %v2036 = vsel %vm514, %v2034, %v2035
  %v2037 = vrot.slane %v1785, 1
  %v2038 = vrot.slane %v1801, 1
  %v2039 = vsel %vm514, %v2037, %v2038
  %v2040 = vrot.slane %v1786, 1
  %v2041 = vrot.slane %v1802, 1
  %v2042 = vsel %vm514, %v2040, %v2041
  %v2043 = vrot.slane %v1787, 1
  %v2044 = vrot.slane %v1803, 1
  %v2045 = vsel %vm514, %v2043, %v2044
  %v2046 = vrot.slane %v1788, 1
  %v2047 = vrot.slane %v1804, 1
  %v2048 = vsel %vm514, %v2046, %v2047
  %v2049 = vrot.slane %v1789, 1
  %v2050 = vrot.slane %v1805, 1
  %v2051 = vsel %vm514, %v2049, %v2050
  %v2052 = vrot.slane %v1790, 1
  %v2053 = vrot.slane %v1806, 1
  %v2054 = vsel %vm514, %v2052, %v2053
  %v2055 = vrot.slane %v1791, 1
  %v2056 = vrot.slane %v1807, 1
  %v2057 = vsel %vm514, %v2055, %v2056
  %v2058 = vrot.slane %v1792, 1
  %v2059 = vrot.slane %v1808, 1
  %v2060 = vsel %vm514, %v2058, %v2059
  %v2061 = vrot.slane %v1793, 1
  %v2062 = vrot.slane %v1809, 1
  %v2063 = vsel %vm514, %v2061, %v2062
  %v2064 = vrot.slane %v1794, 1
  %v2065 = vrot.slane %v1810, 1
  %v2066 = vsel %vm514, %v2064, %v2065
  %2067 = vrot.lane.b32.xlu0 %v1823, 4
  %v2068 = vpop.permute.xlu0 %2067
  %2069 = vrot.lane.b32.xlu0 %v1835, 4
  %v2070 = vpop.permute.xlu0 %2069
  %2071 = vrot.lane.b32.xlu0 %v1847, 4
  %v2072 = vpop.permute.xlu0 %2071
  %2073 = vrot.lane.b32.xlu0 %v1859, 4
  %v2074 = vpop.permute.xlu0 %2073
  %2075 = vrot.lane.b32.xlu0 %v1871, 4
  %v2076 = vpop.permute.xlu0 %2075
  %2077 = vrot.lane.b32.xlu0 %v1883, 4
  %v2078 = vpop.permute.xlu0 %2077
  %2079 = vrot.lane.b32.xlu0 %v1895, 4
  %v2080 = vpop.permute.xlu0 %2079
  %2081 = vrot.lane.b32.xlu0 %v1907, 4
  %v2082 = vpop.permute.xlu0 %2081
  %2083 = vrot.lane.b32.xlu0 %v1919, 4
  %v2084 = vpop.permute.xlu0 %2083
  %2085 = vrot.lane.b32.xlu0 %v1931, 4
  %v2086 = vpop.permute.xlu0 %2085
  %2087 = vrot.lane.b32.xlu0 %v1943, 4
  %v2088 = vpop.permute.xlu0 %2087
  %2089 = vrot.lane.b32.xlu0 %v1955, 4
  %v2090 = vpop.permute.xlu0 %2089
  %2091 = vrot.lane.b32.xlu0 %v1967, 4
  %v2092 = vpop.permute.xlu0 %2091
  %2093 = vrot.lane.b32.xlu0 %v1979, 4
  %v2094 = vpop.permute.xlu0 %2093
  %2095 = vrot.lane.b32.xlu0 %v1991, 4
  %v2096 = vpop.permute.xlu0 %2095
  %2097 = vrot.lane.b32.xlu0 %v2024, 8
  %v2098 = vpop.permute.xlu0 %2097
  %2099 = vrot.lane.b32.xlu0 %v2027, 8
  %v2100 = vpop.permute.xlu0 %2099
  %2101 = vrot.lane.b32.xlu0 %v2030, 8
  %v2102 = vpop.permute.xlu0 %2101
  %2103 = vrot.lane.b32.xlu0 %v2033, 8
  %v2104 = vpop.permute.xlu0 %2103
  %2105 = vrot.lane.b32.xlu0 %v2036, 8
  %v2106 = vpop.permute.xlu0 %2105
  %2107 = vrot.lane.b32.xlu0 %v2039, 8
  %v2108 = vpop.permute.xlu0 %2107
  %2109 = vrot.lane.b32.xlu0 %v2042, 8
  %v2110 = vpop.permute.xlu0 %2109
  %2111 = vrot.lane.b32.xlu0 %v2045, 8
  %v2112 = vpop.permute.xlu0 %2111
  %2113 = vrot.lane.b32.xlu0 %v2048, 8
  %v2114 = vpop.permute.xlu0 %2113
  %2115 = vrot.lane.b32.xlu0 %v2051, 8
  %v2116 = vpop.permute.xlu0 %2115
  %2117 = vrot.lane.b32.xlu0 %v2054, 8
  %v2118 = vpop.permute.xlu0 %2117
  %2119 = vrot.lane.b32.xlu0 %v2057, 8
  %v2120 = vpop.permute.xlu0 %2119
  %2121 = vrot.lane.b32.xlu0 %v2060, 8
  %v2122 = vpop.permute.xlu0 %2121
  %2123 = vrot.lane.b32.xlu0 %v2063, 8
  %v2124 = vpop.permute.xlu0 %2123
  %2125 = vrot.lane.b32.xlu0 %v2066, 8
  %v2126 = vpop.permute.xlu0 %2125
  %v2128 = vsel %vm627, %v1780, %v2068
  %v2130 = vsel %vm627, %v1781, %v2070
  %v2132 = vsel %vm627, %v1782, %v2072
  %v2134 = vsel %vm627, %v1783, %v2074
  %v2136 = vsel %vm627, %v1784, %v2076
  %v2138 = vsel %vm627, %v1785, %v2078
  %v2140 = vsel %vm627, %v1786, %v2080
  %v2142 = vsel %vm627, %v1787, %v2082
  %v2144 = vsel %vm627, %v1788, %v2084
  %v2146 = vsel %vm627, %v1789, %v2086
  %v2148 = vsel %vm627, %v1790, %v2088
  %v2150 = vsel %vm627, %v1791, %v2090
  %v2152 = vsel %vm627, %v1792, %v2092
  %v2154 = vsel %vm627, %v1793, %v2094
  %v2156 = vsel %vm627, %v1794, %v2096
  %v2158 = vsel %vm660, %v2128, %v2098
  %v2160 = vsel %vm660, %v2130, %v2100
  %v2162 = vsel %vm660, %v2132, %v2102
  %v2164 = vsel %vm660, %v2134, %v2104
  %v2166 = vsel %vm660, %v2136, %v2106
  %v2168 = vsel %vm660, %v2138, %v2108
  %v2170 = vsel %vm660, %v2140, %v2110
  %v2172 = vsel %vm660, %v2142, %v2112
  %v2174 = vsel %vm660, %v2144, %v2114
  %v2176 = vsel %vm660, %v2146, %v2116
  %v2178 = vsel %vm660, %v2148, %v2118
  %v2180 = vsel %vm660, %v2150, %v2120
  %v2182 = vsel %vm660, %v2152, %v2122
  %v2184 = vsel %vm660, %v2154, %v2124
  %v2186 = vsel %vm660, %v2156, %v2126
  %v2187 = vld [vmem:[%s1] sm:$0xf]
  %v2188 = vld [vmem:[%s1 + $0x4] sm:$0x3]
  %v2190 = vshrl.u32 %v1795, 16
  %v2192 = vshll.u32 %v1795, 16
  %v2194 = vrot.slane %v2192, 1
  %v2195 = vor.u32 %v2190, %v2194
  %v2197 = vshll.u32 %v1811, 16
  %v2199 = vrot.slane %v2197, 1
  %v2200 = vsel %vm289, %v2195, %v2199
  %v2203 = vrot.slane %v1795, 1
  %v2204 = vrot.slane %v1811, 1
  %v2205 = vsel %vm514, %v2203, %v2204
  %2206 = vrot.lane.b32.xlu0 %v2200, 4
  %v2207 = vpop.permute.xlu0 %2206
  %2208 = vrot.lane.b32.xlu0 %v2205, 8
  %v2209 = vpop.permute.xlu0 %2208
  %v2211 = vsel %vm627, %v1795, %v2207
  %v2213 = vsel %vm660, %v2211, %v2209
  %v2214 = vld [vmem:[%s720] sm:$0xf]
  %v2215 = vld [vmem:[%s720 + $0x4] sm:$0x3]
  %v2218 = vunpack.c.l.b16 %v2214
  %v2219 = vunpack.c.l.b16 %v2215
  %v2220 = vpack.c.b16 %v2219, %v2218
  %v2221 = vsel %vm728, %v2158, 0
  %v2223 = vsel %vm728, %v2160, 0
  %v2225 = vsel %vm728, %v2162, 0
  %v2227 = vsel %vm728, %v2164, 0
  %v2229 = vsel %vm728, %v2166, 0
  %v2231 = vsel %vm728, %v2168, 0
  %v2233 = vsel %vm728, %v2170, 0
  %v2235 = vsel %vm728, %v2172, 0
  %v2237 = vsel %vm728, %v2174, 0
  %v2239 = vsel %vm728, %v2176, 0
  %v2241 = vsel %vm728, %v2178, 0
  %v2243 = vsel %vm728, %v2180, 0
  %v2245 = vsel %vm728, %v2182, 0
  %v2247 = vsel %vm728, %v2184, 0
  %v2249 = vsel %vm728, %v2186, 0
  %v2251 = vsel %vm728, %v2213, 0
  %v2254 = vsel %vm761, %v2220, 0
  %2256 = vmatprep.subr.bf16.mxu0 0
  %2257 = vmatpush1.bf16.msra.mxu0 0
  %2258 = vmatprep.subr.bf16.mxu0 0
  %2259 = vmatpush1.bf16.msra.mxu0 0
  %2260 = vmatprep.subr.bf16.mxu0 0
  %2261 = vmatpush1.bf16.msra.mxu0 0
  %2262 = vmatprep.subr.bf16.mxu0 0
  %2263 = vmatpush1.bf16.msra.mxu0 0
  %2264 = vmatprep.subr.bf16.mxu0 0
  %2265 = vmatpush1.bf16.msra.mxu0 0
  %2266 = vmatprep.subr.bf16.mxu0 0
  %2267 = vmatpush1.bf16.msra.mxu0 0
  %2268 = vmatprep.subr.bf16.mxu0 0
  %2269 = vmatpush1.bf16.msra.mxu0 0
  %2270 = vmatprep.subr.bf16.mxu0 0
  %2271 = vmatpush1.bf16.msra.mxu0 %v2254
  %2272 = vmatprep.subr.bf16.mxu0 0
  %2273 = vmatpush2.bf16.msra.mxu0 0
  %2274 = vmatprep.subr.bf16.mxu0 0
  %2275 = vmatpush2.bf16.msra.mxu0 0
  %2276 = vmatprep.subr.bf16.mxu0 0
  %2277 = vmatpush2.bf16.msra.mxu0 0
  %2278 = vmatprep.subr.bf16.mxu0 0
  %2279 = vmatpush2.bf16.msra.mxu0 0
  %2280 = vmatprep.subr.bf16.mxu0 0
  %2281 = vmatpush2.bf16.msra.mxu0 0
  %2282 = vmatprep.subr.bf16.mxu0 0
  %2283 = vmatpush2.bf16.msra.mxu0 0
  %2284 = vmatprep.subr.bf16.mxu0 0
  %2285 = vmatpush2.bf16.msra.mxu0 0
  %2286 = vmatprep.subr.bf16.mxu0 0
  %2287 = vmatpush2.bf16.msra.mxu0 0
  %2288 = vmatprep.mubr.bf16.mxu0 0
  %2289 = vmatmul.mubr.bf16.gmra.mxu0 %v2221
  %v2290 = vpop.f32.mrf.mxu0
  %v2291 = vadd.f32 0.0, %v2290
  %v2292 = vpop.f32.mrf.mxu0
  %v2293 = vpop.f32.mrf.mxu0
  %v2294 = vadd.f32 0.0, %v2293
  %v2295 = vpop.f32.mrf.mxu0
  %2296 = vmatprep.mubr.bf16.mxu0 0
  %2297 = vmatmul.mubr.bf16.gmra.mxu0 %v2223
  %v2298 = vpop.f32.mrf.mxu0
  %v2299 = vadd.f32 0.0, %v2298
  %v2300 = vpop.f32.mrf.mxu0
  %v2301 = vpop.f32.mrf.mxu0
  %v2302 = vadd.f32 0.0, %v2301
  %v2303 = vpop.f32.mrf.mxu0
  %2304 = vmatprep.mubr.bf16.mxu0 0
  %2305 = vmatmul.mubr.bf16.gmra.mxu0 %v2225
  %v2306 = vpop.f32.mrf.mxu0
  %v2307 = vadd.f32 0.0, %v2306
  %v2308 = vpop.f32.mrf.mxu0
  %v2309 = vpop.f32.mrf.mxu0
  %v2310 = vadd.f32 0.0, %v2309
  %v2311 = vpop.f32.mrf.mxu0
  %2312 = vmatprep.mubr.bf16.mxu0 0
  %2313 = vmatmul.mubr.bf16.gmra.mxu0 %v2227
  %v2314 = vpop.f32.mrf.mxu0
  %v2315 = vadd.f32 0.0, %v2314
  %v2316 = vpop.f32.mrf.mxu0
  %v2317 = vpop.f32.mrf.mxu0
  %v2318 = vadd.f32 0.0, %v2317
  %v2319 = vpop.f32.mrf.mxu0
  %2320 = vmatprep.mubr.bf16.mxu0 0
  %2321 = vmatmul.mubr.bf16.gmra.mxu0 %v2229
  %v2322 = vpop.f32.mrf.mxu0
  %v2323 = vadd.f32 0.0, %v2322
  %v2324 = vpop.f32.mrf.mxu0
  %v2325 = vpop.f32.mrf.mxu0
  %v2326 = vadd.f32 0.0, %v2325
  %v2327 = vpop.f32.mrf.mxu0
  %2328 = vmatprep.mubr.bf16.mxu0 0
  %2329 = vmatmul.mubr.bf16.gmra.mxu0 %v2231
  %v2330 = vpop.f32.mrf.mxu0
  %v2331 = vadd.f32 0.0, %v2330
  %v2332 = vpop.f32.mrf.mxu0
  %v2333 = vpop.f32.mrf.mxu0
  %v2334 = vadd.f32 0.0, %v2333
  %v2335 = vpop.f32.mrf.mxu0
  %2336 = vmatprep.mubr.bf16.mxu0 0
  %2337 = vmatmul.mubr.bf16.gmra.mxu0 %v2233
  %v2338 = vpop.f32.mrf.mxu0
  %v2339 = vadd.f32 0.0, %v2338
  %v2340 = vpop.f32.mrf.mxu0
  %v2341 = vpop.f32.mrf.mxu0
  %v2342 = vadd.f32 0.0, %v2341
  %v2343 = vpop.f32.mrf.mxu0
  %2344 = vmatprep.mubr.bf16.mxu0 0
  %2345 = vmatmul.mubr.bf16.gmra.mxu0 %v2235
  %v2346 = vpop.f32.mrf.mxu0
  %v2347 = vadd.f32 0.0, %v2346
  %v2348 = vpop.f32.mrf.mxu0
  %v2349 = vpop.f32.mrf.mxu0
  %v2350 = vadd.f32 0.0, %v2349
  %v2351 = vpop.f32.mrf.mxu0
  %2352 = vmatprep.mubr.bf16.mxu0 0
  %2353 = vmatmul.mubr.bf16.gmra.mxu0 %v2237
  %v2354 = vpop.f32.mrf.mxu0
  %v2355 = vadd.f32 0.0, %v2354
  %v2356 = vpop.f32.mrf.mxu0
  %v2357 = vpop.f32.mrf.mxu0
  %v2358 = vadd.f32 0.0, %v2357
  %v2359 = vpop.f32.mrf.mxu0
  %2360 = vmatprep.mubr.bf16.mxu0 0
  %2361 = vmatmul.mubr.bf16.gmra.mxu0 %v2239
  %v2362 = vpop.f32.mrf.mxu0
  %v2363 = vadd.f32 0.0, %v2362
  %v2364 = vpop.f32.mrf.mxu0
  %v2365 = vpop.f32.mrf.mxu0
  %v2366 = vadd.f32 0.0, %v2365
  %v2367 = vpop.f32.mrf.mxu0
  %2368 = vmatprep.mubr.bf16.mxu0 0
  %2369 = vmatmul.mubr.bf16.gmra.mxu0 %v2241
  %v2370 = vpop.f32.mrf.mxu0
  %v2371 = vadd.f32 0.0, %v2370
  %v2372 = vpop.f32.mrf.mxu0
  %v2373 = vpop.f32.mrf.mxu0
  %v2374 = vadd.f32 0.0, %v2373
  %v2375 = vpop.f32.mrf.mxu0
  %2376 = vmatprep.mubr.bf16.mxu0 0
  %2377 = vmatmul.mubr.bf16.gmra.mxu0 %v2243
  %v2378 = vpop.f32.mrf.mxu0
  %v2379 = vadd.f32 0.0, %v2378
  %v2380 = vpop.f32.mrf.mxu0
  %v2381 = vpop.f32.mrf.mxu0
  %v2382 = vadd.f32 0.0, %v2381
  %v2383 = vpop.f32.mrf.mxu0
  %2384 = vmatprep.mubr.bf16.mxu0 0
  %2385 = vmatmul.mubr.bf16.gmra.mxu0 %v2245
  %v2386 = vpop.f32.mrf.mxu0
  %v2387 = vadd.f32 0.0, %v2386
  %v2388 = vpop.f32.mrf.mxu0
  %v2389 = vpop.f32.mrf.mxu0
  %v2390 = vadd.f32 0.0, %v2389
  %v2391 = vpop.f32.mrf.mxu0
  %2392 = vmatprep.mubr.bf16.mxu0 0
  %2393 = vmatmul.mubr.bf16.gmra.mxu0 %v2247
  %v2394 = vpop.f32.mrf.mxu0
  %v2395 = vadd.f32 0.0, %v2394
  %v2396 = vpop.f32.mrf.mxu0
  %v2397 = vpop.f32.mrf.mxu0
  %v2398 = vadd.f32 0.0, %v2397
  %v2399 = vpop.f32.mrf.mxu0
  %2400 = vmatprep.mubr.bf16.mxu0 0
  %2401 = vmatmul.mubr.bf16.gmra.mxu0 %v2249
  %v2402 = vpop.f32.mrf.mxu0
  %v2403 = vadd.f32 0.0, %v2402
  %v2404 = vpop.f32.mrf.mxu0
  %v2405 = vpop.f32.mrf.mxu0
  %v2406 = vadd.f32 0.0, %v2405
  %v2407 = vpop.f32.mrf.mxu0
  %2408 = vmatprep.mubr.bf16.mxu0 0
  %2409 = vmatmul.mubr.bf16.gmra.mxu0 %v2251
  %v2410 = vpop.f32.mrf.mxu0
  %v2411 = vadd.f32 0.0, %v2410
  %v2412 = vpop.f32.mrf.mxu0
  %v2413 = vpop.f32.mrf.mxu0
  %v2414 = vadd.f32 0.0, %v2413
  %v2415 = vpop.f32.mrf.mxu0
  %2416 = vdwg.mxu0
  %v2419 = vunpack.c.l.b16 %v2187
  %v2420 = vunpack.c.l.b16 %v2188
  %v2421 = vpack.c.b16 %v2420, %v2419
  %v2423 = vsel %vm761, %v2421, 0
  %2425 = vmatprep.subr.bf16.mxu0 0
  %2426 = vmatpush1.bf16.msra.mxu0 0
  %2427 = vmatprep.subr.bf16.mxu0 0
  %2428 = vmatpush1.bf16.msra.mxu0 0
  %2429 = vmatprep.subr.bf16.mxu0 0
  %2430 = vmatpush1.bf16.msra.mxu0 0
  %2431 = vmatprep.subr.bf16.mxu0 0
  %2432 = vmatpush1.bf16.msra.mxu0 0
  %2433 = vmatprep.subr.bf16.mxu0 0
  %2434 = vmatpush1.bf16.msra.mxu0 0
  %2435 = vmatprep.subr.bf16.mxu0 0
  %2436 = vmatpush1.bf16.msra.mxu0 0
  %2437 = vmatprep.subr.bf16.mxu0 0
  %2438 = vmatpush1.bf16.msra.mxu0 0
  %2439 = vmatprep.subr.bf16.mxu0 0
  %2440 = vmatpush1.bf16.msra.mxu0 %v2423
  %2441 = vmatprep.subr.bf16.mxu0 0
  %2442 = vmatpush2.bf16.msra.mxu0 0
  %2443 = vmatprep.subr.bf16.mxu0 0
  %2444 = vmatpush2.bf16.msra.mxu0 0
  %2445 = vmatprep.subr.bf16.mxu0 0
  %2446 = vmatpush2.bf16.msra.mxu0 0
  %2447 = vmatprep.subr.bf16.mxu0 0
  %2448 = vmatpush2.bf16.msra.mxu0 0
  %2449 = vmatprep.subr.bf16.mxu0 0
  %2450 = vmatpush2.bf16.msra.mxu0 0
  %2451 = vmatprep.subr.bf16.mxu0 0
  %2452 = vmatpush2.bf16.msra.mxu0 0
  %2453 = vmatprep.subr.bf16.mxu0 0
  %2454 = vmatpush2.bf16.msra.mxu0 0
  %2455 = vmatprep.subr.bf16.mxu0 0
  %2456 = vmatpush2.bf16.msra.mxu0 0
  %2457 = vmatprep.mubr.bf16.mxu0 0
  %2458 = vmatmul.mubr.bf16.gmra.mxu0 %v931
  %v2459 = vpop.f32.mrf.mxu0
  %v2460 = vadd.f32 %v2291, %v2459
  %v2461 = vpop.f32.mrf.mxu0
  %v2462 = vpop.f32.mrf.mxu0
  %v2463 = vadd.f32 %v2294, %v2462
  %v2464 = vpop.f32.mrf.mxu0
  %2465 = vmatprep.mubr.bf16.mxu0 0
  %2466 = vmatmul.mubr.bf16.gmra.mxu0 %v2221
  %v2467 = vpop.f32.mrf.mxu0
  %v2468 = vadd.f32 %v2299, %v2467
  %v2469 = vpop.f32.mrf.mxu0
  %v2470 = vpop.f32.mrf.mxu0
  %v2471 = vadd.f32 %v2302, %v2470
  %v2472 = vpop.f32.mrf.mxu0
  %2473 = vmatprep.mubr.bf16.mxu0 0
  %2474 = vmatmul.mubr.bf16.gmra.mxu0 %v2223
  %v2475 = vpop.f32.mrf.mxu0
  %v2476 = vadd.f32 %v2307, %v2475
  %v2477 = vpop.f32.mrf.mxu0
  %v2478 = vpop.f32.mrf.mxu0
  %v2479 = vadd.f32 %v2310, %v2478
  %v2480 = vpop.f32.mrf.mxu0
  %2481 = vmatprep.mubr.bf16.mxu0 0
  %2482 = vmatmul.mubr.bf16.gmra.mxu0 %v2225
  %v2483 = vpop.f32.mrf.mxu0
  %v2484 = vadd.f32 %v2315, %v2483
  %v2485 = vpop.f32.mrf.mxu0
  %v2486 = vpop.f32.mrf.mxu0
  %v2487 = vadd.f32 %v2318, %v2486
  %v2488 = vpop.f32.mrf.mxu0
  %2489 = vmatprep.mubr.bf16.mxu0 0
  %2490 = vmatmul.mubr.bf16.gmra.mxu0 %v2227
  %v2491 = vpop.f32.mrf.mxu0
  %v2492 = vadd.f32 %v2323, %v2491
  %v2493 = vpop.f32.mrf.mxu0
  %v2494 = vpop.f32.mrf.mxu0
  %v2495 = vadd.f32 %v2326, %v2494
  %v2496 = vpop.f32.mrf.mxu0
  %2497 = vmatprep.mubr.bf16.mxu0 0
  %2498 = vmatmul.mubr.bf16.gmra.mxu0 %v2229
  %v2499 = vpop.f32.mrf.mxu0
  %v2500 = vadd.f32 %v2331, %v2499
  %v2501 = vpop.f32.mrf.mxu0
  %v2502 = vpop.f32.mrf.mxu0
  %v2503 = vadd.f32 %v2334, %v2502
  %v2504 = vpop.f32.mrf.mxu0
  %2505 = vmatprep.mubr.bf16.mxu0 0
  %2506 = vmatmul.mubr.bf16.gmra.mxu0 %v2231
  %v2507 = vpop.f32.mrf.mxu0
  %v2508 = vadd.f32 %v2339, %v2507
  %v2509 = vpop.f32.mrf.mxu0
  %v2510 = vpop.f32.mrf.mxu0
  %v2511 = vadd.f32 %v2342, %v2510
  %v2512 = vpop.f32.mrf.mxu0
  %2513 = vmatprep.mubr.bf16.mxu0 0
  %2514 = vmatmul.mubr.bf16.gmra.mxu0 %v2233
  %v2515 = vpop.f32.mrf.mxu0
  %v2516 = vadd.f32 %v2347, %v2515
  %v2517 = vpop.f32.mrf.mxu0
  %v2518 = vpop.f32.mrf.mxu0
  %v2519 = vadd.f32 %v2350, %v2518
  %v2520 = vpop.f32.mrf.mxu0
  %2521 = vmatprep.mubr.bf16.mxu0 0
  %2522 = vmatmul.mubr.bf16.gmra.mxu0 %v2235
  %v2523 = vpop.f32.mrf.mxu0
  %v2524 = vadd.f32 %v2355, %v2523
  %v2525 = vpop.f32.mrf.mxu0
  %v2526 = vpop.f32.mrf.mxu0
  %v2527 = vadd.f32 %v2358, %v2526
  %v2528 = vpop.f32.mrf.mxu0
  %2529 = vmatprep.mubr.bf16.mxu0 0
  %2530 = vmatmul.mubr.bf16.gmra.mxu0 %v2237
  %v2531 = vpop.f32.mrf.mxu0
  %v2532 = vadd.f32 %v2363, %v2531
  %v2533 = vpop.f32.mrf.mxu0
  %v2534 = vpop.f32.mrf.mxu0
  %v2535 = vadd.f32 %v2366, %v2534
  %v2536 = vpop.f32.mrf.mxu0
  %2537 = vmatprep.mubr.bf16.mxu0 0
  %2538 = vmatmul.mubr.bf16.gmra.mxu0 %v2239
  %v2539 = vpop.f32.mrf.mxu0
  %v2540 = vadd.f32 %v2371, %v2539
  %v2541 = vpop.f32.mrf.mxu0
  %v2542 = vpop.f32.mrf.mxu0
  %v2543 = vadd.f32 %v2374, %v2542
  %v2544 = vpop.f32.mrf.mxu0
  %2545 = vmatprep.mubr.bf16.mxu0 0
  %2546 = vmatmul.mubr.bf16.gmra.mxu0 %v2241
  %v2547 = vpop.f32.mrf.mxu0
  %v2548 = vadd.f32 %v2379, %v2547
  %v2549 = vpop.f32.mrf.mxu0
  %v2550 = vpop.f32.mrf.mxu0
  %v2551 = vadd.f32 %v2382, %v2550
  %v2552 = vpop.f32.mrf.mxu0
  %2553 = vmatprep.mubr.bf16.mxu0 0
  %2554 = vmatmul.mubr.bf16.gmra.mxu0 %v2243
  %v2555 = vpop.f32.mrf.mxu0
  %v2556 = vadd.f32 %v2387, %v2555
  %v2557 = vpop.f32.mrf.mxu0
  %v2558 = vpop.f32.mrf.mxu0
  %v2559 = vadd.f32 %v2390, %v2558
  %v2560 = vpop.f32.mrf.mxu0
  %2561 = vmatprep.mubr.bf16.mxu0 0
  %2562 = vmatmul.mubr.bf16.gmra.mxu0 %v2245
  %v2563 = vpop.f32.mrf.mxu0
  %v2564 = vadd.f32 %v2395, %v2563
  %v2565 = vpop.f32.mrf.mxu0
  %v2566 = vpop.f32.mrf.mxu0
  %v2567 = vadd.f32 %v2398, %v2566
  %v2568 = vpop.f32.mrf.mxu0
  %2569 = vmatprep.mubr.bf16.mxu0 0
  %2570 = vmatmul.mubr.bf16.gmra.mxu0 %v2247
  %v2571 = vpop.f32.mrf.mxu0
  %v2572 = vadd.f32 %v2403, %v2571
  %v2573 = vpop.f32.mrf.mxu0
  %v2574 = vpop.f32.mrf.mxu0
  %v2575 = vadd.f32 %v2406, %v2574
  %v2576 = vpop.f32.mrf.mxu0
  %2577 = vmatprep.mubr.bf16.mxu0 0
  %2578 = vmatmul.mubr.bf16.gmra.mxu0 %v2249
  %v2579 = vpop.f32.mrf.mxu0
  %v2580 = vadd.f32 %v2411, %v2579
  %v2581 = vpop.f32.mrf.mxu0
  %v2582 = vpop.f32.mrf.mxu0
  %v2583 = vadd.f32 %v2414, %v2582
  %v2584 = vpop.f32.mrf.mxu0
  %2585 = vdwg.mxu0
  %v2586 = vld [vmem:[%s1097] sm:$0xf]
  %v2587 = vld [vmem:[%s1097 + $0x4] sm:$0x3]
  %v2590 = vunpack.c.l.b16 %v2586
  %v2591 = vunpack.c.l.b16 %v2587
  %v2592 = vpack.c.b16 %v2591, %v2590
  %v2594 = vsel %vm761, %v2592, 0
  %2596 = vmatprep.subr.bf16.mxu0 0
  %2597 = vmatpush1.bf16.msra.mxu0 0
  %2598 = vmatprep.subr.bf16.mxu0 0
  %2599 = vmatpush1.bf16.msra.mxu0 0
  %2600 = vmatprep.subr.bf16.mxu0 0
  %2601 = vmatpush1.bf16.msra.mxu0 0
  %2602 = vmatprep.subr.bf16.mxu0 0
  %2603 = vmatpush1.bf16.msra.mxu0 0
  %2604 = vmatprep.subr.bf16.mxu0 0
  %2605 = vmatpush1.bf16.msra.mxu0 0
  %2606 = vmatprep.subr.bf16.mxu0 0
  %2607 = vmatpush1.bf16.msra.mxu0 0
  %2608 = vmatprep.subr.bf16.mxu0 0
  %2609 = vmatpush1.bf16.msra.mxu0 0
  %2610 = vmatprep.subr.bf16.mxu0 0
  %2611 = vmatpush1.bf16.msra.mxu0 %v2594
  %2612 = vmatprep.subr.bf16.mxu0 0
  %2613 = vmatpush2.bf16.msra.mxu0 0
  %2614 = vmatprep.subr.bf16.mxu0 0
  %2615 = vmatpush2.bf16.msra.mxu0 0
  %2616 = vmatprep.subr.bf16.mxu0 0
  %2617 = vmatpush2.bf16.msra.mxu0 0
  %2618 = vmatprep.subr.bf16.mxu0 0
  %2619 = vmatpush2.bf16.msra.mxu0 0
  %2620 = vmatprep.subr.bf16.mxu0 0
  %2621 = vmatpush2.bf16.msra.mxu0 0
  %2622 = vmatprep.subr.bf16.mxu0 0
  %2623 = vmatpush2.bf16.msra.mxu0 0
  %2624 = vmatprep.subr.bf16.mxu0 0
  %2625 = vmatpush2.bf16.msra.mxu0 0
  %2626 = vmatprep.subr.bf16.mxu0 0
  %2627 = vmatpush2.bf16.msra.mxu0 0
  %2628 = vmatprep.mubr.bf16.mxu0 0
  %2629 = vmatmul.mubr.bf16.gmra.mxu0 %v2223
  %v2630 = vpop.f32.mrf.mxu0
  %v2631 = vadd.f32 0.0, %v2630
  %v2632 = vpop.f32.mrf.mxu0
  %v2633 = vpop.f32.mrf.mxu0
  %v2634 = vadd.f32 0.0, %v2633
  %v2635 = vpop.f32.mrf.mxu0
  %2636 = vmatprep.mubr.bf16.mxu0 0
  %2637 = vmatmul.mubr.bf16.gmra.mxu0 %v2225
  %v2638 = vpop.f32.mrf.mxu0
  %v2639 = vadd.f32 0.0, %v2638
  %v2640 = vpop.f32.mrf.mxu0
  %v2641 = vpop.f32.mrf.mxu0
  %v2642 = vadd.f32 0.0, %v2641
  %v2643 = vpop.f32.mrf.mxu0
  %2644 = vmatprep.mubr.bf16.mxu0 0
  %2645 = vmatmul.mubr.bf16.gmra.mxu0 %v2227
  %v2646 = vpop.f32.mrf.mxu0
  %v2647 = vadd.f32 0.0, %v2646
  %v2648 = vpop.f32.mrf.mxu0
  %v2649 = vpop.f32.mrf.mxu0
  %v2650 = vadd.f32 0.0, %v2649
  %v2651 = vpop.f32.mrf.mxu0
  %2652 = vmatprep.mubr.bf16.mxu0 0
  %2653 = vmatmul.mubr.bf16.gmra.mxu0 %v2229
  %v2654 = vpop.f32.mrf.mxu0
  %v2655 = vadd.f32 0.0, %v2654
  %v2656 = vpop.f32.mrf.mxu0
  %v2657 = vpop.f32.mrf.mxu0
  %v2658 = vadd.f32 0.0, %v2657
  %v2659 = vpop.f32.mrf.mxu0
  %2660 = vmatprep.mubr.bf16.mxu0 0
  %2661 = vmatmul.mubr.bf16.gmra.mxu0 %v2231
  %v2662 = vpop.f32.mrf.mxu0
  %v2663 = vadd.f32 0.0, %v2662
  %v2664 = vpop.f32.mrf.mxu0
  %v2665 = vpop.f32.mrf.mxu0
  %v2666 = vadd.f32 0.0, %v2665
  %v2667 = vpop.f32.mrf.mxu0
  %2668 = vmatprep.mubr.bf16.mxu0 0
  %2669 = vmatmul.mubr.bf16.gmra.mxu0 %v2233
  %v2670 = vpop.f32.mrf.mxu0
  %v2671 = vadd.f32 0.0, %v2670
  %v2672 = vpop.f32.mrf.mxu0
  %v2673 = vpop.f32.mrf.mxu0
  %v2674 = vadd.f32 0.0, %v2673
  %v2675 = vpop.f32.mrf.mxu0
  %2676 = vmatprep.mubr.bf16.mxu0 0
  %2677 = vmatmul.mubr.bf16.gmra.mxu0 %v2235
  %v2678 = vpop.f32.mrf.mxu0
  %v2679 = vadd.f32 0.0, %v2678
  %v2680 = vpop.f32.mrf.mxu0
  %v2681 = vpop.f32.mrf.mxu0
  %v2682 = vadd.f32 0.0, %v2681
  %v2683 = vpop.f32.mrf.mxu0
  %2684 = vmatprep.mubr.bf16.mxu0 0
  %2685 = vmatmul.mubr.bf16.gmra.mxu0 %v2237
  %v2686 = vpop.f32.mrf.mxu0
  %v2687 = vadd.f32 0.0, %v2686
  %v2688 = vpop.f32.mrf.mxu0
  %v2689 = vpop.f32.mrf.mxu0
  %v2690 = vadd.f32 0.0, %v2689
  %v2691 = vpop.f32.mrf.mxu0
  %2692 = vmatprep.mubr.bf16.mxu0 0
  %2693 = vmatmul.mubr.bf16.gmra.mxu0 %v2239
  %v2694 = vpop.f32.mrf.mxu0
  %v2695 = vadd.f32 0.0, %v2694
  %v2696 = vpop.f32.mrf.mxu0
  %v2697 = vpop.f32.mrf.mxu0
  %v2698 = vadd.f32 0.0, %v2697
  %v2699 = vpop.f32.mrf.mxu0
  %2700 = vmatprep.mubr.bf16.mxu0 0
  %2701 = vmatmul.mubr.bf16.gmra.mxu0 %v2241
  %v2702 = vpop.f32.mrf.mxu0
  %v2703 = vadd.f32 0.0, %v2702
  %v2704 = vpop.f32.mrf.mxu0
  %v2705 = vpop.f32.mrf.mxu0
  %v2706 = vadd.f32 0.0, %v2705
  %v2707 = vpop.f32.mrf.mxu0
  %2708 = vmatprep.mubr.bf16.mxu0 0
  %2709 = vmatmul.mubr.bf16.gmra.mxu0 %v2243
  %v2710 = vpop.f32.mrf.mxu0
  %v2711 = vadd.f32 0.0, %v2710
  %v2712 = vpop.f32.mrf.mxu0
  %v2713 = vpop.f32.mrf.mxu0
  %v2714 = vadd.f32 0.0, %v2713
  %v2715 = vpop.f32.mrf.mxu0
  %2716 = vmatprep.mubr.bf16.mxu0 0
  %2717 = vmatmul.mubr.bf16.gmra.mxu0 %v2245
  %v2718 = vpop.f32.mrf.mxu0
  %v2719 = vadd.f32 0.0, %v2718
  %v2720 = vpop.f32.mrf.mxu0
  %v2721 = vpop.f32.mrf.mxu0
  %v2722 = vadd.f32 0.0, %v2721
  %v2723 = vpop.f32.mrf.mxu0
  %2724 = vmatprep.mubr.bf16.mxu0 0
  %2725 = vmatmul.mubr.bf16.gmra.mxu0 %v2247
  %v2726 = vpop.f32.mrf.mxu0
  %v2727 = vadd.f32 0.0, %v2726
  %v2728 = vpop.f32.mrf.mxu0
  %v2729 = vpop.f32.mrf.mxu0
  %v2730 = vadd.f32 0.0, %v2729
  %v2731 = vpop.f32.mrf.mxu0
  %2732 = vmatprep.mubr.bf16.mxu0 0
  %2733 = vmatmul.mubr.bf16.gmra.mxu0 %v2249
  %v2734 = vpop.f32.mrf.mxu0
  %v2735 = vadd.f32 0.0, %v2734
  %v2736 = vpop.f32.mrf.mxu0
  %v2737 = vpop.f32.mrf.mxu0
  %v2738 = vadd.f32 0.0, %v2737
  %v2739 = vpop.f32.mrf.mxu0
  %2740 = vmatprep.mubr.bf16.mxu0 0
  %2741 = vmatmul.mubr.bf16.gmra.mxu0 %v2251
  %v2742 = vpop.f32.mrf.mxu0
  %v2743 = vadd.f32 0.0, %v2742
  %v2744 = vpop.f32.mrf.mxu0
  %v2745 = vpop.f32.mrf.mxu0
  %v2746 = vadd.f32 0.0, %v2745
  %v2747 = vpop.f32.mrf.mxu0
  %2748 = vmatprep.mubr.bf16.mxu0 0
  %2749 = vmatmul.mubr.bf16.gmra.mxu0 %v931
  %v2750 = vpop.f32.mrf.mxu0
  %v2751 = vadd.f32 0.0, %v2750
  %v2752 = vpop.f32.mrf.mxu0
  %v2753 = vpop.f32.mrf.mxu0
  %v2754 = vadd.f32 0.0, %v2753
  %v2755 = vpop.f32.mrf.mxu0
  %2756 = vdwg.mxu0
  %v2757 = vadd.f32 %v2460, %v2631
  %v2758 = vadd.f32 %v2463, %v2634
  %v2759 = vadd.f32 %v2468, %v2639
  %v2760 = vadd.f32 %v2471, %v2642
  %v2761 = vadd.f32 %v2476, %v2647
  %v2762 = vadd.f32 %v2479, %v2650
  %v2763 = vadd.f32 %v2484, %v2655
  %v2764 = vadd.f32 %v2487, %v2658
  %v2765 = vadd.f32 %v2492, %v2663
  %v2766 = vadd.f32 %v2495, %v2666
  %v2767 = vadd.f32 %v2500, %v2671
  %v2768 = vadd.f32 %v2503, %v2674
  %v2769 = vadd.f32 %v2508, %v2679
  %v2770 = vadd.f32 %v2511, %v2682
  %v2771 = vadd.f32 %v2516, %v2687
  %v2772 = vadd.f32 %v2519, %v2690
  %v2773 = vadd.f32 %v2524, %v2695
  %v2774 = vadd.f32 %v2527, %v2698
  %v2775 = vadd.f32 %v2532, %v2703
  %v2776 = vadd.f32 %v2535, %v2706
  %v2777 = vadd.f32 %v2540, %v2711
  %v2778 = vadd.f32 %v2543, %v2714
  %v2779 = vadd.f32 %v2548, %v2719
  %v2780 = vadd.f32 %v2551, %v2722
  %v2781 = vadd.f32 %v2556, %v2727
  %v2782 = vadd.f32 %v2559, %v2730
  %v2783 = vadd.f32 %v2564, %v2735
  %v2784 = vadd.f32 %v2567, %v2738
  %v2785 = vadd.f32 %v2572, %v2743
  %v2786 = vadd.f32 %v2575, %v2746
  %v2787 = vadd.f32 %v2580, %v2751
  %v2788 = vadd.f32 %v2583, %v2754
  %v2789 = vsel %vm627, %v2757, 0.0
  %v2790 = vsel %vm627, %v2758, 0.0
  %v2791 = vadd.f32 %v2789, %v2790
  %v2792 = vsel %vm627, %v2759, 0.0
  %v2793 = vadd.f32 %v2791, %v2792
  %v2794 = vsel %vm627, %v2760, 0.0
  %v2795 = vadd.f32 %v2793, %v2794
  %v2796 = vsel %vm627, %v2761, 0.0
  %v2797 = vadd.f32 %v2795, %v2796
  %v2798 = vsel %vm627, %v2762, 0.0
  %v2799 = vadd.f32 %v2797, %v2798
  %v2800 = vsel %vm627, %v2763, 0.0
  %v2801 = vadd.f32 %v2799, %v2800
  %v2802 = vsel %vm627, %v2764, 0.0
  %v2803 = vadd.f32 %v2801, %v2802
  %v2804 = vsel %vm627, %v2765, 0.0
  %v2805 = vadd.f32 %v2803, %v2804
  %v2806 = vsel %vm627, %v2766, 0.0
  %v2807 = vadd.f32 %v2805, %v2806
  %v2808 = vsel %vm627, %v2767, 0.0
  %v2809 = vadd.f32 %v2807, %v2808
  %v2810 = vsel %vm627, %v2768, 0.0
  %v2811 = vadd.f32 %v2809, %v2810
  %v2812 = vsel %vm627, %v2769, 0.0
  %v2813 = vadd.f32 %v2811, %v2812
  %v2814 = vsel %vm627, %v2770, 0.0
  %v2815 = vadd.f32 %v2813, %v2814
  %v2816 = vsel %vm627, %v2771, 0.0
  %v2817 = vadd.f32 %v2815, %v2816
  %v2818 = vsel %vm627, %v2772, 0.0
  %v2819 = vadd.f32 %v2817, %v2818
  %v2820 = vsel %vm627, %v2773, 0.0
  %v2821 = vadd.f32 %v2819, %v2820
  %v2822 = vsel %vm627, %v2774, 0.0
  %v2823 = vadd.f32 %v2821, %v2822
  %v2824 = vsel %vm627, %v2775, 0.0
  %v2825 = vadd.f32 %v2823, %v2824
  %v2826 = vsel %vm627, %v2776, 0.0
  %v2827 = vadd.f32 %v2825, %v2826
  %v2828 = vsel %vm627, %v2777, 0.0
  %v2829 = vadd.f32 %v2827, %v2828
  %v2830 = vsel %vm627, %v2778, 0.0
  %v2831 = vadd.f32 %v2829, %v2830
  %v2832 = vsel %vm627, %v2779, 0.0
  %v2833 = vadd.f32 %v2831, %v2832
  %v2834 = vsel %vm627, %v2780, 0.0
  %v2835 = vadd.f32 %v2833, %v2834
  %v2836 = vsel %vm627, %v2781, 0.0
  %v2837 = vadd.f32 %v2835, %v2836
  %v2838 = vsel %vm627, %v2782, 0.0
  %v2839 = vadd.f32 %v2837, %v2838
  %v2840 = vsel %vm627, %v2783, 0.0
  %v2841 = vadd.f32 %v2839, %v2840
  %v2842 = vsel %vm627, %v2784, 0.0
  %v2843 = vadd.f32 %v2841, %v2842
  %v2844 = vsel %vm627, %v2785, 0.0
  %v2845 = vadd.f32 %v2843, %v2844
  %v2846 = vsel %vm627, %v2786, 0.0
  %v2847 = vadd.f32 %v2845, %v2846
  %v2848 = vsel %vm627, %v2787, 0.0
  %v2849 = vadd.f32 %v2847, %v2848
  %v2850 = vsel %vm627, %v2788, 0.0
  %v2851 = vadd.f32 %v2849, %v2850
  %v2852 = vrot.slane %v2851, 4
  %v2853 = vadd.f32 %v2851, %v2852
  %v2854 = vrot.slane %v2853, 2
  %v2855 = vadd.f32 %v2853, %v2854
  %v2856 = vrot.slane %v2855, 1
  %v2857 = vadd.f32 %v2855, %v2856
  %v2858 = vadd.f32 %v1370, %v2857
  %v2859 = vmul.f32 %v2757, %v2757
  %v2860 = vmul.f32 %v2758, %v2758
  %v2861 = vmul.f32 %v2759, %v2759
  %v2862 = vmul.f32 %v2760, %v2760
  %v2863 = vmul.f32 %v2761, %v2761
  %v2864 = vmul.f32 %v2762, %v2762
  %v2865 = vmul.f32 %v2763, %v2763
  %v2866 = vmul.f32 %v2764, %v2764
  %v2867 = vmul.f32 %v2765, %v2765
  %v2868 = vmul.f32 %v2766, %v2766
  %v2869 = vmul.f32 %v2767, %v2767
  %v2870 = vmul.f32 %v2768, %v2768
  %v2871 = vmul.f32 %v2769, %v2769
  %v2872 = vmul.f32 %v2770, %v2770
  %v2873 = vmul.f32 %v2771, %v2771
  %v2874 = vmul.f32 %v2772, %v2772
  %v2875 = vmul.f32 %v2773, %v2773
  %v2876 = vmul.f32 %v2774, %v2774
  %v2877 = vmul.f32 %v2775, %v2775
  %v2878 = vmul.f32 %v2776, %v2776
  %v2879 = vmul.f32 %v2777, %v2777
  %v2880 = vmul.f32 %v2778, %v2778
  %v2881 = vmul.f32 %v2779, %v2779
  %v2882 = vmul.f32 %v2780, %v2780
  %v2883 = vmul.f32 %v2781, %v2781
  %v2884 = vmul.f32 %v2782, %v2782
  %v2885 = vmul.f32 %v2783, %v2783
  %v2886 = vmul.f32 %v2784, %v2784
  %v2887 = vmul.f32 %v2785, %v2785
  %v2888 = vmul.f32 %v2786, %v2786
  %v2889 = vmul.f32 %v2787, %v2787
  %v2890 = vmul.f32 %v2788, %v2788
  %v2891 = vsel %vm627, %v2859, 0.0
  %v2892 = vsel %vm627, %v2860, 0.0
  %v2893 = vadd.f32 %v2891, %v2892
  %v2894 = vsel %vm627, %v2861, 0.0
  %v2895 = vadd.f32 %v2893, %v2894
  %v2896 = vsel %vm627, %v2862, 0.0
  %v2897 = vadd.f32 %v2895, %v2896
  %v2898 = vsel %vm627, %v2863, 0.0
  %v2899 = vadd.f32 %v2897, %v2898
  %v2900 = vsel %vm627, %v2864, 0.0
  %v2901 = vadd.f32 %v2899, %v2900
  %v2902 = vsel %vm627, %v2865, 0.0
  %v2903 = vadd.f32 %v2901, %v2902
  %v2904 = vsel %vm627, %v2866, 0.0
  %v2905 = vadd.f32 %v2903, %v2904
  %v2906 = vsel %vm627, %v2867, 0.0
  %v2907 = vadd.f32 %v2905, %v2906
  %v2908 = vsel %vm627, %v2868, 0.0
  %v2909 = vadd.f32 %v2907, %v2908
  %v2910 = vsel %vm627, %v2869, 0.0
  %v2911 = vadd.f32 %v2909, %v2910
  %v2912 = vsel %vm627, %v2870, 0.0
  %v2913 = vadd.f32 %v2911, %v2912
  %v2914 = vsel %vm627, %v2871, 0.0
  %v2915 = vadd.f32 %v2913, %v2914
  %v2916 = vsel %vm627, %v2872, 0.0
  %v2917 = vadd.f32 %v2915, %v2916
  %v2918 = vsel %vm627, %v2873, 0.0
  %v2919 = vadd.f32 %v2917, %v2918
  %v2920 = vsel %vm627, %v2874, 0.0
  %v2921 = vadd.f32 %v2919, %v2920
  %v2922 = vsel %vm627, %v2875, 0.0
  %v2923 = vadd.f32 %v2921, %v2922
  %v2924 = vsel %vm627, %v2876, 0.0
  %v2925 = vadd.f32 %v2923, %v2924
  %v2926 = vsel %vm627, %v2877, 0.0
  %v2927 = vadd.f32 %v2925, %v2926
  %v2928 = vsel %vm627, %v2878, 0.0
  %v2929 = vadd.f32 %v2927, %v2928
  %v2930 = vsel %vm627, %v2879, 0.0
  %v2931 = vadd.f32 %v2929, %v2930
  %v2932 = vsel %vm627, %v2880, 0.0
  %v2933 = vadd.f32 %v2931, %v2932
  %v2934 = vsel %vm627, %v2881, 0.0
  %v2935 = vadd.f32 %v2933, %v2934
  %v2936 = vsel %vm627, %v2882, 0.0
  %v2937 = vadd.f32 %v2935, %v2936
  %v2938 = vsel %vm627, %v2883, 0.0
  %v2939 = vadd.f32 %v2937, %v2938
  %v2940 = vsel %vm627, %v2884, 0.0
  %v2941 = vadd.f32 %v2939, %v2940
  %v2942 = vsel %vm627, %v2885, 0.0
  %v2943 = vadd.f32 %v2941, %v2942
  %v2944 = vsel %vm627, %v2886, 0.0
  %v2945 = vadd.f32 %v2943, %v2944
  %v2946 = vsel %vm627, %v2887, 0.0
  %v2947 = vadd.f32 %v2945, %v2946
  %v2948 = vsel %vm627, %v2888, 0.0
  %v2949 = vadd.f32 %v2947, %v2948
  %v2950 = vsel %vm627, %v2889, 0.0
  %v2951 = vadd.f32 %v2949, %v2950
  %v2952 = vsel %vm627, %v2890, 0.0
  %v2953 = vadd.f32 %v2951, %v2952
  %v2954 = vrot.slane %v2953, 4
  %v2955 = vadd.f32 %v2953, %v2954
  %v2956 = vrot.slane %v2955, 2
  %v2957 = vadd.f32 %v2955, %v2956
  %v2958 = vrot.slane %v2957, 1
  %v2959 = vadd.f32 %v2957, %v2958
  %v2960 = vadd.f32 %v1472, %v2959
  %2961 = vxpose.xlu0.b32.start [1/16] %v2757, 128
  %2962 = vxpose.xlu0.b32.cont [2/16] %v2758, 128
  %2963 = vxpose.xlu0.b32.cont [3/16] %v2759, 128
  %2964 = vxpose.xlu0.b32.cont [4/16] %v2760, 128
  %2965 = vxpose.xlu0.b32.cont [5/16] %v2761, 128
  %2966 = vxpose.xlu0.b32.cont [6/16] %v2762, 128
  %2967 = vxpose.xlu0.b32.cont [7/16] %v2763, 128
  %2968 = vxpose.xlu0.b32.cont [8/16] %v2764, 128
  %2969 = vxpose.xlu0.b32.cont [9/16] %v2765, 128
  %2970 = vxpose.xlu0.b32.cont [10/16] %v2766, 128
  %2971 = vxpose.xlu0.b32.cont [11/16] %v2767, 128
  %2972 = vxpose.xlu0.b32.cont [12/16] %v2768, 128
  %2973 = vxpose.xlu0.b32.cont [13/16] %v2769, 128
  %2974 = vxpose.xlu0.b32.cont [14/16] %v2770, 128
  %2975 = vxpose.xlu0.b32.cont [15/16] %v2771, 128
  %2976 = vxpose.xlu0.b32.end [16/16] %v2772, 128
  %v2977 = vpop.trf.xlu0
  %v2978 = vpop.trf.xlu0
  %v2979 = vpop.trf.xlu0
  %v2980 = vpop.trf.xlu0
  %v2981 = vpop.trf.xlu0
  %v2982 = vpop.trf.xlu0
  %v2983 = vpop.trf.xlu0
  %v2984 = vpop.trf.xlu0
  %v2985 = vpop.trf.xlu0
  %v2986 = vpop.trf.xlu0
  %v2987 = vpop.trf.xlu0
  %v2988 = vpop.trf.xlu0
  %v2989 = vpop.trf.xlu0
  %v2990 = vpop.trf.xlu0
  %v2991 = vpop.trf.xlu0
  %v2992 = vpop.trf.xlu0
  %2993 = vxpose.xlu0.b32.start [1/16] %v2773, 128
  %2994 = vxpose.xlu0.b32.cont [2/16] %v2774, 128
  %2995 = vxpose.xlu0.b32.cont [3/16] %v2775, 128
  %2996 = vxpose.xlu0.b32.cont [4/16] %v2776, 128
  %2997 = vxpose.xlu0.b32.cont [5/16] %v2777, 128
  %2998 = vxpose.xlu0.b32.cont [6/16] %v2778, 128
  %2999 = vxpose.xlu0.b32.cont [7/16] %v2779, 128
  %3000 = vxpose.xlu0.b32.cont [8/16] %v2780, 128
  %3001 = vxpose.xlu0.b32.cont [9/16] %v2781, 128
  %3002 = vxpose.xlu0.b32.cont [10/16] %v2782, 128
  %3003 = vxpose.xlu0.b32.cont [11/16] %v2783, 128
  %3004 = vxpose.xlu0.b32.cont [12/16] %v2784, 128
  %3005 = vxpose.xlu0.b32.cont [13/16] %v2785, 128
  %3006 = vxpose.xlu0.b32.cont [14/16] %v2786, 128
  %3007 = vxpose.xlu0.b32.cont [15/16] %v2787, 128
  %3008 = vxpose.xlu0.b32.end [16/16] %v2788, 128
  %v3009 = vpop.trf.xlu0
  %v3010 = vpop.trf.xlu0
  %v3011 = vpop.trf.xlu0
  %v3012 = vpop.trf.xlu0
  %v3013 = vpop.trf.xlu0
  %v3014 = vpop.trf.xlu0
  %v3015 = vpop.trf.xlu0
  %v3016 = vpop.trf.xlu0
  %v3017 = vpop.trf.xlu0
  %v3018 = vpop.trf.xlu0
  %v3019 = vpop.trf.xlu0
  %v3020 = vpop.trf.xlu0
  %v3021 = vpop.trf.xlu0
  %v3022 = vpop.trf.xlu0
  %v3023 = vpop.trf.xlu0
  %v3024 = vpop.trf.xlu0
  %v3025 = vpack.c.bf16 %v2977, %v2977
  %v3026 = vpack.c.bf16 %v3009, %v3009
  %v3029 = vcombine.low %v3025, %v3026
  %v3031 = vunpack.c.l.s4 1983009808
  %v3032 = vunpack.c.0.s8 %v3031
  %v3033 = vlaneseq
  %v3034 = vshrl.u32 %v3033, 7
  %v3035 = vsub.s32 %v3032, %v3034
  %v3036 = vrot.slane %v3029, %v3035
  %s3038 = scalar_lea.vmem %s2, 4
  %3039 = vst [vmem:[%s3038] sm:$0xf] %v3036
  %vm3040 = vcmask 24576
  %3041 = vst.msk [vmem:[%s3] sm:$0x1] %vm3040, %v2858
  %3042 = vst.msk [vmem:[%s4] sm:$0x1] %vm3040, %v2960
  // Predicated region
  $region10: #{basic_block_pallas.3} parent=0 // pred_check
    _
  $region11: #{basic_block_pallas.3} parent=0 // pred_check_branch
    %3044 = sbr.rel (0) target = $region13
  $region12: #{basic_block_pallas.3} parent=0 // pred_region
    _
  $region13: #{basic_block_pallas.3} parent=0 // pred_fallthru
    _
  // Predicated region
  $region14: #{basic_block_pallas.3} parent=0 // pred_check
    _
  $region15: #{basic_block_pallas.3} parent=0 // pred_check_branch
    %3046 = sbr.rel (0) target = $region17
  $region16: #{basic_block_pallas.3} parent=0 // pred_region
    _
  $region17: #{basic_block_pallas.3} parent=0 // pred_fallthru
    _
  // Predicated region
  $region18: #{basic_block_pallas.3} parent=0 // pred_check
    _
  $region19: #{basic_block_pallas.3} parent=0 // pred_check_branch
    %3048 = sbr.rel (0) target = $region21
  $region20: #{basic_block_pallas.3} parent=0 // pred_region
    _
  $region21: #{basic_block_pallas.3} parent=0 // pred_fallthru
    _
  // Predicated region
  $region22: #{basic_block_pallas.3} parent=0 // pred_check
    _
  $region23: #{basic_block_pallas.3} parent=0 // pred_check_branch
    %3050 = sbr.rel (0) target = $region25
  $region24: #{basic_block_pallas.3} parent=0 // pred_region
    _
  $region25: #{basic_block_pallas.3} parent=0 // pred_fallthru
    _
  // Predicated region
  $region26: #{basic_block_pallas.3} parent=0 // pred_check
    _
  $region27: #{basic_block_pallas.3} parent=0 // pred_check_branch
    %3052 = sbr.rel (0) target = $region29
  $region28: #{basic_block_pallas.3} parent=0 // pred_region
    _
  $region29: #{basic_block_pallas.3} parent=0 // pred_fallthru
    _
  // Predicated region
  $region30: #{basic_block_pallas.3} parent=0 // pred_check
    _
  $region31: #{basic_block_pallas.3} parent=0 // pred_check_branch
    %3054 = sbr.rel (0) target = $region33
  $region32: #{basic_block_pallas.3} parent=0 // pred_region
    _
  $region33: #{basic_block_pallas.3} parent=0 // pred_fallthru
    _

// kernel: basic_block_pallas.4
$region0: #{basic_block_pallas.4}
  #allocation0 [shape = 'u32[]', space=smem, size = 0x4, offset = 0x4, fixed_abs, tag = 'smem constant byte address 0x4 - core index']
  #allocation1 [shape = 'u32[144,128]{1,0:T(1,128)}', space=vmem, size = 0x12000, scoped, tag = 'internal scratch']
  %s0 = inlined_call_operand.vmem [shape: bf16[2,4,256], index: 0, kind: input, shape index: {}]
  %s1 = inlined_call_operand.vmem [shape: f32[4,1], index: 1, kind: input, shape index: {}]
  %s2 = inlined_call_operand.vmem [shape: f32[4,1], index: 2, kind: input, shape index: {}]
  %s3 = inlined_call_operand.vmem [shape: bf16[3,12,4], index: 3, kind: input, shape index: {}]
  %s4 = inlined_call_operand.vmem [shape: bf16[2,4,256], index: 4, kind: output, shape index: {0}]
  %s5 = inlined_call_operand.vmem [shape: f32[1,1,4], index: 5, kind: output, shape index: {1}]
  %s6 = inlined_call_operand.vmem [shape: f32[1,1,4], index: 6, kind: output, shape index: {2}]
  %7 = xla_tuple %s4, %s5, %s6
  %s8 = sld [smem:[#allocation0]]
  $region42: #{basic_block_pallas.4} parent=0
    _
  %s10 = ssub.s32 1, %s8
  %s11 = scalar_select 0, %s10, %s8
  // Predicated region
  $region2: #{basic_block_pallas.4} parent=0 // pred_check
    _
  $region3: #{basic_block_pallas.4} parent=0 // pred_check_branch
    %13 = sbr.rel (0) target = $region5
  $region4: #{basic_block_pallas.4} parent=0 // pred_region
    _
  $region5: #{basic_block_pallas.4} parent=0 // pred_fallthru
    _
  // Predicated region
  $region6: #{basic_block_pallas.4} parent=0 // pred_check
    _
  $region7: #{basic_block_pallas.4} parent=0 // pred_check_branch
    %15 = sbr.rel (0) target = $region9
  $region8: #{basic_block_pallas.4} parent=0 // pred_region
    _
  $region9: #{basic_block_pallas.4} parent=0 // pred_fallthru
    _
  // Predicated region
  $region10: #{basic_block_pallas.4} parent=0 // pred_check
    _
  $region11: #{basic_block_pallas.4} parent=0 // pred_check_branch
    %17 = sbr.rel (0) target = $region13
  $region12: #{basic_block_pallas.4} parent=0 // pred_region
    _
  $region13: #{basic_block_pallas.4} parent=0 // pred_fallthru
    _
  // Predicated region
  $region14: #{basic_block_pallas.4} parent=0 // pred_check
    _
  $region15: #{basic_block_pallas.4} parent=0 // pred_check_branch
    %19 = sbr.rel (0) target = $region17
  $region16: #{basic_block_pallas.4} parent=0 // pred_region
    _
  $region17: #{basic_block_pallas.4} parent=0 // pred_fallthru
    _
  %v21 = vld [vmem:[%s1] sm:$0xf]
  %v22 = vld [vmem:[%s2] sm:$0xf]
  %v23 = vld [vmem:[%s0] sm:$0xf]
  %v24 = vunpack.c.l.bf16 %v23
  %26 = vset.pattern.permute.xlu0 0
  %27 = vperm.xlu0 %26, %v21
  %v28 = vpop.permute.xlu0 %27
  %v30 = vunpack.c.l.s4 839922192
  %v31 = vunpack.c.0.s8 %v30
  %v32 = vlaneseq
  %v33 = vshrl.u32 %v32, 7
  %v34 = vsub.s32 %v31, %v33
  %v35 = vrot.slane %v28, %v34
  %v37 = vmul.f32 %v24, %v35
  %39 = vset.pattern.permute.xlu0 0
  %40 = vperm.xlu0 %39, %v22
  %v41 = vpop.permute.xlu0 %40
  %v43 = vunpack.c.l.s4 839922192
  %v44 = vunpack.c.0.s8 %v43
  %v45 = vlaneseq
  %v46 = vshrl.u32 %v45, 7
  %v47 = vsub.s32 %v44, %v46
  %v48 = vrot.slane %v41, %v47
  %v50 = vadd.f32 %v37, %v48
  %v51 = vmax.f32 %v50, 0.0
  %v53 = vcombine.high %v51, %v51
  %55 = vxpose.xlu0.b32.start [1/16] %v51, 128
  %56 = vxpose.xlu0.b32.cont [2/16] 0.0, 128
  %57 = vxpose.xlu0.b32.cont [3/16] 0.0, 128
  %58 = vxpose.xlu0.b32.cont [4/16] 0.0, 128
  %59 = vxpose.xlu0.b32.cont [5/16] 0.0, 128
  %60 = vxpose.xlu0.b32.cont [6/16] 0.0, 128
  %61 = vxpose.xlu0.b32.cont [7/16] 0.0, 128
  %62 = vxpose.xlu0.b32.cont [8/16] 0.0, 128
  %63 = vxpose.xlu0.b32.cont [9/16] 0.0, 128
  %64 = vxpose.xlu0.b32.cont [10/16] 0.0, 128
  %65 = vxpose.xlu0.b32.cont [11/16] 0.0, 128
  %66 = vxpose.xlu0.b32.cont [12/16] 0.0, 128
  %67 = vxpose.xlu0.b32.cont [13/16] 0.0, 128
  %68 = vxpose.xlu0.b32.cont [14/16] 0.0, 128
  %69 = vxpose.xlu0.b32.cont [15/16] 0.0, 128
  %70 = vxpose.xlu0.b32.end [16/16] 0.0, 128
  %v71 = vpop.trf.xlu0
  %v72 = vpop.trf.xlu0
  %v73 = vpop.trf.xlu0
  %v74 = vpop.trf.xlu0
  %v75 = vpop.trf.xlu0
  %v76 = vpop.trf.xlu0
  %v77 = vpop.trf.xlu0
  %v78 = vpop.trf.xlu0
  %v79 = vpop.trf.xlu0
  %v80 = vpop.trf.xlu0
  %v81 = vpop.trf.xlu0
  %v82 = vpop.trf.xlu0
  %v83 = vpop.trf.xlu0
  %v84 = vpop.trf.xlu0
  %v85 = vpop.trf.xlu0
  %v86 = vpop.trf.xlu0
  %87 = vxpose.xlu0.b32.start [1/16] %v53, 128
  %88 = vxpose.xlu0.b32.cont [2/16] 0.0, 128
  %89 = vxpose.xlu0.b32.cont [3/16] 0.0, 128
  %90 = vxpose.xlu0.b32.cont [4/16] 0.0, 128
  %91 = vxpose.xlu0.b32.cont [5/16] 0.0, 128
  %92 = vxpose.xlu0.b32.cont [6/16] 0.0, 128
  %93 = vxpose.xlu0.b32.cont [7/16] 0.0, 128
  %94 = vxpose.xlu0.b32.cont [8/16] 0.0, 128
  %95 = vxpose.xlu0.b32.cont [9/16] 0.0, 128
  %96 = vxpose.xlu0.b32.cont [10/16] 0.0, 128
  %97 = vxpose.xlu0.b32.cont [11/16] 0.0, 128
  %98 = vxpose.xlu0.b32.cont [12/16] 0.0, 128
  %99 = vxpose.xlu0.b32.cont [13/16] 0.0, 128
  %100 = vxpose.xlu0.b32.cont [14/16] 0.0, 128
  %101 = vxpose.xlu0.b32.cont [15/16] 0.0, 128
  %102 = vxpose.xlu0.b32.end [16/16] 0.0, 128
  %v103 = vpop.trf.xlu0
  %v104 = vpop.trf.xlu0
  %v105 = vpop.trf.xlu0
  %v106 = vpop.trf.xlu0
  %v107 = vpop.trf.xlu0
  %v108 = vpop.trf.xlu0
  %v109 = vpop.trf.xlu0
  %v110 = vpop.trf.xlu0
  %v111 = vpop.trf.xlu0
  %v112 = vpop.trf.xlu0
  %v113 = vpop.trf.xlu0
  %v114 = vpop.trf.xlu0
  %v115 = vpop.trf.xlu0
  %v116 = vpop.trf.xlu0
  %v117 = vpop.trf.xlu0
  %v118 = vpop.trf.xlu0
  %v119 = vpack.c.bf16 %v72, %v71
  %v120 = vpack.c.bf16 %v74, %v73
  %v121 = vpack.c.bf16 %v76, %v75
  %v122 = vpack.c.bf16 %v78, %v77
  %v123 = vpack.c.bf16 %v80, %v79
  %v124 = vpack.c.bf16 %v82, %v81
  %v125 = vpack.c.bf16 %v84, %v83
  %v126 = vpack.c.bf16 %v86, %v85
  %v127 = vpack.c.bf16 %v104, %v103
  %v128 = vpack.c.bf16 %v106, %v105
  %v129 = vpack.c.bf16 %v108, %v107
  %v130 = vpack.c.bf16 %v110, %v109
  %v131 = vpack.c.bf16 %v112, %v111
  %v132 = vpack.c.bf16 %v114, %v113
  %v133 = vpack.c.bf16 %v116, %v115
  %v134 = vpack.c.bf16 %v118, %v117
  %v136 = vshrl.u32 0, 16
  %v138 = vrot.slane %v136, 7
  %v139 = vshll.u32 0, 16
  %v141 = vor.u32 %v138, %v139
  %v143 = vshrl.u32 %v119, 16
  %v145 = vrot.slane %v143, 7
  %v146 = vshll.u32 %v119, 16
  %v148 = vor.u32 %v145, %v146
  %v150 = vshrl.u32 %v120, 16
  %v152 = vrot.slane %v150, 7
  %v153 = vshll.u32 %v120, 16
  %v155 = vor.u32 %v152, %v153
  %v157 = vshrl.u32 %v121, 16
  %v159 = vrot.slane %v157, 7
  %v160 = vshll.u32 %v121, 16
  %v162 = vor.u32 %v159, %v160
  %v164 = vshrl.u32 %v122, 16
  %v166 = vrot.slane %v164, 7
  %v167 = vshll.u32 %v122, 16
  %v169 = vor.u32 %v166, %v167
  %v171 = vshrl.u32 %v123, 16
  %v173 = vrot.slane %v171, 7
  %v174 = vshll.u32 %v123, 16
  %v176 = vor.u32 %v173, %v174
  %v178 = vshrl.u32 %v124, 16
  %v180 = vrot.slane %v178, 7
  %v181 = vshll.u32 %v124, 16
  %v183 = vor.u32 %v180, %v181
  %v185 = vshrl.u32 %v125, 16
  %v187 = vrot.slane %v185, 7
  %v188 = vshll.u32 %v125, 16
  %v190 = vor.u32 %v187, %v188
  %v192 = vshrl.u32 %v126, 16
  %v194 = vrot.slane %v192, 7
  %v195 = vshll.u32 %v126, 16
  %v197 = vor.u32 %v194, %v195
  %v199 = vshrl.u32 %v127, 16
  %v201 = vrot.slane %v199, 7
  %v202 = vshll.u32 %v127, 16
  %v204 = vor.u32 %v201, %v202
  %v206 = vshrl.u32 %v128, 16
  %v208 = vrot.slane %v206, 7
  %v209 = vshll.u32 %v128, 16
  %v211 = vor.u32 %v208, %v209
  %v213 = vshrl.u32 %v129, 16
  %v215 = vrot.slane %v213, 7
  %v216 = vshll.u32 %v129, 16
  %v218 = vor.u32 %v215, %v216
  %v220 = vshrl.u32 %v130, 16
  %v222 = vrot.slane %v220, 7
  %v223 = vshll.u32 %v130, 16
  %v225 = vor.u32 %v222, %v223
  %v227 = vshrl.u32 %v131, 16
  %v229 = vrot.slane %v227, 7
  %v230 = vshll.u32 %v131, 16
  %v232 = vor.u32 %v229, %v230
  %v234 = vshrl.u32 %v132, 16
  %v236 = vrot.slane %v234, 7
  %v237 = vshll.u32 %v132, 16
  %v239 = vor.u32 %v236, %v237
  %v241 = vshrl.u32 %v133, 16
  %v243 = vrot.slane %v241, 7
  %v244 = vshll.u32 %v133, 16
  %v246 = vor.u32 %v243, %v244
  %v248 = vshrl.u32 %v134, 16
  %v250 = vrot.slane %v248, 7
  %v251 = vshll.u32 %v134, 16
  %v253 = vor.u32 %v250, %v251
  %vm288 = vcmask 1040384
  %vm289 = vsmask.f32 256
  %vm290 = vmand %vm288, %vm289
  %v291 = vsel %vm290, 0, %v141
  %v292 = vsel %vm290, 0, %v148
  %v293 = vsel %vm290, 0, %v155
  %v294 = vsel %vm290, 0, %v162
  %v295 = vsel %vm290, 0, %v169
  %v296 = vsel %vm290, 0, %v176
  %v297 = vsel %vm290, 0, %v183
  %v298 = vsel %vm290, 0, %v190
  %v299 = vsel %vm290, 0, %v197
  %v300 = vsel %vm290, 0, %v204
  %v301 = vsel %vm290, 0, %v211
  %v302 = vsel %vm290, 0, %v218
  %v303 = vsel %vm290, 0, %v225
  %v304 = vsel %vm290, 0, %v232
  %v305 = vsel %vm290, 0, %v239
  %v306 = vsel %vm290, 0, %v246
  %v307 = vsel %vm290, 0, %v253
  %v308 = vsel %vm290, %v138, 0
  %v309 = vsel %vm290, %v145, 0
  %v310 = vsel %vm290, %v152, 0
  %v311 = vsel %vm290, %v159, 0
  %v312 = vsel %vm290, %v166, 0
  %v313 = vsel %vm290, %v173, 0
  %v314 = vsel %vm290, %v180, 0
  %v315 = vsel %vm290, %v187, 0
  %v316 = vsel %vm290, %v194, 0
  %v317 = vsel %vm290, %v201, 0
  %v318 = vsel %vm290, %v208, 0
  %v319 = vsel %vm290, %v215, 0
  %v320 = vsel %vm290, %v222, 0
  %v321 = vsel %vm290, %v229, 0
  %v322 = vsel %vm290, %v236, 0
  %v323 = vsel %vm290, %v243, 0
  %v324 = vsel %vm290, %v250, 0
  %vm325 = vsmask.f32 7424
  %v327 = vshrl.u32 %v291, 16
  %v329 = vshll.u32 %v291, 16
  %v331 = vrot.slane %v329, 1
  %v332 = vor.u32 %v327, %v331
  %v334 = vshll.u32 %v308, 16
  %v336 = vrot.slane %v334, 1
  %v337 = vsel %vm325, %v332, %v336
  %v339 = vshrl.u32 %v292, 16
  %v341 = vshll.u32 %v292, 16
  %v343 = vrot.slane %v341, 1
  %v344 = vor.u32 %v339, %v343
  %v346 = vshll.u32 %v309, 16
  %v348 = vrot.slane %v346, 1
  %v349 = vsel %vm325, %v344, %v348
  %v351 = vshrl.u32 %v293, 16
  %v353 = vshll.u32 %v293, 16
  %v355 = vrot.slane %v353, 1
  %v356 = vor.u32 %v351, %v355
  %v358 = vshll.u32 %v310, 16
  %v360 = vrot.slane %v358, 1
  %v361 = vsel %vm325, %v356, %v360
  %v363 = vshrl.u32 %v294, 16
  %v365 = vshll.u32 %v294, 16
  %v367 = vrot.slane %v365, 1
  %v368 = vor.u32 %v363, %v367
  %v370 = vshll.u32 %v311, 16
  %v372 = vrot.slane %v370, 1
  %v373 = vsel %vm325, %v368, %v372
  %v375 = vshrl.u32 %v295, 16
  %v377 = vshll.u32 %v295, 16
  %v379 = vrot.slane %v377, 1
  %v380 = vor.u32 %v375, %v379
  %v382 = vshll.u32 %v312, 16
  %v384 = vrot.slane %v382, 1
  %v385 = vsel %vm325, %v380, %v384
  %v387 = vshrl.u32 %v296, 16
  %v389 = vshll.u32 %v296, 16
  %v391 = vrot.slane %v389, 1
  %v392 = vor.u32 %v387, %v391
  %v394 = vshll.u32 %v313, 16
  %v396 = vrot.slane %v394, 1
  %v397 = vsel %vm325, %v392, %v396
  %v399 = vshrl.u32 %v297, 16
  %v401 = vshll.u32 %v297, 16
  %v403 = vrot.slane %v401, 1
  %v404 = vor.u32 %v399, %v403
  %v406 = vshll.u32 %v314, 16
  %v408 = vrot.slane %v406, 1
  %v409 = vsel %vm325, %v404, %v408
  %v411 = vshrl.u32 %v298, 16
  %v413 = vshll.u32 %v298, 16
  %v415 = vrot.slane %v413, 1
  %v416 = vor.u32 %v411, %v415
  %v418 = vshll.u32 %v315, 16
  %v420 = vrot.slane %v418, 1
  %v421 = vsel %vm325, %v416, %v420
  %v423 = vshrl.u32 %v299, 16
  %v425 = vshll.u32 %v299, 16
  %v427 = vrot.slane %v425, 1
  %v428 = vor.u32 %v423, %v427
  %v430 = vshll.u32 %v316, 16
  %v432 = vrot.slane %v430, 1
  %v433 = vsel %vm325, %v428, %v432
  %v435 = vshrl.u32 %v300, 16
  %v437 = vshll.u32 %v300, 16
  %v439 = vrot.slane %v437, 1
  %v440 = vor.u32 %v435, %v439
  %v442 = vshll.u32 %v317, 16
  %v444 = vrot.slane %v442, 1
  %v445 = vsel %vm325, %v440, %v444
  %v447 = vshrl.u32 %v301, 16
  %v449 = vshll.u32 %v301, 16
  %v451 = vrot.slane %v449, 1
  %v452 = vor.u32 %v447, %v451
  %v454 = vshll.u32 %v318, 16
  %v456 = vrot.slane %v454, 1
  %v457 = vsel %vm325, %v452, %v456
  %v459 = vshrl.u32 %v302, 16
  %v461 = vshll.u32 %v302, 16
  %v463 = vrot.slane %v461, 1
  %v464 = vor.u32 %v459, %v463
  %v466 = vshll.u32 %v319, 16
  %v468 = vrot.slane %v466, 1
  %v469 = vsel %vm325, %v464, %v468
  %v471 = vshrl.u32 %v303, 16
  %v473 = vshll.u32 %v303, 16
  %v475 = vrot.slane %v473, 1
  %v476 = vor.u32 %v471, %v475
  %v478 = vshll.u32 %v320, 16
  %v480 = vrot.slane %v478, 1
  %v481 = vsel %vm325, %v476, %v480
  %v483 = vshrl.u32 %v304, 16
  %v485 = vshll.u32 %v304, 16
  %v487 = vrot.slane %v485, 1
  %v488 = vor.u32 %v483, %v487
  %v490 = vshll.u32 %v321, 16
  %v492 = vrot.slane %v490, 1
  %v493 = vsel %vm325, %v488, %v492
  %v495 = vshrl.u32 %v305, 16
  %v497 = vshll.u32 %v305, 16
  %v499 = vrot.slane %v497, 1
  %v500 = vor.u32 %v495, %v499
  %v502 = vshll.u32 %v322, 16
  %v504 = vrot.slane %v502, 1
  %v505 = vsel %vm325, %v500, %v504
  %v507 = vshrl.u32 %v306, 16
  %v509 = vshll.u32 %v306, 16
  %v511 = vrot.slane %v509, 1
  %v512 = vor.u32 %v507, %v511
  %v514 = vshll.u32 %v323, 16
  %v516 = vrot.slane %v514, 1
  %v517 = vsel %vm325, %v512, %v516
  %vm550 = vcmask 1046528
  %v551 = vrot.slane %v291, 1
  %v552 = vrot.slane %v308, 1
  %v553 = vsel %vm550, %v551, %v552
  %v554 = vrot.slane %v292, 1
  %v555 = vrot.slane %v309, 1
  %v556 = vsel %vm550, %v554, %v555
  %v557 = vrot.slane %v293, 1
  %v558 = vrot.slane %v310, 1
  %v559 = vsel %vm550, %v557, %v558
  %v560 = vrot.slane %v294, 1
  %v561 = vrot.slane %v311, 1
  %v562 = vsel %vm550, %v560, %v561
  %v563 = vrot.slane %v295, 1
  %v564 = vrot.slane %v312, 1
  %v565 = vsel %vm550, %v563, %v564
  %v566 = vrot.slane %v296, 1
  %v567 = vrot.slane %v313, 1
  %v568 = vsel %vm550, %v566, %v567
  %v569 = vrot.slane %v297, 1
  %v570 = vrot.slane %v314, 1
  %v571 = vsel %vm550, %v569, %v570
  %v572 = vrot.slane %v298, 1
  %v573 = vrot.slane %v315, 1
  %v574 = vsel %vm550, %v572, %v573
  %v575 = vrot.slane %v299, 1
  %v576 = vrot.slane %v316, 1
  %v577 = vsel %vm550, %v575, %v576
  %v578 = vrot.slane %v300, 1
  %v579 = vrot.slane %v317, 1
  %v580 = vsel %vm550, %v578, %v579
  %v581 = vrot.slane %v301, 1
  %v582 = vrot.slane %v318, 1
  %v583 = vsel %vm550, %v581, %v582
  %v584 = vrot.slane %v302, 1
  %v585 = vrot.slane %v319, 1
  %v586 = vsel %vm550, %v584, %v585
  %v587 = vrot.slane %v303, 1
  %v588 = vrot.slane %v320, 1
  %v589 = vsel %vm550, %v587, %v588
  %v590 = vrot.slane %v304, 1
  %v591 = vrot.slane %v321, 1
  %v592 = vsel %vm550, %v590, %v591
  %v593 = vrot.slane %v305, 1
  %v594 = vrot.slane %v322, 1
  %v595 = vsel %vm550, %v593, %v594
  %v596 = vrot.slane %v306, 1
  %v597 = vrot.slane %v323, 1
  %v598 = vsel %vm550, %v596, %v597
  %599 = vrot.lane.b32.xlu0 %v337, 4
  %v600 = vpop.permute.xlu0 %599
  %601 = vrot.lane.b32.xlu0 %v349, 4
  %v602 = vpop.permute.xlu0 %601
  %603 = vrot.lane.b32.xlu0 %v361, 4
  %v604 = vpop.permute.xlu0 %603
  %605 = vrot.lane.b32.xlu0 %v373, 4
  %v606 = vpop.permute.xlu0 %605
  %607 = vrot.lane.b32.xlu0 %v385, 4
  %v608 = vpop.permute.xlu0 %607
  %609 = vrot.lane.b32.xlu0 %v397, 4
  %v610 = vpop.permute.xlu0 %609
  %611 = vrot.lane.b32.xlu0 %v409, 4
  %v612 = vpop.permute.xlu0 %611
  %613 = vrot.lane.b32.xlu0 %v421, 4
  %v614 = vpop.permute.xlu0 %613
  %615 = vrot.lane.b32.xlu0 %v433, 4
  %v616 = vpop.permute.xlu0 %615
  %617 = vrot.lane.b32.xlu0 %v445, 4
  %v618 = vpop.permute.xlu0 %617
  %619 = vrot.lane.b32.xlu0 %v457, 4
  %v620 = vpop.permute.xlu0 %619
  %621 = vrot.lane.b32.xlu0 %v469, 4
  %v622 = vpop.permute.xlu0 %621
  %623 = vrot.lane.b32.xlu0 %v481, 4
  %v624 = vpop.permute.xlu0 %623
  %625 = vrot.lane.b32.xlu0 %v493, 4
  %v626 = vpop.permute.xlu0 %625
  %627 = vrot.lane.b32.xlu0 %v505, 4
  %v628 = vpop.permute.xlu0 %627
  %629 = vrot.lane.b32.xlu0 %v517, 4
  %v630 = vpop.permute.xlu0 %629
  %631 = vrot.lane.b32.xlu0 %v553, 8
  %v632 = vpop.permute.xlu0 %631
  %633 = vrot.lane.b32.xlu0 %v556, 8
  %v634 = vpop.permute.xlu0 %633
  %635 = vrot.lane.b32.xlu0 %v559, 8
  %v636 = vpop.permute.xlu0 %635
  %637 = vrot.lane.b32.xlu0 %v562, 8
  %v638 = vpop.permute.xlu0 %637
  %639 = vrot.lane.b32.xlu0 %v565, 8
  %v640 = vpop.permute.xlu0 %639
  %641 = vrot.lane.b32.xlu0 %v568, 8
  %v642 = vpop.permute.xlu0 %641
  %643 = vrot.lane.b32.xlu0 %v571, 8
  %v644 = vpop.permute.xlu0 %643
  %645 = vrot.lane.b32.xlu0 %v574, 8
  %v646 = vpop.permute.xlu0 %645
  %647 = vrot.lane.b32.xlu0 %v577, 8
  %v648 = vpop.permute.xlu0 %647
  %649 = vrot.lane.b32.xlu0 %v580, 8
  %v650 = vpop.permute.xlu0 %649
  %651 = vrot.lane.b32.xlu0 %v583, 8
  %v652 = vpop.permute.xlu0 %651
  %653 = vrot.lane.b32.xlu0 %v586, 8
  %v654 = vpop.permute.xlu0 %653
  %655 = vrot.lane.b32.xlu0 %v589, 8
  %v656 = vpop.permute.xlu0 %655
  %657 = vrot.lane.b32.xlu0 %v592, 8
  %v658 = vpop.permute.xlu0 %657
  %659 = vrot.lane.b32.xlu0 %v595, 8
  %v660 = vpop.permute.xlu0 %659
  %661 = vrot.lane.b32.xlu0 %v598, 8
  %v662 = vpop.permute.xlu0 %661
  %vm663 = vcmask 31744
  %v665 = vsel %vm663, %v291, %v600
  %v667 = vsel %vm663, %v292, %v602
  %v669 = vsel %vm663, %v293, %v604
  %v671 = vsel %vm663, %v294, %v606
  %v673 = vsel %vm663, %v295, %v608
  %v675 = vsel %vm663, %v296, %v610
  %v677 = vsel %vm663, %v297, %v612
  %v679 = vsel %vm663, %v298, %v614
  %v681 = vsel %vm663, %v299, %v616
  %v683 = vsel %vm663, %v300, %v618
  %v685 = vsel %vm663, %v301, %v620
  %v687 = vsel %vm663, %v302, %v622
  %v689 = vsel %vm663, %v303, %v624
  %v691 = vsel %vm663, %v304, %v626
  %v693 = vsel %vm663, %v305, %v628
  %v695 = vsel %vm663, %v306, %v630
  %vm696 = vcmask 64512
  %v698 = vsel %vm696, %v665, %v632
  %v700 = vsel %vm696, %v667, %v634
  %v702 = vsel %vm696, %v669, %v636
  %v704 = vsel %vm696, %v671, %v638
  %v706 = vsel %vm696, %v673, %v640
  %v708 = vsel %vm696, %v675, %v642
  %v710 = vsel %vm696, %v677, %v644
  %v712 = vsel %vm696, %v679, %v646
  %v714 = vsel %vm696, %v681, %v648
  %v716 = vsel %vm696, %v683, %v650
  %v718 = vsel %vm696, %v685, %v652
  %v720 = vsel %vm696, %v687, %v654
  %v722 = vsel %vm696, %v689, %v656
  %v724 = vsel %vm696, %v691, %v658
  %v726 = vsel %vm696, %v693, %v660
  %v728 = vsel %vm696, %v695, %v662
  %v729 = vld [vmem:[%s3] sm:$0xf]
  %v730 = vld [vmem:[%s3 + $0x4] sm:$0x3]
  %v732 = vshrl.u32 %v307, 16
  %v734 = vshll.u32 %v307, 16
  %v736 = vrot.slane %v734, 1
  %v737 = vor.u32 %v732, %v736
  %v739 = vshll.u32 %v324, 16
  %v741 = vrot.slane %v739, 1
  %v742 = vsel %vm325, %v737, %v741
  %v745 = vrot.slane %v307, 1
  %v746 = vrot.slane %v324, 1
  %v747 = vsel %vm550, %v745, %v746
  %748 = vrot.lane.b32.xlu0 %v742, 4
  %v749 = vpop.permute.xlu0 %748
  %750 = vrot.lane.b32.xlu0 %v747, 8
  %v751 = vpop.permute.xlu0 %750
  %v753 = vsel %vm663, %v307, %v749
  %v755 = vsel %vm696, %v753, %v751
  %s756 = scalar_lea.vmem %s3, 8
  %v757 = vld [vmem:[%s756] sm:$0xf]
  %v758 = vld [vmem:[%s756 + $0x4] sm:$0x3]
  %v761 = vunpack.c.l.b16 %v757
  %v762 = vunpack.c.l.b16 %v758
  %v763 = vpack.c.b16 %v762, %v761
  %vm764 = vcmask 97280
  %v765 = vsel %vm764, %v700, 0
  %v767 = vsel %vm764, %v702, 0
  %v769 = vsel %vm764, %v704, 0
  %v771 = vsel %vm764, %v706, 0
  %v773 = vsel %vm764, %v708, 0
  %v775 = vsel %vm764, %v710, 0
  %v777 = vsel %vm764, %v712, 0
  %v779 = vsel %vm764, %v714, 0
  %v781 = vsel %vm764, %v716, 0
  %v783 = vsel %vm764, %v718, 0
  %v785 = vsel %vm764, %v720, 0
  %v787 = vsel %vm764, %v722, 0
  %v789 = vsel %vm764, %v724, 0
  %v791 = vsel %vm764, %v726, 0
  %v793 = vsel %vm764, %v728, 0
  %v795 = vsel %vm764, %v755, 0
  %vm797 = vcmask 1045504
  %v799 = vsel %vm797, %v763, 0
  %801 = vmatprep.subr.bf16.mxu0 0
  %802 = vmatpush1.bf16.msra.mxu0 0
  %803 = vmatprep.subr.bf16.mxu0 0
  %804 = vmatpush1.bf16.msra.mxu0 0
  %805 = vmatprep.subr.bf16.mxu0 0
  %806 = vmatpush1.bf16.msra.mxu0 0
  %807 = vmatprep.subr.bf16.mxu0 0
  %808 = vmatpush1.bf16.msra.mxu0 0
  %809 = vmatprep.subr.bf16.mxu0 0
  %810 = vmatpush1.bf16.msra.mxu0 0
  %811 = vmatprep.subr.bf16.mxu0 0
  %812 = vmatpush1.bf16.msra.mxu0 0
  %813 = vmatprep.subr.bf16.mxu0 0
  %814 = vmatpush1.bf16.msra.mxu0 0
  %815 = vmatprep.subr.bf16.mxu0 0
  %816 = vmatpush1.bf16.msra.mxu0 %v799
  %817 = vmatprep.subr.bf16.mxu0 0
  %818 = vmatpush2.bf16.msra.mxu0 0
  %819 = vmatprep.subr.bf16.mxu0 0
  %820 = vmatpush2.bf16.msra.mxu0 0
  %821 = vmatprep.subr.bf16.mxu0 0
  %822 = vmatpush2.bf16.msra.mxu0 0
  %823 = vmatprep.subr.bf16.mxu0 0
  %824 = vmatpush2.bf16.msra.mxu0 0
  %825 = vmatprep.subr.bf16.mxu0 0
  %826 = vmatpush2.bf16.msra.mxu0 0
  %827 = vmatprep.subr.bf16.mxu0 0
  %828 = vmatpush2.bf16.msra.mxu0 0
  %829 = vmatprep.subr.bf16.mxu0 0
  %830 = vmatpush2.bf16.msra.mxu0 0
  %831 = vmatprep.subr.bf16.mxu0 0
  %832 = vmatpush2.bf16.msra.mxu0 0
  %833 = vmatprep.mubr.bf16.mxu0 0
  %834 = vmatmul.mubr.bf16.gmra.mxu0 %v765
  %v835 = vpop.f32.mrf.mxu0
  %v836 = vadd.f32 0.0, %v835
  %v837 = vpop.f32.mrf.mxu0
  %v838 = vpop.f32.mrf.mxu0
  %v839 = vadd.f32 0.0, %v838
  %v840 = vpop.f32.mrf.mxu0
  %841 = vmatprep.mubr.bf16.mxu0 0
  %842 = vmatmul.mubr.bf16.gmra.mxu0 %v767
  %v843 = vpop.f32.mrf.mxu0
  %v844 = vadd.f32 0.0, %v843
  %v845 = vpop.f32.mrf.mxu0
  %v846 = vpop.f32.mrf.mxu0
  %v847 = vadd.f32 0.0, %v846
  %v848 = vpop.f32.mrf.mxu0
  %849 = vmatprep.mubr.bf16.mxu0 0
  %850 = vmatmul.mubr.bf16.gmra.mxu0 %v769
  %v851 = vpop.f32.mrf.mxu0
  %v852 = vadd.f32 0.0, %v851
  %v853 = vpop.f32.mrf.mxu0
  %v854 = vpop.f32.mrf.mxu0
  %v855 = vadd.f32 0.0, %v854
  %v856 = vpop.f32.mrf.mxu0
  %857 = vmatprep.mubr.bf16.mxu0 0
  %858 = vmatmul.mubr.bf16.gmra.mxu0 %v771
  %v859 = vpop.f32.mrf.mxu0
  %v860 = vadd.f32 0.0, %v859
  %v861 = vpop.f32.mrf.mxu0
  %v862 = vpop.f32.mrf.mxu0
  %v863 = vadd.f32 0.0, %v862
  %v864 = vpop.f32.mrf.mxu0
  %865 = vmatprep.mubr.bf16.mxu0 0
  %866 = vmatmul.mubr.bf16.gmra.mxu0 %v773
  %v867 = vpop.f32.mrf.mxu0
  %v868 = vadd.f32 0.0, %v867
  %v869 = vpop.f32.mrf.mxu0
  %v870 = vpop.f32.mrf.mxu0
  %v871 = vadd.f32 0.0, %v870
  %v872 = vpop.f32.mrf.mxu0
  %873 = vmatprep.mubr.bf16.mxu0 0
  %874 = vmatmul.mubr.bf16.gmra.mxu0 %v775
  %v875 = vpop.f32.mrf.mxu0
  %v876 = vadd.f32 0.0, %v875
  %v877 = vpop.f32.mrf.mxu0
  %v878 = vpop.f32.mrf.mxu0
  %v879 = vadd.f32 0.0, %v878
  %v880 = vpop.f32.mrf.mxu0
  %881 = vmatprep.mubr.bf16.mxu0 0
  %882 = vmatmul.mubr.bf16.gmra.mxu0 %v777
  %v883 = vpop.f32.mrf.mxu0
  %v884 = vadd.f32 0.0, %v883
  %v885 = vpop.f32.mrf.mxu0
  %v886 = vpop.f32.mrf.mxu0
  %v887 = vadd.f32 0.0, %v886
  %v888 = vpop.f32.mrf.mxu0
  %889 = vmatprep.mubr.bf16.mxu0 0
  %890 = vmatmul.mubr.bf16.gmra.mxu0 %v779
  %v891 = vpop.f32.mrf.mxu0
  %v892 = vadd.f32 0.0, %v891
  %v893 = vpop.f32.mrf.mxu0
  %v894 = vpop.f32.mrf.mxu0
  %v895 = vadd.f32 0.0, %v894
  %v896 = vpop.f32.mrf.mxu0
  %897 = vmatprep.mubr.bf16.mxu0 0
  %898 = vmatmul.mubr.bf16.gmra.mxu0 %v781
  %v899 = vpop.f32.mrf.mxu0
  %v900 = vadd.f32 0.0, %v899
  %v901 = vpop.f32.mrf.mxu0
  %v902 = vpop.f32.mrf.mxu0
  %v903 = vadd.f32 0.0, %v902
  %v904 = vpop.f32.mrf.mxu0
  %905 = vmatprep.mubr.bf16.mxu0 0
  %906 = vmatmul.mubr.bf16.gmra.mxu0 %v783
  %v907 = vpop.f32.mrf.mxu0
  %v908 = vadd.f32 0.0, %v907
  %v909 = vpop.f32.mrf.mxu0
  %v910 = vpop.f32.mrf.mxu0
  %v911 = vadd.f32 0.0, %v910
  %v912 = vpop.f32.mrf.mxu0
  %913 = vmatprep.mubr.bf16.mxu0 0
  %914 = vmatmul.mubr.bf16.gmra.mxu0 %v785
  %v915 = vpop.f32.mrf.mxu0
  %v916 = vadd.f32 0.0, %v915
  %v917 = vpop.f32.mrf.mxu0
  %v918 = vpop.f32.mrf.mxu0
  %v919 = vadd.f32 0.0, %v918
  %v920 = vpop.f32.mrf.mxu0
  %921 = vmatprep.mubr.bf16.mxu0 0
  %922 = vmatmul.mubr.bf16.gmra.mxu0 %v787
  %v923 = vpop.f32.mrf.mxu0
  %v924 = vadd.f32 0.0, %v923
  %v925 = vpop.f32.mrf.mxu0
  %v926 = vpop.f32.mrf.mxu0
  %v927 = vadd.f32 0.0, %v926
  %v928 = vpop.f32.mrf.mxu0
  %929 = vmatprep.mubr.bf16.mxu0 0
  %930 = vmatmul.mubr.bf16.gmra.mxu0 %v789
  %v931 = vpop.f32.mrf.mxu0
  %v932 = vadd.f32 0.0, %v931
  %v933 = vpop.f32.mrf.mxu0
  %v934 = vpop.f32.mrf.mxu0
  %v935 = vadd.f32 0.0, %v934
  %v936 = vpop.f32.mrf.mxu0
  %937 = vmatprep.mubr.bf16.mxu0 0
  %938 = vmatmul.mubr.bf16.gmra.mxu0 %v791
  %v939 = vpop.f32.mrf.mxu0
  %v940 = vadd.f32 0.0, %v939
  %v941 = vpop.f32.mrf.mxu0
  %v942 = vpop.f32.mrf.mxu0
  %v943 = vadd.f32 0.0, %v942
  %v944 = vpop.f32.mrf.mxu0
  %945 = vmatprep.mubr.bf16.mxu0 0
  %946 = vmatmul.mubr.bf16.gmra.mxu0 %v793
  %v947 = vpop.f32.mrf.mxu0
  %v948 = vadd.f32 0.0, %v947
  %v949 = vpop.f32.mrf.mxu0
  %v950 = vpop.f32.mrf.mxu0
  %v951 = vadd.f32 0.0, %v950
  %v952 = vpop.f32.mrf.mxu0
  %953 = vmatprep.mubr.bf16.mxu0 0
  %954 = vmatmul.mubr.bf16.gmra.mxu0 %v795
  %v955 = vpop.f32.mrf.mxu0
  %v956 = vadd.f32 0.0, %v955
  %v957 = vpop.f32.mrf.mxu0
  %v958 = vpop.f32.mrf.mxu0
  %v959 = vadd.f32 0.0, %v958
  %v960 = vpop.f32.mrf.mxu0
  %961 = vdwg.mxu0
  %v964 = vunpack.c.l.b16 %v729
  %v965 = vunpack.c.l.b16 %v730
  %v966 = vpack.c.b16 %v965, %v964
  %v967 = vsel %vm764, %v698, 0
  %v970 = vsel %vm797, %v966, 0
  %972 = vmatprep.subr.bf16.mxu0 0
  %973 = vmatpush1.bf16.msra.mxu0 0
  %974 = vmatprep.subr.bf16.mxu0 0
  %975 = vmatpush1.bf16.msra.mxu0 0
  %976 = vmatprep.subr.bf16.mxu0 0
  %977 = vmatpush1.bf16.msra.mxu0 0
  %978 = vmatprep.subr.bf16.mxu0 0
  %979 = vmatpush1.bf16.msra.mxu0 0
  %980 = vmatprep.subr.bf16.mxu0 0
  %981 = vmatpush1.bf16.msra.mxu0 0
  %982 = vmatprep.subr.bf16.mxu0 0
  %983 = vmatpush1.bf16.msra.mxu0 0
  %984 = vmatprep.subr.bf16.mxu0 0
  %985 = vmatpush1.bf16.msra.mxu0 0
  %986 = vmatprep.subr.bf16.mxu0 0
  %987 = vmatpush1.bf16.msra.mxu0 %v970
  %988 = vmatprep.subr.bf16.mxu0 0
  %989 = vmatpush2.bf16.msra.mxu0 0
  %990 = vmatprep.subr.bf16.mxu0 0
  %991 = vmatpush2.bf16.msra.mxu0 0
  %992 = vmatprep.subr.bf16.mxu0 0
  %993 = vmatpush2.bf16.msra.mxu0 0
  %994 = vmatprep.subr.bf16.mxu0 0
  %995 = vmatpush2.bf16.msra.mxu0 0
  %996 = vmatprep.subr.bf16.mxu0 0
  %997 = vmatpush2.bf16.msra.mxu0 0
  %998 = vmatprep.subr.bf16.mxu0 0
  %999 = vmatpush2.bf16.msra.mxu0 0
  %1000 = vmatprep.subr.bf16.mxu0 0
  %1001 = vmatpush2.bf16.msra.mxu0 0
  %1002 = vmatprep.subr.bf16.mxu0 0
  %1003 = vmatpush2.bf16.msra.mxu0 0
  %1004 = vmatprep.mubr.bf16.mxu0 0
  %1005 = vmatmul.mubr.bf16.gmra.mxu0 %v967
  %v1006 = vpop.f32.mrf.mxu0
  %v1007 = vadd.f32 %v836, %v1006
  %v1008 = vpop.f32.mrf.mxu0
  %v1009 = vpop.f32.mrf.mxu0
  %v1010 = vadd.f32 %v839, %v1009
  %v1011 = vpop.f32.mrf.mxu0
  %1012 = vmatprep.mubr.bf16.mxu0 0
  %1013 = vmatmul.mubr.bf16.gmra.mxu0 %v765
  %v1014 = vpop.f32.mrf.mxu0
  %v1015 = vadd.f32 %v844, %v1014
  %v1016 = vpop.f32.mrf.mxu0
  %v1017 = vpop.f32.mrf.mxu0
  %v1018 = vadd.f32 %v847, %v1017
  %v1019 = vpop.f32.mrf.mxu0
  %1020 = vmatprep.mubr.bf16.mxu0 0
  %1021 = vmatmul.mubr.bf16.gmra.mxu0 %v767
  %v1022 = vpop.f32.mrf.mxu0
  %v1023 = vadd.f32 %v852, %v1022
  %v1024 = vpop.f32.mrf.mxu0
  %v1025 = vpop.f32.mrf.mxu0
  %v1026 = vadd.f32 %v855, %v1025
  %v1027 = vpop.f32.mrf.mxu0
  %1028 = vmatprep.mubr.bf16.mxu0 0
  %1029 = vmatmul.mubr.bf16.gmra.mxu0 %v769
  %v1030 = vpop.f32.mrf.mxu0
  %v1031 = vadd.f32 %v860, %v1030
  %v1032 = vpop.f32.mrf.mxu0
  %v1033 = vpop.f32.mrf.mxu0
  %v1034 = vadd.f32 %v863, %v1033
  %v1035 = vpop.f32.mrf.mxu0
  %1036 = vmatprep.mubr.bf16.mxu0 0
  %1037 = vmatmul.mubr.bf16.gmra.mxu0 %v771
  %v1038 = vpop.f32.mrf.mxu0
  %v1039 = vadd.f32 %v868, %v1038
  %v1040 = vpop.f32.mrf.mxu0
  %v1041 = vpop.f32.mrf.mxu0
  %v1042 = vadd.f32 %v871, %v1041
  %v1043 = vpop.f32.mrf.mxu0
  %1044 = vmatprep.mubr.bf16.mxu0 0
  %1045 = vmatmul.mubr.bf16.gmra.mxu0 %v773
  %v1046 = vpop.f32.mrf.mxu0
  %v1047 = vadd.f32 %v876, %v1046
  %v1048 = vpop.f32.mrf.mxu0
  %v1049 = vpop.f32.mrf.mxu0
  %v1050 = vadd.f32 %v879, %v1049
  %v1051 = vpop.f32.mrf.mxu0
  %1052 = vmatprep.mubr.bf16.mxu0 0
  %1053 = vmatmul.mubr.bf16.gmra.mxu0 %v775
  %v1054 = vpop.f32.mrf.mxu0
  %v1055 = vadd.f32 %v884, %v1054
  %v1056 = vpop.f32.mrf.mxu0
  %v1057 = vpop.f32.mrf.mxu0
  %v1058 = vadd.f32 %v887, %v1057
  %v1059 = vpop.f32.mrf.mxu0
  %1060 = vmatprep.mubr.bf16.mxu0 0
  %1061 = vmatmul.mubr.bf16.gmra.mxu0 %v777
  %v1062 = vpop.f32.mrf.mxu0
  %v1063 = vadd.f32 %v892, %v1062
  %v1064 = vpop.f32.mrf.mxu0
  %v1065 = vpop.f32.mrf.mxu0
  %v1066 = vadd.f32 %v895, %v1065
  %v1067 = vpop.f32.mrf.mxu0
  %1068 = vmatprep.mubr.bf16.mxu0 0
  %1069 = vmatmul.mubr.bf16.gmra.mxu0 %v779
  %v1070 = vpop.f32.mrf.mxu0
  %v1071 = vadd.f32 %v900, %v1070
  %v1072 = vpop.f32.mrf.mxu0
  %v1073 = vpop.f32.mrf.mxu0
  %v1074 = vadd.f32 %v903, %v1073
  %v1075 = vpop.f32.mrf.mxu0
  %1076 = vmatprep.mubr.bf16.mxu0 0
  %1077 = vmatmul.mubr.bf16.gmra.mxu0 %v781
  %v1078 = vpop.f32.mrf.mxu0
  %v1079 = vadd.f32 %v908, %v1078
  %v1080 = vpop.f32.mrf.mxu0
  %v1081 = vpop.f32.mrf.mxu0
  %v1082 = vadd.f32 %v911, %v1081
  %v1083 = vpop.f32.mrf.mxu0
  %1084 = vmatprep.mubr.bf16.mxu0 0
  %1085 = vmatmul.mubr.bf16.gmra.mxu0 %v783
  %v1086 = vpop.f32.mrf.mxu0
  %v1087 = vadd.f32 %v916, %v1086
  %v1088 = vpop.f32.mrf.mxu0
  %v1089 = vpop.f32.mrf.mxu0
  %v1090 = vadd.f32 %v919, %v1089
  %v1091 = vpop.f32.mrf.mxu0
  %1092 = vmatprep.mubr.bf16.mxu0 0
  %1093 = vmatmul.mubr.bf16.gmra.mxu0 %v785
  %v1094 = vpop.f32.mrf.mxu0
  %v1095 = vadd.f32 %v924, %v1094
  %v1096 = vpop.f32.mrf.mxu0
  %v1097 = vpop.f32.mrf.mxu0
  %v1098 = vadd.f32 %v927, %v1097
  %v1099 = vpop.f32.mrf.mxu0
  %1100 = vmatprep.mubr.bf16.mxu0 0
  %1101 = vmatmul.mubr.bf16.gmra.mxu0 %v787
  %v1102 = vpop.f32.mrf.mxu0
  %v1103 = vadd.f32 %v932, %v1102
  %v1104 = vpop.f32.mrf.mxu0
  %v1105 = vpop.f32.mrf.mxu0
  %v1106 = vadd.f32 %v935, %v1105
  %v1107 = vpop.f32.mrf.mxu0
  %1108 = vmatprep.mubr.bf16.mxu0 0
  %1109 = vmatmul.mubr.bf16.gmra.mxu0 %v789
  %v1110 = vpop.f32.mrf.mxu0
  %v1111 = vadd.f32 %v940, %v1110
  %v1112 = vpop.f32.mrf.mxu0
  %v1113 = vpop.f32.mrf.mxu0
  %v1114 = vadd.f32 %v943, %v1113
  %v1115 = vpop.f32.mrf.mxu0
  %1116 = vmatprep.mubr.bf16.mxu0 0
  %1117 = vmatmul.mubr.bf16.gmra.mxu0 %v791
  %v1118 = vpop.f32.mrf.mxu0
  %v1119 = vadd.f32 %v948, %v1118
  %v1120 = vpop.f32.mrf.mxu0
  %v1121 = vpop.f32.mrf.mxu0
  %v1122 = vadd.f32 %v951, %v1121
  %v1123 = vpop.f32.mrf.mxu0
  %1124 = vmatprep.mubr.bf16.mxu0 0
  %1125 = vmatmul.mubr.bf16.gmra.mxu0 %v793
  %v1126 = vpop.f32.mrf.mxu0
  %v1127 = vadd.f32 %v956, %v1126
  %v1128 = vpop.f32.mrf.mxu0
  %v1129 = vpop.f32.mrf.mxu0
  %v1130 = vadd.f32 %v959, %v1129
  %v1131 = vpop.f32.mrf.mxu0
  %1132 = vdwg.mxu0
  %s1133 = scalar_lea.vmem %s3, 16
  %v1134 = vld [vmem:[%s1133] sm:$0xf]
  %v1135 = vld [vmem:[%s1133 + $0x4] sm:$0x3]
  %v1138 = vunpack.c.l.b16 %v1134
  %v1139 = vunpack.c.l.b16 %v1135
  %v1140 = vpack.c.b16 %v1139, %v1138
  %v1142 = vsel %vm797, %v1140, 0
  %1144 = vmatprep.subr.bf16.mxu0 0
  %1145 = vmatpush1.bf16.msra.mxu0 0
  %1146 = vmatprep.subr.bf16.mxu0 0
  %1147 = vmatpush1.bf16.msra.mxu0 0
  %1148 = vmatprep.subr.bf16.mxu0 0
  %1149 = vmatpush1.bf16.msra.mxu0 0
  %1150 = vmatprep.subr.bf16.mxu0 0
  %1151 = vmatpush1.bf16.msra.mxu0 0
  %1152 = vmatprep.subr.bf16.mxu0 0
  %1153 = vmatpush1.bf16.msra.mxu0 0
  %1154 = vmatprep.subr.bf16.mxu0 0
  %1155 = vmatpush1.bf16.msra.mxu0 0
  %1156 = vmatprep.subr.bf16.mxu0 0
  %1157 = vmatpush1.bf16.msra.mxu0 0
  %1158 = vmatprep.subr.bf16.mxu0 0
  %1159 = vmatpush1.bf16.msra.mxu0 %v1142
  %1160 = vmatprep.subr.bf16.mxu0 0
  %1161 = vmatpush2.bf16.msra.mxu0 0
  %1162 = vmatprep.subr.bf16.mxu0 0
  %1163 = vmatpush2.bf16.msra.mxu0 0
  %1164 = vmatprep.subr.bf16.mxu0 0
  %1165 = vmatpush2.bf16.msra.mxu0 0
  %1166 = vmatprep.subr.bf16.mxu0 0
  %1167 = vmatpush2.bf16.msra.mxu0 0
  %1168 = vmatprep.subr.bf16.mxu0 0
  %1169 = vmatpush2.bf16.msra.mxu0 0
  %1170 = vmatprep.subr.bf16.mxu0 0
  %1171 = vmatpush2.bf16.msra.mxu0 0
  %1172 = vmatprep.subr.bf16.mxu0 0
  %1173 = vmatpush2.bf16.msra.mxu0 0
  %1174 = vmatprep.subr.bf16.mxu0 0
  %1175 = vmatpush2.bf16.msra.mxu0 0
  %1176 = vmatprep.mubr.bf16.mxu0 0
  %1177 = vmatmul.mubr.bf16.gmra.mxu0 %v767
  %v1178 = vpop.f32.mrf.mxu0
  %v1179 = vadd.f32 0.0, %v1178
  %v1180 = vpop.f32.mrf.mxu0
  %v1181 = vpop.f32.mrf.mxu0
  %v1182 = vadd.f32 0.0, %v1181
  %v1183 = vpop.f32.mrf.mxu0
  %1184 = vmatprep.mubr.bf16.mxu0 0
  %1185 = vmatmul.mubr.bf16.gmra.mxu0 %v769
  %v1186 = vpop.f32.mrf.mxu0
  %v1187 = vadd.f32 0.0, %v1186
  %v1188 = vpop.f32.mrf.mxu0
  %v1189 = vpop.f32.mrf.mxu0
  %v1190 = vadd.f32 0.0, %v1189
  %v1191 = vpop.f32.mrf.mxu0
  %1192 = vmatprep.mubr.bf16.mxu0 0
  %1193 = vmatmul.mubr.bf16.gmra.mxu0 %v771
  %v1194 = vpop.f32.mrf.mxu0
  %v1195 = vadd.f32 0.0, %v1194
  %v1196 = vpop.f32.mrf.mxu0
  %v1197 = vpop.f32.mrf.mxu0
  %v1198 = vadd.f32 0.0, %v1197
  %v1199 = vpop.f32.mrf.mxu0
  %1200 = vmatprep.mubr.bf16.mxu0 0
  %1201 = vmatmul.mubr.bf16.gmra.mxu0 %v773
  %v1202 = vpop.f32.mrf.mxu0
  %v1203 = vadd.f32 0.0, %v1202
  %v1204 = vpop.f32.mrf.mxu0
  %v1205 = vpop.f32.mrf.mxu0
  %v1206 = vadd.f32 0.0, %v1205
  %v1207 = vpop.f32.mrf.mxu0
  %1208 = vmatprep.mubr.bf16.mxu0 0
  %1209 = vmatmul.mubr.bf16.gmra.mxu0 %v775
  %v1210 = vpop.f32.mrf.mxu0
  %v1211 = vadd.f32 0.0, %v1210
  %v1212 = vpop.f32.mrf.mxu0
  %v1213 = vpop.f32.mrf.mxu0
  %v1214 = vadd.f32 0.0, %v1213
  %v1215 = vpop.f32.mrf.mxu0
  %1216 = vmatprep.mubr.bf16.mxu0 0
  %1217 = vmatmul.mubr.bf16.gmra.mxu0 %v777
  %v1218 = vpop.f32.mrf.mxu0
  %v1219 = vadd.f32 0.0, %v1218
  %v1220 = vpop.f32.mrf.mxu0
  %v1221 = vpop.f32.mrf.mxu0
  %v1222 = vadd.f32 0.0, %v1221
  %v1223 = vpop.f32.mrf.mxu0
  %1224 = vmatprep.mubr.bf16.mxu0 0
  %1225 = vmatmul.mubr.bf16.gmra.mxu0 %v779
  %v1226 = vpop.f32.mrf.mxu0
  %v1227 = vadd.f32 0.0, %v1226
  %v1228 = vpop.f32.mrf.mxu0
  %v1229 = vpop.f32.mrf.mxu0
  %v1230 = vadd.f32 0.0, %v1229
  %v1231 = vpop.f32.mrf.mxu0
  %1232 = vmatprep.mubr.bf16.mxu0 0
  %1233 = vmatmul.mubr.bf16.gmra.mxu0 %v781
  %v1234 = vpop.f32.mrf.mxu0
  %v1235 = vadd.f32 0.0, %v1234
  %v1236 = vpop.f32.mrf.mxu0
  %v1237 = vpop.f32.mrf.mxu0
  %v1238 = vadd.f32 0.0, %v1237
  %v1239 = vpop.f32.mrf.mxu0
  %1240 = vmatprep.mubr.bf16.mxu0 0
  %1241 = vmatmul.mubr.bf16.gmra.mxu0 %v783
  %v1242 = vpop.f32.mrf.mxu0
  %v1243 = vadd.f32 0.0, %v1242
  %v1244 = vpop.f32.mrf.mxu0
  %v1245 = vpop.f32.mrf.mxu0
  %v1246 = vadd.f32 0.0, %v1245
  %v1247 = vpop.f32.mrf.mxu0
  %1248 = vmatprep.mubr.bf16.mxu0 0
  %1249 = vmatmul.mubr.bf16.gmra.mxu0 %v785
  %v1250 = vpop.f32.mrf.mxu0
  %v1251 = vadd.f32 0.0, %v1250
  %v1252 = vpop.f32.mrf.mxu0
  %v1253 = vpop.f32.mrf.mxu0
  %v1254 = vadd.f32 0.0, %v1253
  %v1255 = vpop.f32.mrf.mxu0
  %1256 = vmatprep.mubr.bf16.mxu0 0
  %1257 = vmatmul.mubr.bf16.gmra.mxu0 %v787
  %v1258 = vpop.f32.mrf.mxu0
  %v1259 = vadd.f32 0.0, %v1258
  %v1260 = vpop.f32.mrf.mxu0
  %v1261 = vpop.f32.mrf.mxu0
  %v1262 = vadd.f32 0.0, %v1261
  %v1263 = vpop.f32.mrf.mxu0
  %1264 = vmatprep.mubr.bf16.mxu0 0
  %1265 = vmatmul.mubr.bf16.gmra.mxu0 %v789
  %v1266 = vpop.f32.mrf.mxu0
  %v1267 = vadd.f32 0.0, %v1266
  %v1268 = vpop.f32.mrf.mxu0
  %v1269 = vpop.f32.mrf.mxu0
  %v1270 = vadd.f32 0.0, %v1269
  %v1271 = vpop.f32.mrf.mxu0
  %1272 = vmatprep.mubr.bf16.mxu0 0
  %1273 = vmatmul.mubr.bf16.gmra.mxu0 %v791
  %v1274 = vpop.f32.mrf.mxu0
  %v1275 = vadd.f32 0.0, %v1274
  %v1276 = vpop.f32.mrf.mxu0
  %v1277 = vpop.f32.mrf.mxu0
  %v1278 = vadd.f32 0.0, %v1277
  %v1279 = vpop.f32.mrf.mxu0
  %1280 = vmatprep.mubr.bf16.mxu0 0
  %1281 = vmatmul.mubr.bf16.gmra.mxu0 %v793
  %v1282 = vpop.f32.mrf.mxu0
  %v1283 = vadd.f32 0.0, %v1282
  %v1284 = vpop.f32.mrf.mxu0
  %v1285 = vpop.f32.mrf.mxu0
  %v1286 = vadd.f32 0.0, %v1285
  %v1287 = vpop.f32.mrf.mxu0
  %1288 = vmatprep.mubr.bf16.mxu0 0
  %1289 = vmatmul.mubr.bf16.gmra.mxu0 %v795
  %v1290 = vpop.f32.mrf.mxu0
  %v1291 = vadd.f32 0.0, %v1290
  %v1292 = vpop.f32.mrf.mxu0
  %v1293 = vpop.f32.mrf.mxu0
  %v1294 = vadd.f32 0.0, %v1293
  %v1295 = vpop.f32.mrf.mxu0
  %1296 = vmatprep.mubr.bf16.mxu0 0
  %1297 = vmatmul.mubr.bf16.gmra.mxu0 %v967
  %v1298 = vpop.f32.mrf.mxu0
  %v1299 = vadd.f32 0.0, %v1298
  %v1300 = vpop.f32.mrf.mxu0
  %v1301 = vpop.f32.mrf.mxu0
  %v1302 = vadd.f32 0.0, %v1301
  %v1303 = vpop.f32.mrf.mxu0
  %1304 = vdwg.mxu0
  %v1305 = vadd.f32 %v1007, %v1179
  %v1306 = vadd.f32 %v1010, %v1182
  %v1307 = vadd.f32 %v1015, %v1187
  %v1308 = vadd.f32 %v1018, %v1190
  %v1309 = vadd.f32 %v1023, %v1195
  %v1310 = vadd.f32 %v1026, %v1198
  %v1311 = vadd.f32 %v1031, %v1203
  %v1312 = vadd.f32 %v1034, %v1206
  %v1313 = vadd.f32 %v1039, %v1211
  %v1314 = vadd.f32 %v1042, %v1214
  %v1315 = vadd.f32 %v1047, %v1219
  %v1316 = vadd.f32 %v1050, %v1222
  %v1317 = vadd.f32 %v1055, %v1227
  %v1318 = vadd.f32 %v1058, %v1230
  %v1319 = vadd.f32 %v1063, %v1235
  %v1320 = vadd.f32 %v1066, %v1238
  %v1321 = vadd.f32 %v1071, %v1243
  %v1322 = vadd.f32 %v1074, %v1246
  %v1323 = vadd.f32 %v1079, %v1251
  %v1324 = vadd.f32 %v1082, %v1254
  %v1325 = vadd.f32 %v1087, %v1259
  %v1326 = vadd.f32 %v1090, %v1262
  %v1327 = vadd.f32 %v1095, %v1267
  %v1328 = vadd.f32 %v1098, %v1270
  %v1329 = vadd.f32 %v1103, %v1275
  %v1330 = vadd.f32 %v1106, %v1278
  %v1331 = vadd.f32 %v1111, %v1283
  %v1332 = vadd.f32 %v1114, %v1286
  %v1333 = vadd.f32 %v1119, %v1291
  %v1334 = vadd.f32 %v1122, %v1294
  %v1335 = vadd.f32 %v1127, %v1299
  %v1336 = vadd.f32 %v1130, %v1302
  %v1337 = vsel %vm663, %v1305, 0.0
  %v1338 = vsel %vm663, %v1306, 0.0
  %v1339 = vadd.f32 %v1337, %v1338
  %v1340 = vsel %vm663, %v1307, 0.0
  %v1341 = vadd.f32 %v1339, %v1340
  %v1342 = vsel %vm663, %v1308, 0.0
  %v1343 = vadd.f32 %v1341, %v1342
  %v1344 = vsel %vm663, %v1309, 0.0
  %v1345 = vadd.f32 %v1343, %v1344
  %v1346 = vsel %vm663, %v1310, 0.0
  %v1347 = vadd.f32 %v1345, %v1346
  %v1348 = vsel %vm663, %v1311, 0.0
  %v1349 = vadd.f32 %v1347, %v1348
  %v1350 = vsel %vm663, %v1312, 0.0
  %v1351 = vadd.f32 %v1349, %v1350
  %v1352 = vsel %vm663, %v1313, 0.0
  %v1353 = vadd.f32 %v1351, %v1352
  %v1354 = vsel %vm663, %v1314, 0.0
  %v1355 = vadd.f32 %v1353, %v1354
  %v1356 = vsel %vm663, %v1315, 0.0
  %v1357 = vadd.f32 %v1355, %v1356
  %v1358 = vsel %vm663, %v1316, 0.0
  %v1359 = vadd.f32 %v1357, %v1358
  %v1360 = vsel %vm663, %v1317, 0.0
  %v1361 = vadd.f32 %v1359, %v1360
  %v1362 = vsel %vm663, %v1318, 0.0
  %v1363 = vadd.f32 %v1361, %v1362
  %v1364 = vsel %vm663, %v1319, 0.0
  %v1365 = vadd.f32 %v1363, %v1364
  %v1366 = vsel %vm663, %v1320, 0.0
  %v1367 = vadd.f32 %v1365, %v1366
  %v1368 = vsel %vm663, %v1321, 0.0
  %v1369 = vadd.f32 %v1367, %v1368
  %v1370 = vsel %vm663, %v1322, 0.0
  %v1371 = vadd.f32 %v1369, %v1370
  %v1372 = vsel %vm663, %v1323, 0.0
  %v1373 = vadd.f32 %v1371, %v1372
  %v1374 = vsel %vm663, %v1324, 0.0
  %v1375 = vadd.f32 %v1373, %v1374
  %v1376 = vsel %vm663, %v1325, 0.0
  %v1377 = vadd.f32 %v1375, %v1376
  %v1378 = vsel %vm663, %v1326, 0.0
  %v1379 = vadd.f32 %v1377, %v1378
  %v1380 = vsel %vm663, %v1327, 0.0
  %v1381 = vadd.f32 %v1379, %v1380
  %v1382 = vsel %vm663, %v1328, 0.0
  %v1383 = vadd.f32 %v1381, %v1382
  %v1384 = vsel %vm663, %v1329, 0.0
  %v1385 = vadd.f32 %v1383, %v1384
  %v1386 = vsel %vm663, %v1330, 0.0
  %v1387 = vadd.f32 %v1385, %v1386
  %v1388 = vsel %vm663, %v1331, 0.0
  %v1389 = vadd.f32 %v1387, %v1388
  %v1390 = vsel %vm663, %v1332, 0.0
  %v1391 = vadd.f32 %v1389, %v1390
  %v1392 = vsel %vm663, %v1333, 0.0
  %v1393 = vadd.f32 %v1391, %v1392
  %v1394 = vsel %vm663, %v1334, 0.0
  %v1395 = vadd.f32 %v1393, %v1394
  %v1396 = vsel %vm663, %v1335, 0.0
  %v1397 = vadd.f32 %v1395, %v1396
  %v1398 = vsel %vm663, %v1336, 0.0
  %v1399 = vadd.f32 %v1397, %v1398
  %v1400 = vrot.slane %v1399, 4
  %v1401 = vadd.f32 %v1399, %v1400
  %v1402 = vrot.slane %v1401, 2
  %v1403 = vadd.f32 %v1401, %v1402
  %v1404 = vrot.slane %v1403, 1
  %v1405 = vadd.f32 %v1403, %v1404
  %v1406 = vadd.f32 %v1405, 0.0
  %v1407 = vmul.f32 %v1305, %v1305
  %v1408 = vmul.f32 %v1306, %v1306
  %v1409 = vmul.f32 %v1307, %v1307
  %v1410 = vmul.f32 %v1308, %v1308
  %v1411 = vmul.f32 %v1309, %v1309
  %v1412 = vmul.f32 %v1310, %v1310
  %v1413 = vmul.f32 %v1311, %v1311
  %v1414 = vmul.f32 %v1312, %v1312
  %v1415 = vmul.f32 %v1313, %v1313
  %v1416 = vmul.f32 %v1314, %v1314
  %v1417 = vmul.f32 %v1315, %v1315
  %v1418 = vmul.f32 %v1316, %v1316
  %v1419 = vmul.f32 %v1317, %v1317
  %v1420 = vmul.f32 %v1318, %v1318
  %v1421 = vmul.f32 %v1319, %v1319
  %v1422 = vmul.f32 %v1320, %v1320
  %v1423 = vmul.f32 %v1321, %v1321
  %v1424 = vmul.f32 %v1322, %v1322
  %v1425 = vmul.f32 %v1323, %v1323
  %v1426 = vmul.f32 %v1324, %v1324
  %v1427 = vmul.f32 %v1325, %v1325
  %v1428 = vmul.f32 %v1326, %v1326
  %v1429 = vmul.f32 %v1327, %v1327
  %v1430 = vmul.f32 %v1328, %v1328
  %v1431 = vmul.f32 %v1329, %v1329
  %v1432 = vmul.f32 %v1330, %v1330
  %v1433 = vmul.f32 %v1331, %v1331
  %v1434 = vmul.f32 %v1332, %v1332
  %v1435 = vmul.f32 %v1333, %v1333
  %v1436 = vmul.f32 %v1334, %v1334
  %v1437 = vmul.f32 %v1335, %v1335
  %v1438 = vmul.f32 %v1336, %v1336
  %v1439 = vsel %vm663, %v1407, 0.0
  %v1440 = vsel %vm663, %v1408, 0.0
  %v1441 = vadd.f32 %v1439, %v1440
  %v1442 = vsel %vm663, %v1409, 0.0
  %v1443 = vadd.f32 %v1441, %v1442
  %v1444 = vsel %vm663, %v1410, 0.0
  %v1445 = vadd.f32 %v1443, %v1444
  %v1446 = vsel %vm663, %v1411, 0.0
  %v1447 = vadd.f32 %v1445, %v1446
  %v1448 = vsel %vm663, %v1412, 0.0
  %v1449 = vadd.f32 %v1447, %v1448
  %v1450 = vsel %vm663, %v1413, 0.0
  %v1451 = vadd.f32 %v1449, %v1450
  %v1452 = vsel %vm663, %v1414, 0.0
  %v1453 = vadd.f32 %v1451, %v1452
  %v1454 = vsel %vm663, %v1415, 0.0
  %v1455 = vadd.f32 %v1453, %v1454
  %v1456 = vsel %vm663, %v1416, 0.0
  %v1457 = vadd.f32 %v1455, %v1456
  %v1458 = vsel %vm663, %v1417, 0.0
  %v1459 = vadd.f32 %v1457, %v1458
  %v1460 = vsel %vm663, %v1418, 0.0
  %v1461 = vadd.f32 %v1459, %v1460
  %v1462 = vsel %vm663, %v1419, 0.0
  %v1463 = vadd.f32 %v1461, %v1462
  %v1464 = vsel %vm663, %v1420, 0.0
  %v1465 = vadd.f32 %v1463, %v1464
  %v1466 = vsel %vm663, %v1421, 0.0
  %v1467 = vadd.f32 %v1465, %v1466
  %v1468 = vsel %vm663, %v1422, 0.0
  %v1469 = vadd.f32 %v1467, %v1468
  %v1470 = vsel %vm663, %v1423, 0.0
  %v1471 = vadd.f32 %v1469, %v1470
  %v1472 = vsel %vm663, %v1424, 0.0
  %v1473 = vadd.f32 %v1471, %v1472
  %v1474 = vsel %vm663, %v1425, 0.0
  %v1475 = vadd.f32 %v1473, %v1474
  %v1476 = vsel %vm663, %v1426, 0.0
  %v1477 = vadd.f32 %v1475, %v1476
  %v1478 = vsel %vm663, %v1427, 0.0
  %v1479 = vadd.f32 %v1477, %v1478
  %v1480 = vsel %vm663, %v1428, 0.0
  %v1481 = vadd.f32 %v1479, %v1480
  %v1482 = vsel %vm663, %v1429, 0.0
  %v1483 = vadd.f32 %v1481, %v1482
  %v1484 = vsel %vm663, %v1430, 0.0
  %v1485 = vadd.f32 %v1483, %v1484
  %v1486 = vsel %vm663, %v1431, 0.0
  %v1487 = vadd.f32 %v1485, %v1486
  %v1488 = vsel %vm663, %v1432, 0.0
  %v1489 = vadd.f32 %v1487, %v1488
  %v1490 = vsel %vm663, %v1433, 0.0
  %v1491 = vadd.f32 %v1489, %v1490
  %v1492 = vsel %vm663, %v1434, 0.0
  %v1493 = vadd.f32 %v1491, %v1492
  %v1494 = vsel %vm663, %v1435, 0.0
  %v1495 = vadd.f32 %v1493, %v1494
  %v1496 = vsel %vm663, %v1436, 0.0
  %v1497 = vadd.f32 %v1495, %v1496
  %v1498 = vsel %vm663, %v1437, 0.0
  %v1499 = vadd.f32 %v1497, %v1498
  %v1500 = vsel %vm663, %v1438, 0.0
  %v1501 = vadd.f32 %v1499, %v1500
  %v1502 = vrot.slane %v1501, 4
  %v1503 = vadd.f32 %v1501, %v1502
  %v1504 = vrot.slane %v1503, 2
  %v1505 = vadd.f32 %v1503, %v1504
  %v1506 = vrot.slane %v1505, 1
  %v1507 = vadd.f32 %v1505, %v1506
  %v1508 = vadd.f32 %v1507, 0.0
  %1509 = vxpose.xlu0.b32.start [1/16] %v1305, 128
  %1510 = vxpose.xlu0.b32.cont [2/16] %v1306, 128
  %1511 = vxpose.xlu0.b32.cont [3/16] %v1307, 128
  %1512 = vxpose.xlu0.b32.cont [4/16] %v1308, 128
  %1513 = vxpose.xlu0.b32.cont [5/16] %v1309, 128
  %1514 = vxpose.xlu0.b32.cont [6/16] %v1310, 128
  %1515 = vxpose.xlu0.b32.cont [7/16] %v1311, 128
  %1516 = vxpose.xlu0.b32.cont [8/16] %v1312, 128
  %1517 = vxpose.xlu0.b32.cont [9/16] %v1313, 128
  %1518 = vxpose.xlu0.b32.cont [10/16] %v1314, 128
  %1519 = vxpose.xlu0.b32.cont [11/16] %v1315, 128
  %1520 = vxpose.xlu0.b32.cont [12/16] %v1316, 128
  %1521 = vxpose.xlu0.b32.cont [13/16] %v1317, 128
  %1522 = vxpose.xlu0.b32.cont [14/16] %v1318, 128
  %1523 = vxpose.xlu0.b32.cont [15/16] %v1319, 128
  %1524 = vxpose.xlu0.b32.end [16/16] %v1320, 128
  %v1525 = vpop.trf.xlu0
  %v1526 = vpop.trf.xlu0
  %v1527 = vpop.trf.xlu0
  %v1528 = vpop.trf.xlu0
  %v1529 = vpop.trf.xlu0
  %v1530 = vpop.trf.xlu0
  %v1531 = vpop.trf.xlu0
  %v1532 = vpop.trf.xlu0
  %v1533 = vpop.trf.xlu0
  %v1534 = vpop.trf.xlu0
  %v1535 = vpop.trf.xlu0
  %v1536 = vpop.trf.xlu0
  %v1537 = vpop.trf.xlu0
  %v1538 = vpop.trf.xlu0
  %v1539 = vpop.trf.xlu0
  %v1540 = vpop.trf.xlu0
  %1541 = vxpose.xlu0.b32.start [1/16] %v1321, 128
  %1542 = vxpose.xlu0.b32.cont [2/16] %v1322, 128
  %1543 = vxpose.xlu0.b32.cont [3/16] %v1323, 128
  %1544 = vxpose.xlu0.b32.cont [4/16] %v1324, 128
  %1545 = vxpose.xlu0.b32.cont [5/16] %v1325, 128
  %1546 = vxpose.xlu0.b32.cont [6/16] %v1326, 128
  %1547 = vxpose.xlu0.b32.cont [7/16] %v1327, 128
  %1548 = vxpose.xlu0.b32.cont [8/16] %v1328, 128
  %1549 = vxpose.xlu0.b32.cont [9/16] %v1329, 128
  %1550 = vxpose.xlu0.b32.cont [10/16] %v1330, 128
  %1551 = vxpose.xlu0.b32.cont [11/16] %v1331, 128
  %1552 = vxpose.xlu0.b32.cont [12/16] %v1332, 128
  %1553 = vxpose.xlu0.b32.cont [13/16] %v1333, 128
  %1554 = vxpose.xlu0.b32.cont [14/16] %v1334, 128
  %1555 = vxpose.xlu0.b32.cont [15/16] %v1335, 128
  %1556 = vxpose.xlu0.b32.end [16/16] %v1336, 128
  %v1557 = vpop.trf.xlu0
  %v1558 = vpop.trf.xlu0
  %v1559 = vpop.trf.xlu0
  %v1560 = vpop.trf.xlu0
  %v1561 = vpop.trf.xlu0
  %v1562 = vpop.trf.xlu0
  %v1563 = vpop.trf.xlu0
  %v1564 = vpop.trf.xlu0
  %v1565 = vpop.trf.xlu0
  %v1566 = vpop.trf.xlu0
  %v1567 = vpop.trf.xlu0
  %v1568 = vpop.trf.xlu0
  %v1569 = vpop.trf.xlu0
  %v1570 = vpop.trf.xlu0
  %v1571 = vpop.trf.xlu0
  %v1572 = vpop.trf.xlu0
  %v1573 = vpack.c.bf16 %v1525, %v1525
  %v1574 = vpack.c.bf16 %v1557, %v1557
  %v1577 = vcombine.low %v1573, %v1574
  %v1579 = vunpack.c.l.s4 1983009808
  %v1580 = vunpack.c.0.s8 %v1579
  %v1581 = vlaneseq
  %v1582 = vshrl.u32 %v1581, 7
  %v1583 = vsub.s32 %v1580, %v1582
  %v1584 = vrot.slane %v1577, %v1583
  %1586 = vst [vmem:[%s4] sm:$0xf] %v1584
  %s1587 = scalar_lea.vmem %s0, 4
  %v1588 = vld [vmem:[%s1587] sm:$0xf]
  %v1589 = vunpack.c.l.bf16 %v1588
  %v1590 = vmul.f32 %v1589, %v35
  %v1591 = vadd.f32 %v1590, %v48
  %v1592 = vmax.f32 %v1591, 0.0
  %v1594 = vcombine.high %v1592, %v1592
  %1596 = vxpose.xlu0.b32.start [1/16] %v1592, 128
  %1597 = vxpose.xlu0.b32.cont [2/16] 0.0, 128
  %1598 = vxpose.xlu0.b32.cont [3/16] 0.0, 128
  %1599 = vxpose.xlu0.b32.cont [4/16] 0.0, 128
  %1600 = vxpose.xlu0.b32.cont [5/16] 0.0, 128
  %1601 = vxpose.xlu0.b32.cont [6/16] 0.0, 128
  %1602 = vxpose.xlu0.b32.cont [7/16] 0.0, 128
  %1603 = vxpose.xlu0.b32.cont [8/16] 0.0, 128
  %1604 = vxpose.xlu0.b32.cont [9/16] 0.0, 128
  %1605 = vxpose.xlu0.b32.cont [10/16] 0.0, 128
  %1606 = vxpose.xlu0.b32.cont [11/16] 0.0, 128
  %1607 = vxpose.xlu0.b32.cont [12/16] 0.0, 128
  %1608 = vxpose.xlu0.b32.cont [13/16] 0.0, 128
  %1609 = vxpose.xlu0.b32.cont [14/16] 0.0, 128
  %1610 = vxpose.xlu0.b32.cont [15/16] 0.0, 128
  %1611 = vxpose.xlu0.b32.end [16/16] 0.0, 128
  %v1612 = vpop.trf.xlu0
  %v1613 = vpop.trf.xlu0
  %v1614 = vpop.trf.xlu0
  %v1615 = vpop.trf.xlu0
  %v1616 = vpop.trf.xlu0
  %v1617 = vpop.trf.xlu0
  %v1618 = vpop.trf.xlu0
  %v1619 = vpop.trf.xlu0
  %v1620 = vpop.trf.xlu0
  %v1621 = vpop.trf.xlu0
  %v1622 = vpop.trf.xlu0
  %v1623 = vpop.trf.xlu0
  %v1624 = vpop.trf.xlu0
  %v1625 = vpop.trf.xlu0
  %v1626 = vpop.trf.xlu0
  %v1627 = vpop.trf.xlu0
  %1628 = vxpose.xlu0.b32.start [1/16] %v1594, 128
  %1629 = vxpose.xlu0.b32.cont [2/16] 0.0, 128
  %1630 = vxpose.xlu0.b32.cont [3/16] 0.0, 128
  %1631 = vxpose.xlu0.b32.cont [4/16] 0.0, 128
  %1632 = vxpose.xlu0.b32.cont [5/16] 0.0, 128
  %1633 = vxpose.xlu0.b32.cont [6/16] 0.0, 128
  %1634 = vxpose.xlu0.b32.cont [7/16] 0.0, 128
  %1635 = vxpose.xlu0.b32.cont [8/16] 0.0, 128
  %1636 = vxpose.xlu0.b32.cont [9/16] 0.0, 128
  %1637 = vxpose.xlu0.b32.cont [10/16] 0.0, 128
  %1638 = vxpose.xlu0.b32.cont [11/16] 0.0, 128
  %1639 = vxpose.xlu0.b32.cont [12/16] 0.0, 128
  %1640 = vxpose.xlu0.b32.cont [13/16] 0.0, 128
  %1641 = vxpose.xlu0.b32.cont [14/16] 0.0, 128
  %1642 = vxpose.xlu0.b32.cont [15/16] 0.0, 128
  %1643 = vxpose.xlu0.b32.end [16/16] 0.0, 128
  %v1644 = vpop.trf.xlu0
  %v1645 = vpop.trf.xlu0
  %v1646 = vpop.trf.xlu0
  %v1647 = vpop.trf.xlu0
  %v1648 = vpop.trf.xlu0
  %v1649 = vpop.trf.xlu0
  %v1650 = vpop.trf.xlu0
  %v1651 = vpop.trf.xlu0
  %v1652 = vpop.trf.xlu0
  %v1653 = vpop.trf.xlu0
  %v1654 = vpop.trf.xlu0
  %v1655 = vpop.trf.xlu0
  %v1656 = vpop.trf.xlu0
  %v1657 = vpop.trf.xlu0
  %v1658 = vpop.trf.xlu0
  %v1659 = vpop.trf.xlu0
  %v1660 = vpack.c.bf16 %v1613, %v1612
  %v1661 = vpack.c.bf16 %v1615, %v1614
  %v1662 = vpack.c.bf16 %v1617, %v1616
  %v1663 = vpack.c.bf16 %v1619, %v1618
  %v1664 = vpack.c.bf16 %v1621, %v1620
  %v1665 = vpack.c.bf16 %v1623, %v1622
  %v1666 = vpack.c.bf16 %v1625, %v1624
  %v1667 = vpack.c.bf16 %v1627, %v1626
  %v1668 = vpack.c.bf16 %v1645, %v1644
  %v1669 = vpack.c.bf16 %v1647, %v1646
  %v1670 = vpack.c.bf16 %v1649, %v1648
  %v1671 = vpack.c.bf16 %v1651, %v1650
  %v1672 = vpack.c.bf16 %v1653, %v1652
  %v1673 = vpack.c.bf16 %v1655, %v1654
  %v1674 = vpack.c.bf16 %v1657, %v1656
  %v1675 = vpack.c.bf16 %v1659, %v1658
  %v1677 = vshrl.u32 %v1660, 16
  %v1679 = vrot.slane %v1677, 7
  %v1680 = vshll.u32 %v1660, 16
  %v1682 = vor.u32 %v1679, %v1680
  %v1684 = vshrl.u32 %v1661, 16
  %v1686 = vrot.slane %v1684, 7
  %v1687 = vshll.u32 %v1661, 16
  %v1689 = vor.u32 %v1686, %v1687
  %v1691 = vshrl.u32 %v1662, 16
  %v1693 = vrot.slane %v1691, 7
  %v1694 = vshll.u32 %v1662, 16
  %v1696 = vor.u32 %v1693, %v1694
  %v1698 = vshrl.u32 %v1663, 16
  %v1700 = vrot.slane %v1698, 7
  %v1701 = vshll.u32 %v1663, 16
  %v1703 = vor.u32 %v1700, %v1701
  %v1705 = vshrl.u32 %v1664, 16
  %v1707 = vrot.slane %v1705, 7
  %v1708 = vshll.u32 %v1664, 16
  %v1710 = vor.u32 %v1707, %v1708
  %v1712 = vshrl.u32 %v1665, 16
  %v1714 = vrot.slane %v1712, 7
  %v1715 = vshll.u32 %v1665, 16
  %v1717 = vor.u32 %v1714, %v1715
  %v1719 = vshrl.u32 %v1666, 16
  %v1721 = vrot.slane %v1719, 7
  %v1722 = vshll.u32 %v1666, 16
  %v1724 = vor.u32 %v1721, %v1722
  %v1726 = vshrl.u32 %v1667, 16
  %v1728 = vrot.slane %v1726, 7
  %v1729 = vshll.u32 %v1667, 16
  %v1731 = vor.u32 %v1728, %v1729
  %v1733 = vshrl.u32 %v1668, 16
  %v1735 = vrot.slane %v1733, 7
  %v1736 = vshll.u32 %v1668, 16
  %v1738 = vor.u32 %v1735, %v1736
  %v1740 = vshrl.u32 %v1669, 16
  %v1742 = vrot.slane %v1740, 7
  %v1743 = vshll.u32 %v1669, 16
  %v1745 = vor.u32 %v1742, %v1743
  %v1747 = vshrl.u32 %v1670, 16
  %v1749 = vrot.slane %v1747, 7
  %v1750 = vshll.u32 %v1670, 16
  %v1752 = vor.u32 %v1749, %v1750
  %v1754 = vshrl.u32 %v1671, 16
  %v1756 = vrot.slane %v1754, 7
  %v1757 = vshll.u32 %v1671, 16
  %v1759 = vor.u32 %v1756, %v1757
  %v1761 = vshrl.u32 %v1672, 16
  %v1763 = vrot.slane %v1761, 7
  %v1764 = vshll.u32 %v1672, 16
  %v1766 = vor.u32 %v1763, %v1764
  %v1768 = vshrl.u32 %v1673, 16
  %v1770 = vrot.slane %v1768, 7
  %v1771 = vshll.u32 %v1673, 16
  %v1773 = vor.u32 %v1770, %v1771
  %v1775 = vshrl.u32 %v1674, 16
  %v1777 = vrot.slane %v1775, 7
  %v1778 = vshll.u32 %v1674, 16
  %v1780 = vor.u32 %v1777, %v1778
  %v1782 = vshrl.u32 %v1675, 16
  %v1784 = vrot.slane %v1782, 7
  %v1785 = vshll.u32 %v1675, 16
  %v1787 = vor.u32 %v1784, %v1785
  %v1820 = vsel %vm290, 0, %v1682
  %v1821 = vsel %vm290, 0, %v1689
  %v1822 = vsel %vm290, 0, %v1696
  %v1823 = vsel %vm290, 0, %v1703
  %v1824 = vsel %vm290, 0, %v1710
  %v1825 = vsel %vm290, 0, %v1717
  %v1826 = vsel %vm290, 0, %v1724
  %v1827 = vsel %vm290, 0, %v1731
  %v1828 = vsel %vm290, 0, %v1738
  %v1829 = vsel %vm290, 0, %v1745
  %v1830 = vsel %vm290, 0, %v1752
  %v1831 = vsel %vm290, 0, %v1759
  %v1832 = vsel %vm290, 0, %v1766
  %v1833 = vsel %vm290, 0, %v1773
  %v1834 = vsel %vm290, 0, %v1780
  %v1835 = vsel %vm290, 0, %v1787
  %v1836 = vsel %vm290, %v1679, 0
  %v1837 = vsel %vm290, %v1686, 0
  %v1838 = vsel %vm290, %v1693, 0
  %v1839 = vsel %vm290, %v1700, 0
  %v1840 = vsel %vm290, %v1707, 0
  %v1841 = vsel %vm290, %v1714, 0
  %v1842 = vsel %vm290, %v1721, 0
  %v1843 = vsel %vm290, %v1728, 0
  %v1844 = vsel %vm290, %v1735, 0
  %v1845 = vsel %vm290, %v1742, 0
  %v1846 = vsel %vm290, %v1749, 0
  %v1847 = vsel %vm290, %v1756, 0
  %v1848 = vsel %vm290, %v1763, 0
  %v1849 = vsel %vm290, %v1770, 0
  %v1850 = vsel %vm290, %v1777, 0
  %v1851 = vsel %vm290, %v1784, 0
  %v1853 = vshrl.u32 %v1820, 16
  %v1855 = vshll.u32 %v1820, 16
  %v1857 = vrot.slane %v1855, 1
  %v1858 = vor.u32 %v1853, %v1857
  %v1860 = vshll.u32 %v1836, 16
  %v1862 = vrot.slane %v1860, 1
  %v1863 = vsel %vm325, %v1858, %v1862
  %v1865 = vshrl.u32 %v1821, 16
  %v1867 = vshll.u32 %v1821, 16
  %v1869 = vrot.slane %v1867, 1
  %v1870 = vor.u32 %v1865, %v1869
  %v1872 = vshll.u32 %v1837, 16
  %v1874 = vrot.slane %v1872, 1
  %v1875 = vsel %vm325, %v1870, %v1874
  %v1877 = vshrl.u32 %v1822, 16
  %v1879 = vshll.u32 %v1822, 16
  %v1881 = vrot.slane %v1879, 1
  %v1882 = vor.u32 %v1877, %v1881
  %v1884 = vshll.u32 %v1838, 16
  %v1886 = vrot.slane %v1884, 1
  %v1887 = vsel %vm325, %v1882, %v1886
  %v1889 = vshrl.u32 %v1823, 16
  %v1891 = vshll.u32 %v1823, 16
  %v1893 = vrot.slane %v1891, 1
  %v1894 = vor.u32 %v1889, %v1893
  %v1896 = vshll.u32 %v1839, 16
  %v1898 = vrot.slane %v1896, 1
  %v1899 = vsel %vm325, %v1894, %v1898
  %v1901 = vshrl.u32 %v1824, 16
  %v1903 = vshll.u32 %v1824, 16
  %v1905 = vrot.slane %v1903, 1
  %v1906 = vor.u32 %v1901, %v1905
  %v1908 = vshll.u32 %v1840, 16
  %v1910 = vrot.slane %v1908, 1
  %v1911 = vsel %vm325, %v1906, %v1910
  %v1913 = vshrl.u32 %v1825, 16
  %v1915 = vshll.u32 %v1825, 16
  %v1917 = vrot.slane %v1915, 1
  %v1918 = vor.u32 %v1913, %v1917
  %v1920 = vshll.u32 %v1841, 16
  %v1922 = vrot.slane %v1920, 1
  %v1923 = vsel %vm325, %v1918, %v1922
  %v1925 = vshrl.u32 %v1826, 16
  %v1927 = vshll.u32 %v1826, 16
  %v1929 = vrot.slane %v1927, 1
  %v1930 = vor.u32 %v1925, %v1929
  %v1932 = vshll.u32 %v1842, 16
  %v1934 = vrot.slane %v1932, 1
  %v1935 = vsel %vm325, %v1930, %v1934
  %v1937 = vshrl.u32 %v1827, 16
  %v1939 = vshll.u32 %v1827, 16
  %v1941 = vrot.slane %v1939, 1
  %v1942 = vor.u32 %v1937, %v1941
  %v1944 = vshll.u32 %v1843, 16
  %v1946 = vrot.slane %v1944, 1
  %v1947 = vsel %vm325, %v1942, %v1946
  %v1949 = vshrl.u32 %v1828, 16
  %v1951 = vshll.u32 %v1828, 16
  %v1953 = vrot.slane %v1951, 1
  %v1954 = vor.u32 %v1949, %v1953
  %v1956 = vshll.u32 %v1844, 16
  %v1958 = vrot.slane %v1956, 1
  %v1959 = vsel %vm325, %v1954, %v1958
  %v1961 = vshrl.u32 %v1829, 16
  %v1963 = vshll.u32 %v1829, 16
  %v1965 = vrot.slane %v1963, 1
  %v1966 = vor.u32 %v1961, %v1965
  %v1968 = vshll.u32 %v1845, 16
  %v1970 = vrot.slane %v1968, 1
  %v1971 = vsel %vm325, %v1966, %v1970
  %v1973 = vshrl.u32 %v1830, 16
  %v1975 = vshll.u32 %v1830, 16
  %v1977 = vrot.slane %v1975, 1
  %v1978 = vor.u32 %v1973, %v1977
  %v1980 = vshll.u32 %v1846, 16
  %v1982 = vrot.slane %v1980, 1
  %v1983 = vsel %vm325, %v1978, %v1982
  %v1985 = vshrl.u32 %v1831, 16
  %v1987 = vshll.u32 %v1831, 16
  %v1989 = vrot.slane %v1987, 1
  %v1990 = vor.u32 %v1985, %v1989
  %v1992 = vshll.u32 %v1847, 16
  %v1994 = vrot.slane %v1992, 1
  %v1995 = vsel %vm325, %v1990, %v1994
  %v1997 = vshrl.u32 %v1832, 16
  %v1999 = vshll.u32 %v1832, 16
  %v2001 = vrot.slane %v1999, 1
  %v2002 = vor.u32 %v1997, %v2001
  %v2004 = vshll.u32 %v1848, 16
  %v2006 = vrot.slane %v2004, 1
  %v2007 = vsel %vm325, %v2002, %v2006
  %v2009 = vshrl.u32 %v1833, 16
  %v2011 = vshll.u32 %v1833, 16
  %v2013 = vrot.slane %v2011, 1
  %v2014 = vor.u32 %v2009, %v2013
  %v2016 = vshll.u32 %v1849, 16
  %v2018 = vrot.slane %v2016, 1
  %v2019 = vsel %vm325, %v2014, %v2018
  %v2021 = vshrl.u32 %v1834, 16
  %v2023 = vshll.u32 %v1834, 16
  %v2025 = vrot.slane %v2023, 1
  %v2026 = vor.u32 %v2021, %v2025
  %v2028 = vshll.u32 %v1850, 16
  %v2030 = vrot.slane %v2028, 1
  %v2031 = vsel %vm325, %v2026, %v2030
  %v2062 = vrot.slane %v1820, 1
  %v2063 = vrot.slane %v1836, 1
  %v2064 = vsel %vm550, %v2062, %v2063
  %v2065 = vrot.slane %v1821, 1
  %v2066 = vrot.slane %v1837, 1
  %v2067 = vsel %vm550, %v2065, %v2066
  %v2068 = vrot.slane %v1822, 1
  %v2069 = vrot.slane %v1838, 1
  %v2070 = vsel %vm550, %v2068, %v2069
  %v2071 = vrot.slane %v1823, 1
  %v2072 = vrot.slane %v1839, 1
  %v2073 = vsel %vm550, %v2071, %v2072
  %v2074 = vrot.slane %v1824, 1
  %v2075 = vrot.slane %v1840, 1
  %v2076 = vsel %vm550, %v2074, %v2075
  %v2077 = vrot.slane %v1825, 1
  %v2078 = vrot.slane %v1841, 1
  %v2079 = vsel %vm550, %v2077, %v2078
  %v2080 = vrot.slane %v1826, 1
  %v2081 = vrot.slane %v1842, 1
  %v2082 = vsel %vm550, %v2080, %v2081
  %v2083 = vrot.slane %v1827, 1
  %v2084 = vrot.slane %v1843, 1
  %v2085 = vsel %vm550, %v2083, %v2084
  %v2086 = vrot.slane %v1828, 1
  %v2087 = vrot.slane %v1844, 1
  %v2088 = vsel %vm550, %v2086, %v2087
  %v2089 = vrot.slane %v1829, 1
  %v2090 = vrot.slane %v1845, 1
  %v2091 = vsel %vm550, %v2089, %v2090
  %v2092 = vrot.slane %v1830, 1
  %v2093 = vrot.slane %v1846, 1
  %v2094 = vsel %vm550, %v2092, %v2093
  %v2095 = vrot.slane %v1831, 1
  %v2096 = vrot.slane %v1847, 1
  %v2097 = vsel %vm550, %v2095, %v2096
  %v2098 = vrot.slane %v1832, 1
  %v2099 = vrot.slane %v1848, 1
  %v2100 = vsel %vm550, %v2098, %v2099
  %v2101 = vrot.slane %v1833, 1
  %v2102 = vrot.slane %v1849, 1
  %v2103 = vsel %vm550, %v2101, %v2102
  %v2104 = vrot.slane %v1834, 1
  %v2105 = vrot.slane %v1850, 1
  %v2106 = vsel %vm550, %v2104, %v2105
  %2107 = vrot.lane.b32.xlu0 %v1863, 4
  %v2108 = vpop.permute.xlu0 %2107
  %2109 = vrot.lane.b32.xlu0 %v1875, 4
  %v2110 = vpop.permute.xlu0 %2109
  %2111 = vrot.lane.b32.xlu0 %v1887, 4
  %v2112 = vpop.permute.xlu0 %2111
  %2113 = vrot.lane.b32.xlu0 %v1899, 4
  %v2114 = vpop.permute.xlu0 %2113
  %2115 = vrot.lane.b32.xlu0 %v1911, 4
  %v2116 = vpop.permute.xlu0 %2115
  %2117 = vrot.lane.b32.xlu0 %v1923, 4
  %v2118 = vpop.permute.xlu0 %2117
  %2119 = vrot.lane.b32.xlu0 %v1935, 4
  %v2120 = vpop.permute.xlu0 %2119
  %2121 = vrot.lane.b32.xlu0 %v1947, 4
  %v2122 = vpop.permute.xlu0 %2121
  %2123 = vrot.lane.b32.xlu0 %v1959, 4
  %v2124 = vpop.permute.xlu0 %2123
  %2125 = vrot.lane.b32.xlu0 %v1971, 4
  %v2126 = vpop.permute.xlu0 %2125
  %2127 = vrot.lane.b32.xlu0 %v1983, 4
  %v2128 = vpop.permute.xlu0 %2127
  %2129 = vrot.lane.b32.xlu0 %v1995, 4
  %v2130 = vpop.permute.xlu0 %2129
  %2131 = vrot.lane.b32.xlu0 %v2007, 4
  %v2132 = vpop.permute.xlu0 %2131
  %2133 = vrot.lane.b32.xlu0 %v2019, 4
  %v2134 = vpop.permute.xlu0 %2133
  %2135 = vrot.lane.b32.xlu0 %v2031, 4
  %v2136 = vpop.permute.xlu0 %2135
  %2137 = vrot.lane.b32.xlu0 %v2064, 8
  %v2138 = vpop.permute.xlu0 %2137
  %2139 = vrot.lane.b32.xlu0 %v2067, 8
  %v2140 = vpop.permute.xlu0 %2139
  %2141 = vrot.lane.b32.xlu0 %v2070, 8
  %v2142 = vpop.permute.xlu0 %2141
  %2143 = vrot.lane.b32.xlu0 %v2073, 8
  %v2144 = vpop.permute.xlu0 %2143
  %2145 = vrot.lane.b32.xlu0 %v2076, 8
  %v2146 = vpop.permute.xlu0 %2145
  %2147 = vrot.lane.b32.xlu0 %v2079, 8
  %v2148 = vpop.permute.xlu0 %2147
  %2149 = vrot.lane.b32.xlu0 %v2082, 8
  %v2150 = vpop.permute.xlu0 %2149
  %2151 = vrot.lane.b32.xlu0 %v2085, 8
  %v2152 = vpop.permute.xlu0 %2151
  %2153 = vrot.lane.b32.xlu0 %v2088, 8
  %v2154 = vpop.permute.xlu0 %2153
  %2155 = vrot.lane.b32.xlu0 %v2091, 8
  %v2156 = vpop.permute.xlu0 %2155
  %2157 = vrot.lane.b32.xlu0 %v2094, 8
  %v2158 = vpop.permute.xlu0 %2157
  %2159 = vrot.lane.b32.xlu0 %v2097, 8
  %v2160 = vpop.permute.xlu0 %2159
  %2161 = vrot.lane.b32.xlu0 %v2100, 8
  %v2162 = vpop.permute.xlu0 %2161
  %2163 = vrot.lane.b32.xlu0 %v2103, 8
  %v2164 = vpop.permute.xlu0 %2163
  %2165 = vrot.lane.b32.xlu0 %v2106, 8
  %v2166 = vpop.permute.xlu0 %2165
  %v2168 = vsel %vm663, %v1820, %v2108
  %v2170 = vsel %vm663, %v1821, %v2110
  %v2172 = vsel %vm663, %v1822, %v2112
  %v2174 = vsel %vm663, %v1823, %v2114
  %v2176 = vsel %vm663, %v1824, %v2116
  %v2178 = vsel %vm663, %v1825, %v2118
  %v2180 = vsel %vm663, %v1826, %v2120
  %v2182 = vsel %vm663, %v1827, %v2122
  %v2184 = vsel %vm663, %v1828, %v2124
  %v2186 = vsel %vm663, %v1829, %v2126
  %v2188 = vsel %vm663, %v1830, %v2128
  %v2190 = vsel %vm663, %v1831, %v2130
  %v2192 = vsel %vm663, %v1832, %v2132
  %v2194 = vsel %vm663, %v1833, %v2134
  %v2196 = vsel %vm663, %v1834, %v2136
  %v2198 = vsel %vm696, %v2168, %v2138
  %v2200 = vsel %vm696, %v2170, %v2140
  %v2202 = vsel %vm696, %v2172, %v2142
  %v2204 = vsel %vm696, %v2174, %v2144
  %v2206 = vsel %vm696, %v2176, %v2146
  %v2208 = vsel %vm696, %v2178, %v2148
  %v2210 = vsel %vm696, %v2180, %v2150
  %v2212 = vsel %vm696, %v2182, %v2152
  %v2214 = vsel %vm696, %v2184, %v2154
  %v2216 = vsel %vm696, %v2186, %v2156
  %v2218 = vsel %vm696, %v2188, %v2158
  %v2220 = vsel %vm696, %v2190, %v2160
  %v2222 = vsel %vm696, %v2192, %v2162
  %v2224 = vsel %vm696, %v2194, %v2164
  %v2226 = vsel %vm696, %v2196, %v2166
  %v2227 = vld [vmem:[%s3] sm:$0xf]
  %v2228 = vld [vmem:[%s3 + $0x4] sm:$0x3]
  %v2230 = vshrl.u32 %v1835, 16
  %v2232 = vshll.u32 %v1835, 16
  %v2234 = vrot.slane %v2232, 1
  %v2235 = vor.u32 %v2230, %v2234
  %v2237 = vshll.u32 %v1851, 16
  %v2239 = vrot.slane %v2237, 1
  %v2240 = vsel %vm325, %v2235, %v2239
  %v2243 = vrot.slane %v1835, 1
  %v2244 = vrot.slane %v1851, 1
  %v2245 = vsel %vm550, %v2243, %v2244
  %2246 = vrot.lane.b32.xlu0 %v2240, 4
  %v2247 = vpop.permute.xlu0 %2246
  %2248 = vrot.lane.b32.xlu0 %v2245, 8
  %v2249 = vpop.permute.xlu0 %2248
  %v2251 = vsel %vm663, %v1835, %v2247
  %v2253 = vsel %vm696, %v2251, %v2249
  %v2254 = vld [vmem:[%s756] sm:$0xf]
  %v2255 = vld [vmem:[%s756 + $0x4] sm:$0x3]
  %v2258 = vunpack.c.l.b16 %v2254
  %v2259 = vunpack.c.l.b16 %v2255
  %v2260 = vpack.c.b16 %v2259, %v2258
  %v2261 = vsel %vm764, %v2198, 0
  %v2263 = vsel %vm764, %v2200, 0
  %v2265 = vsel %vm764, %v2202, 0
  %v2267 = vsel %vm764, %v2204, 0
  %v2269 = vsel %vm764, %v2206, 0
  %v2271 = vsel %vm764, %v2208, 0
  %v2273 = vsel %vm764, %v2210, 0
  %v2275 = vsel %vm764, %v2212, 0
  %v2277 = vsel %vm764, %v2214, 0
  %v2279 = vsel %vm764, %v2216, 0
  %v2281 = vsel %vm764, %v2218, 0
  %v2283 = vsel %vm764, %v2220, 0
  %v2285 = vsel %vm764, %v2222, 0
  %v2287 = vsel %vm764, %v2224, 0
  %v2289 = vsel %vm764, %v2226, 0
  %v2291 = vsel %vm764, %v2253, 0
  %v2294 = vsel %vm797, %v2260, 0
  %2296 = vmatprep.subr.bf16.mxu0 0
  %2297 = vmatpush1.bf16.msra.mxu0 0
  %2298 = vmatprep.subr.bf16.mxu0 0
  %2299 = vmatpush1.bf16.msra.mxu0 0
  %2300 = vmatprep.subr.bf16.mxu0 0
  %2301 = vmatpush1.bf16.msra.mxu0 0
  %2302 = vmatprep.subr.bf16.mxu0 0
  %2303 = vmatpush1.bf16.msra.mxu0 0
  %2304 = vmatprep.subr.bf16.mxu0 0
  %2305 = vmatpush1.bf16.msra.mxu0 0
  %2306 = vmatprep.subr.bf16.mxu0 0
  %2307 = vmatpush1.bf16.msra.mxu0 0
  %2308 = vmatprep.subr.bf16.mxu0 0
  %2309 = vmatpush1.bf16.msra.mxu0 0
  %2310 = vmatprep.subr.bf16.mxu0 0
  %2311 = vmatpush1.bf16.msra.mxu0 %v2294
  %2312 = vmatprep.subr.bf16.mxu0 0
  %2313 = vmatpush2.bf16.msra.mxu0 0
  %2314 = vmatprep.subr.bf16.mxu0 0
  %2315 = vmatpush2.bf16.msra.mxu0 0
  %2316 = vmatprep.subr.bf16.mxu0 0
  %2317 = vmatpush2.bf16.msra.mxu0 0
  %2318 = vmatprep.subr.bf16.mxu0 0
  %2319 = vmatpush2.bf16.msra.mxu0 0
  %2320 = vmatprep.subr.bf16.mxu0 0
  %2321 = vmatpush2.bf16.msra.mxu0 0
  %2322 = vmatprep.subr.bf16.mxu0 0
  %2323 = vmatpush2.bf16.msra.mxu0 0
  %2324 = vmatprep.subr.bf16.mxu0 0
  %2325 = vmatpush2.bf16.msra.mxu0 0
  %2326 = vmatprep.subr.bf16.mxu0 0
  %2327 = vmatpush2.bf16.msra.mxu0 0
  %2328 = vmatprep.mubr.bf16.mxu0 0
  %2329 = vmatmul.mubr.bf16.gmra.mxu0 %v2261
  %v2330 = vpop.f32.mrf.mxu0
  %v2331 = vadd.f32 0.0, %v2330
  %v2332 = vpop.f32.mrf.mxu0
  %v2333 = vpop.f32.mrf.mxu0
  %v2334 = vadd.f32 0.0, %v2333
  %v2335 = vpop.f32.mrf.mxu0
  %2336 = vmatprep.mubr.bf16.mxu0 0
  %2337 = vmatmul.mubr.bf16.gmra.mxu0 %v2263
  %v2338 = vpop.f32.mrf.mxu0
  %v2339 = vadd.f32 0.0, %v2338
  %v2340 = vpop.f32.mrf.mxu0
  %v2341 = vpop.f32.mrf.mxu0
  %v2342 = vadd.f32 0.0, %v2341
  %v2343 = vpop.f32.mrf.mxu0
  %2344 = vmatprep.mubr.bf16.mxu0 0
  %2345 = vmatmul.mubr.bf16.gmra.mxu0 %v2265
  %v2346 = vpop.f32.mrf.mxu0
  %v2347 = vadd.f32 0.0, %v2346
  %v2348 = vpop.f32.mrf.mxu0
  %v2349 = vpop.f32.mrf.mxu0
  %v2350 = vadd.f32 0.0, %v2349
  %v2351 = vpop.f32.mrf.mxu0
  %2352 = vmatprep.mubr.bf16.mxu0 0
  %2353 = vmatmul.mubr.bf16.gmra.mxu0 %v2267
  %v2354 = vpop.f32.mrf.mxu0
  %v2355 = vadd.f32 0.0, %v2354
  %v2356 = vpop.f32.mrf.mxu0
  %v2357 = vpop.f32.mrf.mxu0
  %v2358 = vadd.f32 0.0, %v2357
  %v2359 = vpop.f32.mrf.mxu0
  %2360 = vmatprep.mubr.bf16.mxu0 0
  %2361 = vmatmul.mubr.bf16.gmra.mxu0 %v2269
  %v2362 = vpop.f32.mrf.mxu0
  %v2363 = vadd.f32 0.0, %v2362
  %v2364 = vpop.f32.mrf.mxu0
  %v2365 = vpop.f32.mrf.mxu0
  %v2366 = vadd.f32 0.0, %v2365
  %v2367 = vpop.f32.mrf.mxu0
  %2368 = vmatprep.mubr.bf16.mxu0 0
  %2369 = vmatmul.mubr.bf16.gmra.mxu0 %v2271
  %v2370 = vpop.f32.mrf.mxu0
  %v2371 = vadd.f32 0.0, %v2370
  %v2372 = vpop.f32.mrf.mxu0
  %v2373 = vpop.f32.mrf.mxu0
  %v2374 = vadd.f32 0.0, %v2373
  %v2375 = vpop.f32.mrf.mxu0
  %2376 = vmatprep.mubr.bf16.mxu0 0
  %2377 = vmatmul.mubr.bf16.gmra.mxu0 %v2273
  %v2378 = vpop.f32.mrf.mxu0
  %v2379 = vadd.f32 0.0, %v2378
  %v2380 = vpop.f32.mrf.mxu0
  %v2381 = vpop.f32.mrf.mxu0
  %v2382 = vadd.f32 0.0, %v2381
  %v2383 = vpop.f32.mrf.mxu0
  %2384 = vmatprep.mubr.bf16.mxu0 0
  %2385 = vmatmul.mubr.bf16.gmra.mxu0 %v2275
  %v2386 = vpop.f32.mrf.mxu0
  %v2387 = vadd.f32 0.0, %v2386
  %v2388 = vpop.f32.mrf.mxu0
  %v2389 = vpop.f32.mrf.mxu0
  %v2390 = vadd.f32 0.0, %v2389
  %v2391 = vpop.f32.mrf.mxu0
  %2392 = vmatprep.mubr.bf16.mxu0 0
  %2393 = vmatmul.mubr.bf16.gmra.mxu0 %v2277
  %v2394 = vpop.f32.mrf.mxu0
  %v2395 = vadd.f32 0.0, %v2394
  %v2396 = vpop.f32.mrf.mxu0
  %v2397 = vpop.f32.mrf.mxu0
  %v2398 = vadd.f32 0.0, %v2397
  %v2399 = vpop.f32.mrf.mxu0
  %2400 = vmatprep.mubr.bf16.mxu0 0
  %2401 = vmatmul.mubr.bf16.gmra.mxu0 %v2279
  %v2402 = vpop.f32.mrf.mxu0
  %v2403 = vadd.f32 0.0, %v2402
  %v2404 = vpop.f32.mrf.mxu0
  %v2405 = vpop.f32.mrf.mxu0
  %v2406 = vadd.f32 0.0, %v2405
  %v2407 = vpop.f32.mrf.mxu0
  %2408 = vmatprep.mubr.bf16.mxu0 0
  %2409 = vmatmul.mubr.bf16.gmra.mxu0 %v2281
  %v2410 = vpop.f32.mrf.mxu0
  %v2411 = vadd.f32 0.0, %v2410
  %v2412 = vpop.f32.mrf.mxu0
  %v2413 = vpop.f32.mrf.mxu0
  %v2414 = vadd.f32 0.0, %v2413
  %v2415 = vpop.f32.mrf.mxu0
  %2416 = vmatprep.mubr.bf16.mxu0 0
  %2417 = vmatmul.mubr.bf16.gmra.mxu0 %v2283
  %v2418 = vpop.f32.mrf.mxu0
  %v2419 = vadd.f32 0.0, %v2418
  %v2420 = vpop.f32.mrf.mxu0
  %v2421 = vpop.f32.mrf.mxu0
  %v2422 = vadd.f32 0.0, %v2421
  %v2423 = vpop.f32.mrf.mxu0
  %2424 = vmatprep.mubr.bf16.mxu0 0
  %2425 = vmatmul.mubr.bf16.gmra.mxu0 %v2285
  %v2426 = vpop.f32.mrf.mxu0
  %v2427 = vadd.f32 0.0, %v2426
  %v2428 = vpop.f32.mrf.mxu0
  %v2429 = vpop.f32.mrf.mxu0
  %v2430 = vadd.f32 0.0, %v2429
  %v2431 = vpop.f32.mrf.mxu0
  %2432 = vmatprep.mubr.bf16.mxu0 0
  %2433 = vmatmul.mubr.bf16.gmra.mxu0 %v2287
  %v2434 = vpop.f32.mrf.mxu0
  %v2435 = vadd.f32 0.0, %v2434
  %v2436 = vpop.f32.mrf.mxu0
  %v2437 = vpop.f32.mrf.mxu0
  %v2438 = vadd.f32 0.0, %v2437
  %v2439 = vpop.f32.mrf.mxu0
  %2440 = vmatprep.mubr.bf16.mxu0 0
  %2441 = vmatmul.mubr.bf16.gmra.mxu0 %v2289
  %v2442 = vpop.f32.mrf.mxu0
  %v2443 = vadd.f32 0.0, %v2442
  %v2444 = vpop.f32.mrf.mxu0
  %v2445 = vpop.f32.mrf.mxu0
  %v2446 = vadd.f32 0.0, %v2445
  %v2447 = vpop.f32.mrf.mxu0
  %2448 = vmatprep.mubr.bf16.mxu0 0
  %2449 = vmatmul.mubr.bf16.gmra.mxu0 %v2291
  %v2450 = vpop.f32.mrf.mxu0
  %v2451 = vadd.f32 0.0, %v2450
  %v2452 = vpop.f32.mrf.mxu0
  %v2453 = vpop.f32.mrf.mxu0
  %v2454 = vadd.f32 0.0, %v2453
  %v2455 = vpop.f32.mrf.mxu0
  %2456 = vdwg.mxu0
  %v2459 = vunpack.c.l.b16 %v2227
  %v2460 = vunpack.c.l.b16 %v2228
  %v2461 = vpack.c.b16 %v2460, %v2459
  %v2463 = vsel %vm797, %v2461, 0
  %2465 = vmatprep.subr.bf16.mxu0 0
  %2466 = vmatpush1.bf16.msra.mxu0 0
  %2467 = vmatprep.subr.bf16.mxu0 0
  %2468 = vmatpush1.bf16.msra.mxu0 0
  %2469 = vmatprep.subr.bf16.mxu0 0
  %2470 = vmatpush1.bf16.msra.mxu0 0
  %2471 = vmatprep.subr.bf16.mxu0 0
  %2472 = vmatpush1.bf16.msra.mxu0 0
  %2473 = vmatprep.subr.bf16.mxu0 0
  %2474 = vmatpush1.bf16.msra.mxu0 0
  %2475 = vmatprep.subr.bf16.mxu0 0
  %2476 = vmatpush1.bf16.msra.mxu0 0
  %2477 = vmatprep.subr.bf16.mxu0 0
  %2478 = vmatpush1.bf16.msra.mxu0 0
  %2479 = vmatprep.subr.bf16.mxu0 0
  %2480 = vmatpush1.bf16.msra.mxu0 %v2463
  %2481 = vmatprep.subr.bf16.mxu0 0
  %2482 = vmatpush2.bf16.msra.mxu0 0
  %2483 = vmatprep.subr.bf16.mxu0 0
  %2484 = vmatpush2.bf16.msra.mxu0 0
  %2485 = vmatprep.subr.bf16.mxu0 0
  %2486 = vmatpush2.bf16.msra.mxu0 0
  %2487 = vmatprep.subr.bf16.mxu0 0
  %2488 = vmatpush2.bf16.msra.mxu0 0
  %2489 = vmatprep.subr.bf16.mxu0 0
  %2490 = vmatpush2.bf16.msra.mxu0 0
  %2491 = vmatprep.subr.bf16.mxu0 0
  %2492 = vmatpush2.bf16.msra.mxu0 0
  %2493 = vmatprep.subr.bf16.mxu0 0
  %2494 = vmatpush2.bf16.msra.mxu0 0
  %2495 = vmatprep.subr.bf16.mxu0 0
  %2496 = vmatpush2.bf16.msra.mxu0 0
  %2497 = vmatprep.mubr.bf16.mxu0 0
  %2498 = vmatmul.mubr.bf16.gmra.mxu0 %v967
  %v2499 = vpop.f32.mrf.mxu0
  %v2500 = vadd.f32 %v2331, %v2499
  %v2501 = vpop.f32.mrf.mxu0
  %v2502 = vpop.f32.mrf.mxu0
  %v2503 = vadd.f32 %v2334, %v2502
  %v2504 = vpop.f32.mrf.mxu0
  %2505 = vmatprep.mubr.bf16.mxu0 0
  %2506 = vmatmul.mubr.bf16.gmra.mxu0 %v2261
  %v2507 = vpop.f32.mrf.mxu0
  %v2508 = vadd.f32 %v2339, %v2507
  %v2509 = vpop.f32.mrf.mxu0
  %v2510 = vpop.f32.mrf.mxu0
  %v2511 = vadd.f32 %v2342, %v2510
  %v2512 = vpop.f32.mrf.mxu0
  %2513 = vmatprep.mubr.bf16.mxu0 0
  %2514 = vmatmul.mubr.bf16.gmra.mxu0 %v2263
  %v2515 = vpop.f32.mrf.mxu0
  %v2516 = vadd.f32 %v2347, %v2515
  %v2517 = vpop.f32.mrf.mxu0
  %v2518 = vpop.f32.mrf.mxu0
  %v2519 = vadd.f32 %v2350, %v2518
  %v2520 = vpop.f32.mrf.mxu0
  %2521 = vmatprep.mubr.bf16.mxu0 0
  %2522 = vmatmul.mubr.bf16.gmra.mxu0 %v2265
  %v2523 = vpop.f32.mrf.mxu0
  %v2524 = vadd.f32 %v2355, %v2523
  %v2525 = vpop.f32.mrf.mxu0
  %v2526 = vpop.f32.mrf.mxu0
  %v2527 = vadd.f32 %v2358, %v2526
  %v2528 = vpop.f32.mrf.mxu0
  %2529 = vmatprep.mubr.bf16.mxu0 0
  %2530 = vmatmul.mubr.bf16.gmra.mxu0 %v2267
  %v2531 = vpop.f32.mrf.mxu0
  %v2532 = vadd.f32 %v2363, %v2531
  %v2533 = vpop.f32.mrf.mxu0
  %v2534 = vpop.f32.mrf.mxu0
  %v2535 = vadd.f32 %v2366, %v2534
  %v2536 = vpop.f32.mrf.mxu0
  %2537 = vmatprep.mubr.bf16.mxu0 0
  %2538 = vmatmul.mubr.bf16.gmra.mxu0 %v2269
  %v2539 = vpop.f32.mrf.mxu0
  %v2540 = vadd.f32 %v2371, %v2539
  %v2541 = vpop.f32.mrf.mxu0
  %v2542 = vpop.f32.mrf.mxu0
  %v2543 = vadd.f32 %v2374, %v2542
  %v2544 = vpop.f32.mrf.mxu0
  %2545 = vmatprep.mubr.bf16.mxu0 0
  %2546 = vmatmul.mubr.bf16.gmra.mxu0 %v2271
  %v2547 = vpop.f32.mrf.mxu0
  %v2548 = vadd.f32 %v2379, %v2547
  %v2549 = vpop.f32.mrf.mxu0
  %v2550 = vpop.f32.mrf.mxu0
  %v2551 = vadd.f32 %v2382, %v2550
  %v2552 = vpop.f32.mrf.mxu0
  %2553 = vmatprep.mubr.bf16.mxu0 0
  %2554 = vmatmul.mubr.bf16.gmra.mxu0 %v2273
  %v2555 = vpop.f32.mrf.mxu0
  %v2556 = vadd.f32 %v2387, %v2555
  %v2557 = vpop.f32.mrf.mxu0
  %v2558 = vpop.f32.mrf.mxu0
  %v2559 = vadd.f32 %v2390, %v2558
  %v2560 = vpop.f32.mrf.mxu0
  %2561 = vmatprep.mubr.bf16.mxu0 0
  %2562 = vmatmul.mubr.bf16.gmra.mxu0 %v2275
  %v2563 = vpop.f32.mrf.mxu0
  %v2564 = vadd.f32 %v2395, %v2563
  %v2565 = vpop.f32.mrf.mxu0
  %v2566 = vpop.f32.mrf.mxu0
  %v2567 = vadd.f32 %v2398, %v2566
  %v2568 = vpop.f32.mrf.mxu0
  %2569 = vmatprep.mubr.bf16.mxu0 0
  %2570 = vmatmul.mubr.bf16.gmra.mxu0 %v2277
  %v2571 = vpop.f32.mrf.mxu0
  %v2572 = vadd.f32 %v2403, %v2571
  %v2573 = vpop.f32.mrf.mxu0
  %v2574 = vpop.f32.mrf.mxu0
  %v2575 = vadd.f32 %v2406, %v2574
  %v2576 = vpop.f32.mrf.mxu0
  %2577 = vmatprep.mubr.bf16.mxu0 0
  %2578 = vmatmul.mubr.bf16.gmra.mxu0 %v2279
  %v2579 = vpop.f32.mrf.mxu0
  %v2580 = vadd.f32 %v2411, %v2579
  %v2581 = vpop.f32.mrf.mxu0
  %v2582 = vpop.f32.mrf.mxu0
  %v2583 = vadd.f32 %v2414, %v2582
  %v2584 = vpop.f32.mrf.mxu0
  %2585 = vmatprep.mubr.bf16.mxu0 0
  %2586 = vmatmul.mubr.bf16.gmra.mxu0 %v2281
  %v2587 = vpop.f32.mrf.mxu0
  %v2588 = vadd.f32 %v2419, %v2587
  %v2589 = vpop.f32.mrf.mxu0
  %v2590 = vpop.f32.mrf.mxu0
  %v2591 = vadd.f32 %v2422, %v2590
  %v2592 = vpop.f32.mrf.mxu0
  %2593 = vmatprep.mubr.bf16.mxu0 0
  %2594 = vmatmul.mubr.bf16.gmra.mxu0 %v2283
  %v2595 = vpop.f32.mrf.mxu0
  %v2596 = vadd.f32 %v2427, %v2595
  %v2597 = vpop.f32.mrf.mxu0
  %v2598 = vpop.f32.mrf.mxu0
  %v2599 = vadd.f32 %v2430, %v2598
  %v2600 = vpop.f32.mrf.mxu0
  %2601 = vmatprep.mubr.bf16.mxu0 0
  %2602 = vmatmul.mubr.bf16.gmra.mxu0 %v2285
  %v2603 = vpop.f32.mrf.mxu0
  %v2604 = vadd.f32 %v2435, %v2603
  %v2605 = vpop.f32.mrf.mxu0
  %v2606 = vpop.f32.mrf.mxu0
  %v2607 = vadd.f32 %v2438, %v2606
  %v2608 = vpop.f32.mrf.mxu0
  %2609 = vmatprep.mubr.bf16.mxu0 0
  %2610 = vmatmul.mubr.bf16.gmra.mxu0 %v2287
  %v2611 = vpop.f32.mrf.mxu0
  %v2612 = vadd.f32 %v2443, %v2611
  %v2613 = vpop.f32.mrf.mxu0
  %v2614 = vpop.f32.mrf.mxu0
  %v2615 = vadd.f32 %v2446, %v2614
  %v2616 = vpop.f32.mrf.mxu0
  %2617 = vmatprep.mubr.bf16.mxu0 0
  %2618 = vmatmul.mubr.bf16.gmra.mxu0 %v2289
  %v2619 = vpop.f32.mrf.mxu0
  %v2620 = vadd.f32 %v2451, %v2619
  %v2621 = vpop.f32.mrf.mxu0
  %v2622 = vpop.f32.mrf.mxu0
  %v2623 = vadd.f32 %v2454, %v2622
  %v2624 = vpop.f32.mrf.mxu0
  %2625 = vdwg.mxu0
  %v2626 = vld [vmem:[%s1133] sm:$0xf]
  %v2627 = vld [vmem:[%s1133 + $0x4] sm:$0x3]
  %v2630 = vunpack.c.l.b16 %v2626
  %v2631 = vunpack.c.l.b16 %v2627
  %v2632 = vpack.c.b16 %v2631, %v2630
  %v2634 = vsel %vm797, %v2632, 0
  %2636 = vmatprep.subr.bf16.mxu0 0
  %2637 = vmatpush1.bf16.msra.mxu0 0
  %2638 = vmatprep.subr.bf16.mxu0 0
  %2639 = vmatpush1.bf16.msra.mxu0 0
  %2640 = vmatprep.subr.bf16.mxu0 0
  %2641 = vmatpush1.bf16.msra.mxu0 0
  %2642 = vmatprep.subr.bf16.mxu0 0
  %2643 = vmatpush1.bf16.msra.mxu0 0
  %2644 = vmatprep.subr.bf16.mxu0 0
  %2645 = vmatpush1.bf16.msra.mxu0 0
  %2646 = vmatprep.subr.bf16.mxu0 0
  %2647 = vmatpush1.bf16.msra.mxu0 0
  %2648 = vmatprep.subr.bf16.mxu0 0
  %2649 = vmatpush1.bf16.msra.mxu0 0
  %2650 = vmatprep.subr.bf16.mxu0 0
  %2651 = vmatpush1.bf16.msra.mxu0 %v2634
  %2652 = vmatprep.subr.bf16.mxu0 0
  %2653 = vmatpush2.bf16.msra.mxu0 0
  %2654 = vmatprep.subr.bf16.mxu0 0
  %2655 = vmatpush2.bf16.msra.mxu0 0
  %2656 = vmatprep.subr.bf16.mxu0 0
  %2657 = vmatpush2.bf16.msra.mxu0 0
  %2658 = vmatprep.subr.bf16.mxu0 0
  %2659 = vmatpush2.bf16.msra.mxu0 0
  %2660 = vmatprep.subr.bf16.mxu0 0
  %2661 = vmatpush2.bf16.msra.mxu0 0
  %2662 = vmatprep.subr.bf16.mxu0 0
  %2663 = vmatpush2.bf16.msra.mxu0 0
  %2664 = vmatprep.subr.bf16.mxu0 0
  %2665 = vmatpush2.bf16.msra.mxu0 0
  %2666 = vmatprep.subr.bf16.mxu0 0
  %2667 = vmatpush2.bf16.msra.mxu0 0
  %2668 = vmatprep.mubr.bf16.mxu0 0
  %2669 = vmatmul.mubr.bf16.gmra.mxu0 %v2263
  %v2670 = vpop.f32.mrf.mxu0
  %v2671 = vadd.f32 0.0, %v2670
  %v2672 = vpop.f32.mrf.mxu0
  %v2673 = vpop.f32.mrf.mxu0
  %v2674 = vadd.f32 0.0, %v2673
  %v2675 = vpop.f32.mrf.mxu0
  %2676 = vmatprep.mubr.bf16.mxu0 0
  %2677 = vmatmul.mubr.bf16.gmra.mxu0 %v2265
  %v2678 = vpop.f32.mrf.mxu0
  %v2679 = vadd.f32 0.0, %v2678
  %v2680 = vpop.f32.mrf.mxu0
  %v2681 = vpop.f32.mrf.mxu0
  %v2682 = vadd.f32 0.0, %v2681
  %v2683 = vpop.f32.mrf.mxu0
  %2684 = vmatprep.mubr.bf16.mxu0 0
  %2685 = vmatmul.mubr.bf16.gmra.mxu0 %v2267
  %v2686 = vpop.f32.mrf.mxu0
  %v2687 = vadd.f32 0.0, %v2686
  %v2688 = vpop.f32.mrf.mxu0
  %v2689 = vpop.f32.mrf.mxu0
  %v2690 = vadd.f32 0.0, %v2689
  %v2691 = vpop.f32.mrf.mxu0
  %2692 = vmatprep.mubr.bf16.mxu0 0
  %2693 = vmatmul.mubr.bf16.gmra.mxu0 %v2269
  %v2694 = vpop.f32.mrf.mxu0
  %v2695 = vadd.f32 0.0, %v2694
  %v2696 = vpop.f32.mrf.mxu0
  %v2697 = vpop.f32.mrf.mxu0
  %v2698 = vadd.f32 0.0, %v2697
  %v2699 = vpop.f32.mrf.mxu0
  %2700 = vmatprep.mubr.bf16.mxu0 0
  %2701 = vmatmul.mubr.bf16.gmra.mxu0 %v2271
  %v2702 = vpop.f32.mrf.mxu0
  %v2703 = vadd.f32 0.0, %v2702
  %v2704 = vpop.f32.mrf.mxu0
  %v2705 = vpop.f32.mrf.mxu0
  %v2706 = vadd.f32 0.0, %v2705
  %v2707 = vpop.f32.mrf.mxu0
  %2708 = vmatprep.mubr.bf16.mxu0 0
  %2709 = vmatmul.mubr.bf16.gmra.mxu0 %v2273
  %v2710 = vpop.f32.mrf.mxu0
  %v2711 = vadd.f32 0.0, %v2710
  %v2712 = vpop.f32.mrf.mxu0
  %v2713 = vpop.f32.mrf.mxu0
  %v2714 = vadd.f32 0.0, %v2713
  %v2715 = vpop.f32.mrf.mxu0
  %2716 = vmatprep.mubr.bf16.mxu0 0
  %2717 = vmatmul.mubr.bf16.gmra.mxu0 %v2275
  %v2718 = vpop.f32.mrf.mxu0
  %v2719 = vadd.f32 0.0, %v2718
  %v2720 = vpop.f32.mrf.mxu0
  %v2721 = vpop.f32.mrf.mxu0
  %v2722 = vadd.f32 0.0, %v2721
  %v2723 = vpop.f32.mrf.mxu0
  %2724 = vmatprep.mubr.bf16.mxu0 0
  %2725 = vmatmul.mubr.bf16.gmra.mxu0 %v2277
  %v2726 = vpop.f32.mrf.mxu0
  %v2727 = vadd.f32 0.0, %v2726
  %v2728 = vpop.f32.mrf.mxu0
  %v2729 = vpop.f32.mrf.mxu0
  %v2730 = vadd.f32 0.0, %v2729
  %v2731 = vpop.f32.mrf.mxu0
  %2732 = vmatprep.mubr.bf16.mxu0 0
  %2733 = vmatmul.mubr.bf16.gmra.mxu0 %v2279
  %v2734 = vpop.f32.mrf.mxu0
  %v2735 = vadd.f32 0.0, %v2734
  %v2736 = vpop.f32.mrf.mxu0
  %v2737 = vpop.f32.mrf.mxu0
  %v2738 = vadd.f32 0.0, %v2737
  %v2739 = vpop.f32.mrf.mxu0
  %2740 = vmatprep.mubr.bf16.mxu0 0
  %2741 = vmatmul.mubr.bf16.gmra.mxu0 %v2281
  %v2742 = vpop.f32.mrf.mxu0
  %v2743 = vadd.f32 0.0, %v2742
  %v2744 = vpop.f32.mrf.mxu0
  %v2745 = vpop.f32.mrf.mxu0
  %v2746 = vadd.f32 0.0, %v2745
  %v2747 = vpop.f32.mrf.mxu0
  %2748 = vmatprep.mubr.bf16.mxu0 0
  %2749 = vmatmul.mubr.bf16.gmra.mxu0 %v2283
  %v2750 = vpop.f32.mrf.mxu0
  %v2751 = vadd.f32 0.0, %v2750
  %v2752 = vpop.f32.mrf.mxu0
  %v2753 = vpop.f32.mrf.mxu0
  %v2754 = vadd.f32 0.0, %v2753
  %v2755 = vpop.f32.mrf.mxu0
  %2756 = vmatprep.mubr.bf16.mxu0 0
  %2757 = vmatmul.mubr.bf16.gmra.mxu0 %v2285
  %v2758 = vpop.f32.mrf.mxu0
  %v2759 = vadd.f32 0.0, %v2758
  %v2760 = vpop.f32.mrf.mxu0
  %v2761 = vpop.f32.mrf.mxu0
  %v2762 = vadd.f32 0.0, %v2761
  %v2763 = vpop.f32.mrf.mxu0
  %2764 = vmatprep.mubr.bf16.mxu0 0
  %2765 = vmatmul.mubr.bf16.gmra.mxu0 %v2287
  %v2766 = vpop.f32.mrf.mxu0
  %v2767 = vadd.f32 0.0, %v2766
  %v2768 = vpop.f32.mrf.mxu0
  %v2769 = vpop.f32.mrf.mxu0
  %v2770 = vadd.f32 0.0, %v2769
  %v2771 = vpop.f32.mrf.mxu0
  %2772 = vmatprep.mubr.bf16.mxu0 0
  %2773 = vmatmul.mubr.bf16.gmra.mxu0 %v2289
  %v2774 = vpop.f32.mrf.mxu0
  %v2775 = vadd.f32 0.0, %v2774
  %v2776 = vpop.f32.mrf.mxu0
  %v2777 = vpop.f32.mrf.mxu0
  %v2778 = vadd.f32 0.0, %v2777
  %v2779 = vpop.f32.mrf.mxu0
  %2780 = vmatprep.mubr.bf16.mxu0 0
  %2781 = vmatmul.mubr.bf16.gmra.mxu0 %v2291
  %v2782 = vpop.f32.mrf.mxu0
  %v2783 = vadd.f32 0.0, %v2782
  %v2784 = vpop.f32.mrf.mxu0
  %v2785 = vpop.f32.mrf.mxu0
  %v2786 = vadd.f32 0.0, %v2785
  %v2787 = vpop.f32.mrf.mxu0
  %2788 = vmatprep.mubr.bf16.mxu0 0
  %2789 = vmatmul.mubr.bf16.gmra.mxu0 %v967
  %v2790 = vpop.f32.mrf.mxu0
  %v2791 = vadd.f32 0.0, %v2790
  %v2792 = vpop.f32.mrf.mxu0
  %v2793 = vpop.f32.mrf.mxu0
  %v2794 = vadd.f32 0.0, %v2793
  %v2795 = vpop.f32.mrf.mxu0
  %2796 = vdwg.mxu0
  %v2797 = vadd.f32 %v2500, %v2671
  %v2798 = vadd.f32 %v2503, %v2674
  %v2799 = vadd.f32 %v2508, %v2679
  %v2800 = vadd.f32 %v2511, %v2682
  %v2801 = vadd.f32 %v2516, %v2687
  %v2802 = vadd.f32 %v2519, %v2690
  %v2803 = vadd.f32 %v2524, %v2695
  %v2804 = vadd.f32 %v2527, %v2698
  %v2805 = vadd.f32 %v2532, %v2703
  %v2806 = vadd.f32 %v2535, %v2706
  %v2807 = vadd.f32 %v2540, %v2711
  %v2808 = vadd.f32 %v2543, %v2714
  %v2809 = vadd.f32 %v2548, %v2719
  %v2810 = vadd.f32 %v2551, %v2722
  %v2811 = vadd.f32 %v2556, %v2727
  %v2812 = vadd.f32 %v2559, %v2730
  %v2813 = vadd.f32 %v2564, %v2735
  %v2814 = vadd.f32 %v2567, %v2738
  %v2815 = vadd.f32 %v2572, %v2743
  %v2816 = vadd.f32 %v2575, %v2746
  %v2817 = vadd.f32 %v2580, %v2751
  %v2818 = vadd.f32 %v2583, %v2754
  %v2819 = vadd.f32 %v2588, %v2759
  %v2820 = vadd.f32 %v2591, %v2762
  %v2821 = vadd.f32 %v2596, %v2767
  %v2822 = vadd.f32 %v2599, %v2770
  %v2823 = vadd.f32 %v2604, %v2775
  %v2824 = vadd.f32 %v2607, %v2778
  %v2825 = vadd.f32 %v2612, %v2783
  %v2826 = vadd.f32 %v2615, %v2786
  %v2827 = vadd.f32 %v2620, %v2791
  %v2828 = vadd.f32 %v2623, %v2794
  %v2829 = vsel %vm663, %v2797, 0.0
  %v2830 = vsel %vm663, %v2798, 0.0
  %v2831 = vadd.f32 %v2829, %v2830
  %v2832 = vsel %vm663, %v2799, 0.0
  %v2833 = vadd.f32 %v2831, %v2832
  %v2834 = vsel %vm663, %v2800, 0.0
  %v2835 = vadd.f32 %v2833, %v2834
  %v2836 = vsel %vm663, %v2801, 0.0
  %v2837 = vadd.f32 %v2835, %v2836
  %v2838 = vsel %vm663, %v2802, 0.0
  %v2839 = vadd.f32 %v2837, %v2838
  %v2840 = vsel %vm663, %v2803, 0.0
  %v2841 = vadd.f32 %v2839, %v2840
  %v2842 = vsel %vm663, %v2804, 0.0
  %v2843 = vadd.f32 %v2841, %v2842
  %v2844 = vsel %vm663, %v2805, 0.0
  %v2845 = vadd.f32 %v2843, %v2844
  %v2846 = vsel %vm663, %v2806, 0.0
  %v2847 = vadd.f32 %v2845, %v2846
  %v2848 = vsel %vm663, %v2807, 0.0
  %v2849 = vadd.f32 %v2847, %v2848
  %v2850 = vsel %vm663, %v2808, 0.0
  %v2851 = vadd.f32 %v2849, %v2850
  %v2852 = vsel %vm663, %v2809, 0.0
  %v2853 = vadd.f32 %v2851, %v2852
  %v2854 = vsel %vm663, %v2810, 0.0
  %v2855 = vadd.f32 %v2853, %v2854
  %v2856 = vsel %vm663, %v2811, 0.0
  %v2857 = vadd.f32 %v2855, %v2856
  %v2858 = vsel %vm663, %v2812, 0.0
  %v2859 = vadd.f32 %v2857, %v2858
  %v2860 = vsel %vm663, %v2813, 0.0
  %v2861 = vadd.f32 %v2859, %v2860
  %v2862 = vsel %vm663, %v2814, 0.0
  %v2863 = vadd.f32 %v2861, %v2862
  %v2864 = vsel %vm663, %v2815, 0.0
  %v2865 = vadd.f32 %v2863, %v2864
  %v2866 = vsel %vm663, %v2816, 0.0
  %v2867 = vadd.f32 %v2865, %v2866
  %v2868 = vsel %vm663, %v2817, 0.0
  %v2869 = vadd.f32 %v2867, %v2868
  %v2870 = vsel %vm663, %v2818, 0.0
  %v2871 = vadd.f32 %v2869, %v2870
  %v2872 = vsel %vm663, %v2819, 0.0
  %v2873 = vadd.f32 %v2871, %v2872
  %v2874 = vsel %vm663, %v2820, 0.0
  %v2875 = vadd.f32 %v2873, %v2874
  %v2876 = vsel %vm663, %v2821, 0.0
  %v2877 = vadd.f32 %v2875, %v2876
  %v2878 = vsel %vm663, %v2822, 0.0
  %v2879 = vadd.f32 %v2877, %v2878
  %v2880 = vsel %vm663, %v2823, 0.0
  %v2881 = vadd.f32 %v2879, %v2880
  %v2882 = vsel %vm663, %v2824, 0.0
  %v2883 = vadd.f32 %v2881, %v2882
  %v2884 = vsel %vm663, %v2825, 0.0
  %v2885 = vadd.f32 %v2883, %v2884
  %v2886 = vsel %vm663, %v2826, 0.0
  %v2887 = vadd.f32 %v2885, %v2886
  %v2888 = vsel %vm663, %v2827, 0.0
  %v2889 = vadd.f32 %v2887, %v2888
  %v2890 = vsel %vm663, %v2828, 0.0
  %v2891 = vadd.f32 %v2889, %v2890
  %v2892 = vrot.slane %v2891, 4
  %v2893 = vadd.f32 %v2891, %v2892
  %v2894 = vrot.slane %v2893, 2
  %v2895 = vadd.f32 %v2893, %v2894
  %v2896 = vrot.slane %v2895, 1
  %v2897 = vadd.f32 %v2895, %v2896
  %v2898 = vadd.f32 %v1406, %v2897
  %v2899 = vmul.f32 %v2797, %v2797
  %v2900 = vmul.f32 %v2798, %v2798
  %v2901 = vmul.f32 %v2799, %v2799
  %v2902 = vmul.f32 %v2800, %v2800
  %v2903 = vmul.f32 %v2801, %v2801
  %v2904 = vmul.f32 %v2802, %v2802
  %v2905 = vmul.f32 %v2803, %v2803
  %v2906 = vmul.f32 %v2804, %v2804
  %v2907 = vmul.f32 %v2805, %v2805
  %v2908 = vmul.f32 %v2806, %v2806
  %v2909 = vmul.f32 %v2807, %v2807
  %v2910 = vmul.f32 %v2808, %v2808
  %v2911 = vmul.f32 %v2809, %v2809
  %v2912 = vmul.f32 %v2810, %v2810
  %v2913 = vmul.f32 %v2811, %v2811
  %v2914 = vmul.f32 %v2812, %v2812
  %v2915 = vmul.f32 %v2813, %v2813
  %v2916 = vmul.f32 %v2814, %v2814
  %v2917 = vmul.f32 %v2815, %v2815
  %v2918 = vmul.f32 %v2816, %v2816
  %v2919 = vmul.f32 %v2817, %v2817
  %v2920 = vmul.f32 %v2818, %v2818
  %v2921 = vmul.f32 %v2819, %v2819
  %v2922 = vmul.f32 %v2820, %v2820
  %v2923 = vmul.f32 %v2821, %v2821
  %v2924 = vmul.f32 %v2822, %v2822
  %v2925 = vmul.f32 %v2823, %v2823
  %v2926 = vmul.f32 %v2824, %v2824
  %v2927 = vmul.f32 %v2825, %v2825
  %v2928 = vmul.f32 %v2826, %v2826
  %v2929 = vmul.f32 %v2827, %v2827
  %v2930 = vmul.f32 %v2828, %v2828
  %v2931 = vsel %vm663, %v2899, 0.0
  %v2932 = vsel %vm663, %v2900, 0.0
  %v2933 = vadd.f32 %v2931, %v2932
  %v2934 = vsel %vm663, %v2901, 0.0
  %v2935 = vadd.f32 %v2933, %v2934
  %v2936 = vsel %vm663, %v2902, 0.0
  %v2937 = vadd.f32 %v2935, %v2936
  %v2938 = vsel %vm663, %v2903, 0.0
  %v2939 = vadd.f32 %v2937, %v2938
  %v2940 = vsel %vm663, %v2904, 0.0
  %v2941 = vadd.f32 %v2939, %v2940
  %v2942 = vsel %vm663, %v2905, 0.0
  %v2943 = vadd.f32 %v2941, %v2942
  %v2944 = vsel %vm663, %v2906, 0.0
  %v2945 = vadd.f32 %v2943, %v2944
  %v2946 = vsel %vm663, %v2907, 0.0
  %v2947 = vadd.f32 %v2945, %v2946
  %v2948 = vsel %vm663, %v2908, 0.0
  %v2949 = vadd.f32 %v2947, %v2948
  %v2950 = vsel %vm663, %v2909, 0.0
  %v2951 = vadd.f32 %v2949, %v2950
  %v2952 = vsel %vm663, %v2910, 0.0
  %v2953 = vadd.f32 %v2951, %v2952
  %v2954 = vsel %vm663, %v2911, 0.0
  %v2955 = vadd.f32 %v2953, %v2954
  %v2956 = vsel %vm663, %v2912, 0.0
  %v2957 = vadd.f32 %v2955, %v2956
  %v2958 = vsel %vm663, %v2913, 0.0
  %v2959 = vadd.f32 %v2957, %v2958
  %v2960 = vsel %vm663, %v2914, 0.0
  %v2961 = vadd.f32 %v2959, %v2960
  %v2962 = vsel %vm663, %v2915, 0.0
  %v2963 = vadd.f32 %v2961, %v2962
  %v2964 = vsel %vm663, %v2916, 0.0
  %v2965 = vadd.f32 %v2963, %v2964
  %v2966 = vsel %vm663, %v2917, 0.0
  %v2967 = vadd.f32 %v2965, %v2966
  %v2968 = vsel %vm663, %v2918, 0.0
  %v2969 = vadd.f32 %v2967, %v2968
  %v2970 = vsel %vm663, %v2919, 0.0
  %v2971 = vadd.f32 %v2969, %v2970
  %v2972 = vsel %vm663, %v2920, 0.0
  %v2973 = vadd.f32 %v2971, %v2972
  %v2974 = vsel %vm663, %v2921, 0.0
  %v2975 = vadd.f32 %v2973, %v2974
  %v2976 = vsel %vm663, %v2922, 0.0
  %v2977 = vadd.f32 %v2975, %v2976
  %v2978 = vsel %vm663, %v2923, 0.0
  %v2979 = vadd.f32 %v2977, %v2978
  %v2980 = vsel %vm663, %v2924, 0.0
  %v2981 = vadd.f32 %v2979, %v2980
  %v2982 = vsel %vm663, %v2925, 0.0
  %v2983 = vadd.f32 %v2981, %v2982
  %v2984 = vsel %vm663, %v2926, 0.0
  %v2985 = vadd.f32 %v2983, %v2984
  %v2986 = vsel %vm663, %v2927, 0.0
  %v2987 = vadd.f32 %v2985, %v2986
  %v2988 = vsel %vm663, %v2928, 0.0
  %v2989 = vadd.f32 %v2987, %v2988
  %v2990 = vsel %vm663, %v2929, 0.0
  %v2991 = vadd.f32 %v2989, %v2990
  %v2992 = vsel %vm663, %v2930, 0.0
  %v2993 = vadd.f32 %v2991, %v2992
  %v2994 = vrot.slane %v2993, 4
  %v2995 = vadd.f32 %v2993, %v2994
  %v2996 = vrot.slane %v2995, 2
  %v2997 = vadd.f32 %v2995, %v2996
  %v2998 = vrot.slane %v2997, 1
  %v2999 = vadd.f32 %v2997, %v2998
  %v3000 = vadd.f32 %v1508, %v2999
  %3001 = vxpose.xlu0.b32.start [1/16] %v2797, 128
  %3002 = vxpose.xlu0.b32.cont [2/16] %v2798, 128
  %3003 = vxpose.xlu0.b32.cont [3/16] %v2799, 128
  %3004 = vxpose.xlu0.b32.cont [4/16] %v2800, 128
  %3005 = vxpose.xlu0.b32.cont [5/16] %v2801, 128
  %3006 = vxpose.xlu0.b32.cont [6/16] %v2802, 128
  %3007 = vxpose.xlu0.b32.cont [7/16] %v2803, 128
  %3008 = vxpose.xlu0.b32.cont [8/16] %v2804, 128
  %3009 = vxpose.xlu0.b32.cont [9/16] %v2805, 128
  %3010 = vxpose.xlu0.b32.cont [10/16] %v2806, 128
  %3011 = vxpose.xlu0.b32.cont [11/16] %v2807, 128
  %3012 = vxpose.xlu0.b32.cont [12/16] %v2808, 128
  %3013 = vxpose.xlu0.b32.cont [13/16] %v2809, 128
  %3014 = vxpose.xlu0.b32.cont [14/16] %v2810, 128
  %3015 = vxpose.xlu0.b32.cont [15/16] %v2811, 128
  %3016 = vxpose.xlu0.b32.end [16/16] %v2812, 128
  %v3017 = vpop.trf.xlu0
  %v3018 = vpop.trf.xlu0
  %v3019 = vpop.trf.xlu0
  %v3020 = vpop.trf.xlu0
  %v3021 = vpop.trf.xlu0
  %v3022 = vpop.trf.xlu0
  %v3023 = vpop.trf.xlu0
  %v3024 = vpop.trf.xlu0
  %v3025 = vpop.trf.xlu0
  %v3026 = vpop.trf.xlu0
  %v3027 = vpop.trf.xlu0
  %v3028 = vpop.trf.xlu0
  %v3029 = vpop.trf.xlu0
  %v3030 = vpop.trf.xlu0
  %v3031 = vpop.trf.xlu0
  %v3032 = vpop.trf.xlu0
  %3033 = vxpose.xlu0.b32.start [1/16] %v2813, 128
  %3034 = vxpose.xlu0.b32.cont [2/16] %v2814, 128
  %3035 = vxpose.xlu0.b32.cont [3/16] %v2815, 128
  %3036 = vxpose.xlu0.b32.cont [4/16] %v2816, 128
  %3037 = vxpose.xlu0.b32.cont [5/16] %v2817, 128
  %3038 = vxpose.xlu0.b32.cont [6/16] %v2818, 128
  %3039 = vxpose.xlu0.b32.cont [7/16] %v2819, 128
  %3040 = vxpose.xlu0.b32.cont [8/16] %v2820, 128
  %3041 = vxpose.xlu0.b32.cont [9/16] %v2821, 128
  %3042 = vxpose.xlu0.b32.cont [10/16] %v2822, 128
  %3043 = vxpose.xlu0.b32.cont [11/16] %v2823, 128
  %3044 = vxpose.xlu0.b32.cont [12/16] %v2824, 128
  %3045 = vxpose.xlu0.b32.cont [13/16] %v2825, 128
  %3046 = vxpose.xlu0.b32.cont [14/16] %v2826, 128
  %3047 = vxpose.xlu0.b32.cont [15/16] %v2827, 128
  %3048 = vxpose.xlu0.b32.end [16/16] %v2828, 128
  %v3049 = vpop.trf.xlu0
  %v3050 = vpop.trf.xlu0
  %v3051 = vpop.trf.xlu0
  %v3052 = vpop.trf.xlu0
  %v3053 = vpop.trf.xlu0
  %v3054 = vpop.trf.xlu0
  %v3055 = vpop.trf.xlu0
  %v3056 = vpop.trf.xlu0
  %v3057 = vpop.trf.xlu0
  %v3058 = vpop.trf.xlu0
  %v3059 = vpop.trf.xlu0
  %v3060 = vpop.trf.xlu0
  %v3061 = vpop.trf.xlu0
  %v3062 = vpop.trf.xlu0
  %v3063 = vpop.trf.xlu0
  %v3064 = vpop.trf.xlu0
  %v3065 = vpack.c.bf16 %v3017, %v3017
  %v3066 = vpack.c.bf16 %v3049, %v3049
  %v3069 = vcombine.low %v3065, %v3066
  %v3071 = vunpack.c.l.s4 1983009808
  %v3072 = vunpack.c.0.s8 %v3071
  %v3073 = vlaneseq
  %v3074 = vshrl.u32 %v3073, 7
  %v3075 = vsub.s32 %v3072, %v3074
  %v3076 = vrot.slane %v3069, %v3075
  %s3078 = scalar_lea.vmem %s4, 4
  %3079 = vst [vmem:[%s3078] sm:$0xf] %v3076
  %vm3080 = vcmask 24576
  %3081 = vst.msk [vmem:[%s5] sm:$0x1] %vm3080, %v2898
  %3082 = vst.msk [vmem:[%s6] sm:$0x1] %vm3080, %v3000
  // Predicated region
  $region18: #{basic_block_pallas.4} parent=0 // pred_check
    _
  $region19: #{basic_block_pallas.4} parent=0 // pred_check_branch
    %3084 = sbr.rel (0) target = $region21
  $region20: #{basic_block_pallas.4} parent=0 // pred_region
    _
  $region21: #{basic_block_pallas.4} parent=0 // pred_fallthru
    _
  // Predicated region
  $region22: #{basic_block_pallas.4} parent=0 // pred_check
    _
  $region23: #{basic_block_pallas.4} parent=0 // pred_check_branch
    %3086 = sbr.rel (0) target = $region25
  $region24: #{basic_block_pallas.4} parent=0 // pred_region
    _
  $region25: #{basic_block_pallas.4} parent=0 // pred_fallthru
    _
  // Predicated region
  $region26: #{basic_block_pallas.4} parent=0 // pred_check
    _
  $region27: #{basic_block_pallas.4} parent=0 // pred_check_branch
    %3088 = sbr.rel (0) target = $region29
  $region28: #{basic_block_pallas.4} parent=0 // pred_region
    _
  $region29: #{basic_block_pallas.4} parent=0 // pred_fallthru
    _
  // Predicated region
  $region30: #{basic_block_pallas.4} parent=0 // pred_check
    _
  $region31: #{basic_block_pallas.4} parent=0 // pred_check_branch
    %3090 = sbr.rel (0) target = $region33
  $region32: #{basic_block_pallas.4} parent=0 // pred_region
    _
  $region33: #{basic_block_pallas.4} parent=0 // pred_fallthru
    _
  // Predicated region
  $region34: #{basic_block_pallas.4} parent=0 // pred_check
    _
  $region35: #{basic_block_pallas.4} parent=0 // pred_check_branch
    %3092 = sbr.rel (0) target = $region37
  $region36: #{basic_block_pallas.4} parent=0 // pred_region
    _
  $region37: #{basic_block_pallas.4} parent=0 // pred_fallthru
    _
  // Predicated region
  $region38: #{basic_block_pallas.4} parent=0 // pred_check
    _
  $region39: #{basic_block_pallas.4} parent=0 // pred_check_branch
    %3094 = sbr.rel (0) target = $region41
  $region40: #{basic_block_pallas.4} parent=0 // pred_region
    _
  $region41: #{basic_block_pallas.4} parent=0 // pred_fallthru
    _

</llo_original>
